<compile_context>
chip_gen: v7x
topology: tpu7x:2x2x1
jax: 0.10.0
libtpu: 0.0.40
codegen_flags: <defaults>
</compile_context>

<pallas_src>
import jax
import jax.numpy as jnp
from jax import lax
from jax.experimental import pallas as pl
from jax.experimental.pallas import tpu as pltpu

EPS = 1e-5


# --------------------------------------------------------------------------
# helpers
# --------------------------------------------------------------------------
def _bn_fold(g, b, m, v):
    s = g / jnp.sqrt(v + EPS)
    return s, b - m * s


def _round_up(x, m):
    return ((x + m - 1) // m) * m


def _choose_tile_rows(H, W, Cin, classes, Ku, has_up, K_PAD,
                      max_tile_rows, budget_bytes):
    """Largest row tile (divisor of H, sublane friendly) fitting the VMEM budget."""
    def est(th):
        o_r = th + (2 if has_up else 0)
        i_r = o_r + 2
        b = 0
        b += 2 * i_r * (W + 2) * Cin * 2            # input tile (bf16), double-buffered
        b += o_r * W * K_PAD * 2                    # im2col scratch (bf16)
        b += 2 * o_r * W * 128 * 4                  # mapping out / BN+ReLU temporaries (f32)
        b += 2 * th * W * classes * 4               # prob output block, double-buffered
        if has_up:
            b += 2 * o_r * W * 16 * Ku * 4          # taps + overlap-add temporaries (f32)
            b += 2 * th * W * 4 * Ku * 2            # up output block (bf16), double-buffered
        return b

    cands = [d for d in range(1, H + 1) if H % d == 0 and (d == H or d % 8 == 0)]
    if max_tile_rows is not None:
        limited = [d for d in cands if d <= max_tile_rows]
        cands = limited or [min(cands)]
    fitting = [d for d in cands if est(d) <= budget_bytes]
    th = max(fitting) if fitting else min(cands)
    return th, est(th)


# --------------------------------------------------------------------------
# fused kernel (built per static shape configuration)
# --------------------------------------------------------------------------
def _make_decoder_kernel(*, TH, W, Cin, H, classes, Ku, has_up, K_PAD):
    halo = 1 if has_up else 0
    OR = TH + 2 * halo            # mapping-output rows computed per tile
    taps_width = 16 * Ku

    def kernel(x_ref, wmap_ref, bmap_ref, sc_ref, shc_ref, wcls_ref, bcls_ref,
               *rest):
        if has_up:
            (su_ref, shu_ref, wup_ref, shu2_ref,
             prob_ref, up_ref, im2col_ref) = rest
        else:
            prob_ref, im2col_ref = rest

        # ---- im2col: 9 shifted 3x3-tap views stored into the VMEM slab at
        #      static lane offsets; K padded to a multiple of 128.
        for t in range(9):
            kh, kw = t // 3, t % 3
            im2col_ref[:, :, t * Cin:(t + 1) * Cin] = x_ref[kh:kh + OR, kw:kw + W, :]
        if K_PAD > 9 * Cin:
            im2col_ref[:, :, 9 * Cin:] = jnp.zeros(
                (OR, W, K_PAD - 9 * Cin), dtype=im2col_ref.dtype)

        patches = im2col_ref[...].reshape(OR * W, K_PAD)          # bf16
        out = jnp.dot(patches, wmap_ref[...], preferred_element_type=jnp.float32)
        out = jnp.maximum(out + bmap_ref[...], 0.0)               # (OR*W, 128) f32

        # ---- cls: BN + ReLU + 1x1 conv (+bias) on the TH interior rows.
        out_mid = out[halo * W:(halo + TH) * W, :]
        t_cls = jnp.maximum(out_mid * sc_ref[...] + shc_ref[...],
                            0.0).astype(jnp.bfloat16)
        prob = jnp.dot(t_cls, wcls_ref[...],
                       preferred_element_type=jnp.float32) + bcls_ref[...]
        prob_ref[...] = prob                                      # (TH*W, classes)

        if not has_up:
            return

        # ---- up: BN1 + ReLU, one lane-dense matmul over all 16 ConvT taps,
        #      then overlap-add / depth-to-space in VMEM (f32), BN2 shift+ReLU.
        t_up = jnp.maximum(out * su_ref[...] + shu_ref[...],
                           0.0).astype(jnp.bfloat16)
        taps = jnp.dot(t_up, wup_ref[...], preferred_element_type=jnp.float32)
        taps = taps.reshape(OR, W, taps_width)

        # halo rows that fall outside the image contribute nothing
        r0 = pl.program_id(1) * TH
        lrow = lax.broadcasted_iota(jnp.int32, (OR, 1, 1), 0)
        grow = r0 - 1 + lrow
        taps = jnp.where((grow >= 0) & (grow < H), taps, 0.0)

        def tap(kh, kw):
            c0 = (kh * 4 + kw) * Ku
            return taps[:, :, c0:c0 + Ku]

        def shift_w_plus(a):       # result[:, j] = a[:, j-1], zero at j == 0
            z = jnp.zeros_like(a[:, :1, :])
            return jnp.concatenate([z, a[:, :-1, :]], axis=1)

        def shift_w_minus(a):      # result[:, j] = a[:, j+1], zero at j == W-1
            z = jnp.zeros_like(a[:, :1, :])
            return jnp.concatenate([a[:, 1:, :], z], axis=1)

        # rows: even out rows <- kh=1 (same in-row) + kh=3 (in-row - 1)
        #       odd  out rows <- kh=2 (same in-row) + kh=0 (in-row + 1)
        # interior output rows come from local mapping rows 1 .. TH (halo'd)
        R0 = [tap(1, kw)[1:TH + 1] + tap(3, kw)[0:TH] for kw in range(4)]
        R1 = [tap(2, kw)[1:TH + 1] + tap(0, kw)[2:TH + 2] for kw in range(4)]

        Y00 = R0[1] + shift_w_plus(R0[3])
        Y01 = R0[2] + shift_w_minus(R0[0])
        Y10 = R1[1] + shift_w_plus(R1[3])
        Y11 = R1[2] + shift_w_minus(R1[0])

        quad = jnp.concatenate([Y00, Y01, Y10, Y11], axis=-1)     # (TH, W, 4*Ku) f32
        quad = jnp.maximum(quad + shu2_ref[...], 0.0)             # BN2 shift + ReLU
        up_ref[...] = quad.astype(up_ref.dtype)

    return kernel


# --------------------------------------------------------------------------
# wrapper (layout, BN folding, tiling, pallas_call plumbing)
# --------------------------------------------------------------------------
def decoder_apply(x_nchw, params, classes, up_classes, *,
                  max_tile_rows=None, vmem_budget_bytes=32 << 20):
    N, Cin, H, W = x_nchw.shape
    has_up = up_classes > 0
    Ku = up_classes if has_up else 0
    K_PAD = _round_up(9 * Cin, 128)

    TH, est_bytes = _choose_tile_rows(H, W, Cin, classes, Ku, has_up, K_PAD,
                                      max_tile_rows, vmem_budget_bytes)
    nT = H // TH
    halo = 1 if has_up else 0
    OR = TH + 2 * halo
    IR = OR + 2

    # ---- host-side weight / BN folding ----------------------------------
    s_m, sh_m = _bn_fold(params["map_bn_g"], params["map_bn_b"],
                         params["map_bn_m"], params["map_bn_v"])
    w_map = (params["w_map"] * s_m[None, None, None, :]).reshape(9 * Cin, 128)
    w_map = jnp.pad(w_map, ((0, K_PAD - 9 * Cin), (0, 0))).astype(jnp.bfloat16)
    b_map = sh_m.reshape(1, 128).astype(jnp.float32)

    s_c, sh_c = _bn_fold(params["cls_bn_g"], params["cls_bn_b"],
                         params["cls_bn_m"], params["cls_bn_v"])
    w_cls = params["w_cls"].astype(jnp.bfloat16)
    b_cls = params["b_cls"].reshape(1, classes).astype(jnp.float32)

    # ---- input: NCHW -> NHWC bf16, pad halo, pre-tile the row windows ----
    x = jnp.transpose(x_nchw, (0, 2, 3, 1)).astype(jnp.bfloat16)
    xp = jnp.pad(x, ((0, 0), (halo + 1, halo + 1), (1, 1), (0, 0)))
    xt = jnp.stack([xp[:, i * TH:i * TH + IR] for i in range(nT)], axis=1)
    # xt: (N, nT, IR, W+2, Cin)

    kernel = _make_decoder_kernel(TH=TH, W=W, Cin=Cin, H=H, classes=classes,
                                  Ku=Ku, has_up=has_up, K_PAD=K_PAD)

    in_specs = [
        pl.BlockSpec((None, None, IR, W + 2, Cin), lambda n, i: (n, i, 0, 0, 0)),
        pl.BlockSpec((K_PAD, 128), lambda n, i: (0, 0)),
        pl.BlockSpec((1, 128), lambda n, i: (0, 0)),
        pl.BlockSpec((1, 128), lambda n, i: (0, 0)),
        pl.BlockSpec((1, 128), lambda n, i: (0, 0)),
        pl.BlockSpec((128, classes), lambda n, i: (0, 0)),
        pl.BlockSpec((1, classes), lambda n, i: (0, 0)),
    ]
    args = [xt, w_map, b_map, s_c.reshape(1, 128), sh_c.reshape(1, 128),
            w_cls, b_cls]
    out_shapes = [jax.ShapeDtypeStruct((N, H * W, classes), jnp.float32)]
    out_specs = [pl.BlockSpec((None, TH * W, classes), lambda n, i: (n, i, 0))]

    if has_up:
        s_u1, sh_u1 = _bn_fold(params["up_bn1_g"], params["up_bn1_b"],
                               params["up_bn1_m"], params["up_bn1_v"])
        s_u2, sh_u2 = _bn_fold(params["up_bn2_g"], params["up_bn2_b"],
                               params["up_bn2_m"], params["up_bn2_v"])
        w_up = params["w_up"] * s_u2[None, None, None, :]                    # (4,4,128,Ku)
        w_up_all = jnp.transpose(w_up, (2, 0, 1, 3)).reshape(128, 16 * Ku)
        w_up_all = w_up_all.astype(jnp.bfloat16)
        shu2_tiled = jnp.tile(sh_u2, 4).reshape(1, 4 * Ku).astype(jnp.float32)

        in_specs += [
            pl.BlockSpec((1, 128), lambda n, i: (0, 0)),
            pl.BlockSpec((1, 128), lambda n, i: (0, 0)),
            pl.BlockSpec((128, 16 * Ku), lambda n, i: (0, 0)),
            pl.BlockSpec((1, 4 * Ku), lambda n, i: (0, 0)),
        ]
        args += [s_u1.reshape(1, 128), sh_u1.reshape(1, 128), w_up_all, shu2_tiled]
        out_shapes.append(jax.ShapeDtypeStruct((N, H, W, 4 * Ku), jnp.bfloat16))
        out_specs.append(pl.BlockSpec((None, TH, W, 4 * Ku),
                                      lambda n, i: (n, i, 0, 0)))

    vmem_limit = int(min(max(int(est_bytes * 1.5), 32 << 20), 100 << 20))

    outs = pl.pallas_call(
        kernel,
        out_shape=tuple(out_shapes),
        grid=(N, nT),
        in_specs=in_specs,
        out_specs=tuple(out_specs),
        scratch_shapes=[pltpu.VMEM((OR, W, K_PAD), jnp.bfloat16)],
        compiler_params=pltpu.CompilerParams(
            dimension_semantics=("parallel", "parallel"),
            vmem_limit_bytes=vmem_limit),
    )(*args)

    prob = outs[0].reshape(N, H, W, classes)
    prob = jnp.transpose(prob, (0, 3, 1, 2))                      # -> NCHW

    up_feat = None
    if has_up:
        up = outs[1].astype(jnp.float32).reshape(N, H, W, 2, 2, Ku)
        up_feat = jnp.transpose(up, (0, 5, 1, 3, 2, 4)).reshape(N, Ku, 2 * H, 2 * W)
    return prob, up_feat


# --------------------------------------------------------------------------
# plain-JAX reference (numerical verification only)
# --------------------------------------------------------------------------
def decoder_reference(x_nchw, params, classes, up_classes):
    x = jnp.transpose(x_nchw, (0, 2, 3, 1)).astype(jnp.float32)
    N, H, W, Cin = x.shape

    def bn(y, g, b, m, v):
        return (y - m) / jnp.sqrt(v + EPS) * g + b

    conv = lax.conv_general_dilated(
        x, params["w_map"], (1, 1), "SAME",
        dimension_numbers=("NHWC", "HWIO", "NHWC"))
    out = jax.nn.relu(bn(conv, params["map_bn_g"], params["map_bn_b"],
                         params["map_bn_m"], params["map_bn_v"]))

    t = jax.nn.relu(bn(out, params["cls_bn_g"], params["cls_bn_b"],
                       params["cls_bn_m"], params["cls_bn_v"]))
    prob = jnp.einsum("nhwc,cd->nhwd", t, params["w_cls"]) + params["b_cls"]

    up_feat = None
    if up_classes > 0:
        t2 = jax.nn.relu(bn(out, params["up_bn1_g"], params["up_bn1_b"],
                            params["up_bn1_m"], params["up_bn1_v"]))
        full = jnp.zeros((N, 2 * H + 2, 2 * W + 2, up_classes), jnp.float32)
        for kh in range(4):
            for kw in range(4):
                c = jnp.einsum("nhwc,cd->nhwd", t2, params["w_up"][kh, kw])
                full = full.at[:, kh:kh + 2 * H:2, kw:kw + 2 * W:2, :].add(c)
        up_lin = full[:, 1:2 * H + 1, 1:2 * W + 1, :]
        up_feat = jax.nn.relu(bn(up_lin, params["up_bn2_g"], params["up_bn2_b"],
                                 params["up_bn2_m"], params["up_bn2_v"]))
        up_feat = jnp.transpose(up_feat, (0, 3, 1, 2))

    prob = jnp.transpose(prob, (0, 3, 1, 2))
    return prob, up_feat


# --------------------------------------------------------------------------
if __name__ == "__main__":
    N, Cin, H, W = 2, 16, 16, 16
    classes, up_classes = 8, 8

    keys = jax.random.split(jax.random.PRNGKey(0), 20)

    def rn(key, shape, scale=1.0):
        return scale * jax.random.normal(key, shape, jnp.float32)

    x = rn(keys[0], (N, Cin, H, W))   # NCHW, like the PyTorch module

    params = {
        # mapping block: Conv3x3(Cin,128) [HWIO] + BN(128)
        "w_map": rn(keys[1], (3, 3, Cin, 128), 0.05),
        "map_bn_g": 1.0 + rn(keys[2], (128,), 0.1),
        "map_bn_b": rn(keys[3], (128,), 0.1),
        "map_bn_m": rn(keys[4], (128,), 0.05),
        "map_bn_v": 1.0 + 0.1 * jnp.abs(jax.random.normal(keys[5], (128,))),
        # cls: BN(128) + ReLU + Conv1x1(128,classes) with bias
        "cls_bn_g": 1.0 + rn(keys[6], (128,), 0.1),
        "cls_bn_b": rn(keys[7], (128,), 0.1),
        "cls_bn_m": rn(keys[8], (128,), 0.05),
        "cls_bn_v": 1.0 + 0.1 * jnp.abs(jax.random.normal(keys[9], (128,))),
        "w_cls": rn(keys[10], (128, classes), 0.05),
        "b_cls": rn(keys[11], (classes,), 0.1),
        # up: BN(128) + ReLU + ConvT(128,upc,4,2,1) + BN(upc) + ReLU
        # w_up[kh,kw,ic,oc] == torch weight[ic,oc,kh,kw]
        "up_bn1_g": 1.0 + rn(keys[12], (128,), 0.1),
        "up_bn1_b": rn(keys[13], (128,), 0.1),
        "up_bn1_m": rn(keys[14], (128,), 0.05),
        "up_bn1_v": 1.0 + 0.1 * jnp.abs(jax.random.normal(keys[15], (128,))),
        "w_up": rn(keys[16], (4, 4, 128, up_classes), 0.05),
        "up_bn2_g": 1.0 + rn(keys[17], (up_classes,), 0.1),
        "up_bn2_b": rn(keys[18], (up_classes,), 0.1),
        "up_bn2_m": rn(keys[19], (up_classes,), 0.05),
        "up_bn2_v": jnp.ones((up_classes,), jnp.float32),
    }

    # row-tiled path (nT = 2 exercises halo + image-border masking)
    prob, up_feat = decoder_apply(x, params, classes, up_classes, max_tile_rows=8)
    prob = jax.block_until_ready(prob)
    up_feat = jax.block_until_ready(up_feat)

    prob_ref, up_ref = decoder_reference(x, params, classes, up_classes)
    prob_ref = jax.block_until_ready(prob_ref)
    up_ref = jax.block_until_ready(up_ref)

    assert prob.shape == (N, classes, H, W)
    assert up_feat.shape == (N, up_classes, 2 * H, 2 * W)
    assert jnp.allclose(prob, prob_ref, rtol=5e-2, atol=5e-2)
    assert jnp.allclose(up_feat, up_ref, rtol=5e-2, atol=5e-2)

    # no-up path (up_classes == 0 -> self.up is None in the PyTorch module)
    prob2, up2 = decoder_apply(x, params, classes, 0)
    prob2 = jax.block_until_ready(prob2)
    assert up2 is None
    assert jnp.allclose(prob2, prob_ref, rtol=5e-2, atol=5e-2)

    print("KERNEL_OK")
</pallas_src>

<mosaic_0001>
module attributes {stable_mosaic.version = 11 : i64} {
  func.func @kernel(%arg0: i32, %arg1: i32, %arg2: memref<1x1x12x18x16xbf16, #tpu.memory_space<vmem>>, %arg3: memref<256x128xbf16, #tpu.memory_space<vmem>>, %arg4: memref<1x128xf32, #tpu.memory_space<vmem>>, %arg5: memref<1x128xf32, #tpu.memory_space<vmem>>, %arg6: memref<1x128xf32, #tpu.memory_space<vmem>>, %arg7: memref<128x8xbf16, #tpu.memory_space<vmem>>, %arg8: memref<1x8xf32, #tpu.memory_space<vmem>>, %arg9: memref<1x128xf32, #tpu.memory_space<vmem>>, %arg10: memref<1x128xf32, #tpu.memory_space<vmem>>, %arg11: memref<128x128xbf16, #tpu.memory_space<vmem>>, %arg12: memref<1x32xf32, #tpu.memory_space<vmem>>, %arg13: memref<1x128x8xf32, #tpu.memory_space<vmem>>, %arg14: memref<1x8x16x32xbf16, #tpu.memory_space<vmem>>, %arg15: memref<10x16x256xbf16, #tpu.memory_space<vmem>>) attributes {dimension_semantics = [#tpu.dimension_semantics<parallel>, #tpu.dimension_semantics<parallel>], iteration_bounds = array<i64: 2, 2>, scalar_prefetch = 0 : i64, scratch_operands = 1 : i64, tpu.core_type = #tpu.core_type<tc>, window_params = [{transform_indices = @transform_0, window_bounds = array<i64: 1, 1, 12, 18, 16>}, {pipeline_mode = #tpu.pipeline_mode<synchronous>, transform_indices = @transform_1, window_bounds = array<i64: 256, 128>}, {pipeline_mode = #tpu.pipeline_mode<synchronous>, transform_indices = @transform_2, window_bounds = array<i64: 1, 128>}, {pipeline_mode = #tpu.pipeline_mode<synchronous>, transform_indices = @transform_3, window_bounds = array<i64: 1, 128>}, {pipeline_mode = #tpu.pipeline_mode<synchronous>, transform_indices = @transform_4, window_bounds = array<i64: 1, 128>}, {pipeline_mode = #tpu.pipeline_mode<synchronous>, transform_indices = @transform_5, window_bounds = array<i64: 128, 8>}, {pipeline_mode = #tpu.pipeline_mode<synchronous>, transform_indices = @transform_6, window_bounds = array<i64: 1, 8>}, {pipeline_mode = #tpu.pipeline_mode<synchronous>, transform_indices = @transform_7, window_bounds = array<i64: 1, 128>}, {pipeline_mode = #tpu.pipeline_mode<synchronous>, transform_indices = @transform_8, window_bounds = array<i64: 1, 128>}, {pipeline_mode = #tpu.pipeline_mode<synchronous>, transform_indices = @transform_9, window_bounds = array<i64: 128, 128>}, {pipeline_mode = #tpu.pipeline_mode<synchronous>, transform_indices = @transform_10, window_bounds = array<i64: 1, 32>}, {transform_indices = @transform_11, window_bounds = array<i64: 1, 128, 8>}, {transform_indices = @transform_12, window_bounds = array<i64: 1, 8, 16, 32>}]} {
    %c0 = arith.constant 0 : index
    %c0_0 = arith.constant 0 : index
    %c0_1 = arith.constant 0 : index
    %c0_2 = arith.constant 0 : index
    %c0_3 = arith.constant 0 : index
    %0 = vector.load %arg2[%c0, %c0_0, %c0_1, %c0_2, %c0_3] : memref<1x1x12x18x16xbf16, #tpu.memory_space<vmem>>, vector<1x1x10x16x16xbf16>
    %1 = vector.shape_cast %0 : vector<1x1x10x16x16xbf16> to vector<10x16x16xbf16>
    %c0_4 = arith.constant 0 : index
    %c0_5 = arith.constant 0 : index
    %c0_6 = arith.constant 0 : index
    %2 = vector.load %arg15[%c0_4, %c0_5, %c0_6] : memref<10x16x256xbf16, #tpu.memory_space<vmem>>, vector<10x16x16xbf16>
    tpu.vector_store %arg15[%c0_4, %c0_5, %c0_6], %1 {strides = array<i32>} : memref<10x16x256xbf16, #tpu.memory_space<vmem>>, vector<10x16x16xbf16>,
    %c0_7 = arith.constant 0 : index
    %c0_8 = arith.constant 0 : index
    %c0_9 = arith.constant 0 : index
    %c1 = arith.constant 1 : index
    %c0_10 = arith.constant 0 : index
    %3 = vector.load %arg2[%c0_7, %c0_8, %c0_9, %c1, %c0_10] : memref<1x1x12x18x16xbf16, #tpu.memory_space<vmem>>, vector<1x1x10x16x16xbf16>
    %4 = vector.shape_cast %3 : vector<1x1x10x16x16xbf16> to vector<10x16x16xbf16>
    %c0_11 = arith.constant 0 : index
    %c0_12 = arith.constant 0 : index
    %c16 = arith.constant 16 : index
    %5 = vector.load %arg15[%c0_11, %c0_12, %c16] : memref<10x16x256xbf16, #tpu.memory_space<vmem>>, vector<10x16x16xbf16>
    tpu.vector_store %arg15[%c0_11, %c0_12, %c16], %4 {strides = array<i32>} : memref<10x16x256xbf16, #tpu.memory_space<vmem>>, vector<10x16x16xbf16>,
    %c0_13 = arith.constant 0 : index
    %c0_14 = arith.constant 0 : index
    %c0_15 = arith.constant 0 : index
    %c2 = arith.constant 2 : index
    %c0_16 = arith.constant 0 : index
    %6 = vector.load %arg2[%c0_13, %c0_14, %c0_15, %c2, %c0_16] : memref<1x1x12x18x16xbf16, #tpu.memory_space<vmem>>, vector<1x1x10x16x16xbf16>
    %7 = vector.shape_cast %6 : vector<1x1x10x16x16xbf16> to vector<10x16x16xbf16>
    %c0_17 = arith.constant 0 : index
    %c0_18 = arith.constant 0 : index
    %c32 = arith.constant 32 : index
    %8 = vector.load %arg15[%c0_17, %c0_18, %c32] : memref<10x16x256xbf16, #tpu.memory_space<vmem>>, vector<10x16x16xbf16>
    tpu.vector_store %arg15[%c0_17, %c0_18, %c32], %7 {strides = array<i32>} : memref<10x16x256xbf16, #tpu.memory_space<vmem>>, vector<10x16x16xbf16>,
    %c0_19 = arith.constant 0 : index
    %c0_20 = arith.constant 0 : index
    %c1_21 = arith.constant 1 : index
    %c0_22 = arith.constant 0 : index
    %c0_23 = arith.constant 0 : index
    %9 = vector.load %arg2[%c0_19, %c0_20, %c1_21, %c0_22, %c0_23] : memref<1x1x12x18x16xbf16, #tpu.memory_space<vmem>>, vector<1x1x10x16x16xbf16>
    %10 = vector.shape_cast %9 : vector<1x1x10x16x16xbf16> to vector<10x16x16xbf16>
    %c0_24 = arith.constant 0 : index
    %c0_25 = arith.constant 0 : index
    %c48 = arith.constant 48 : index
    %11 = vector.load %arg15[%c0_24, %c0_25, %c48] : memref<10x16x256xbf16, #tpu.memory_space<vmem>>, vector<10x16x16xbf16>
    tpu.vector_store %arg15[%c0_24, %c0_25, %c48], %10 {strides = array<i32>} : memref<10x16x256xbf16, #tpu.memory_space<vmem>>, vector<10x16x16xbf16>,
    %c0_26 = arith.constant 0 : index
    %c0_27 = arith.constant 0 : index
    %c1_28 = arith.constant 1 : index
    %c1_29 = arith.constant 1 : index
    %c0_30 = arith.constant 0 : index
    %12 = vector.load %arg2[%c0_26, %c0_27, %c1_28, %c1_29, %c0_30] : memref<1x1x12x18x16xbf16, #tpu.memory_space<vmem>>, vector<1x1x10x16x16xbf16>
    %13 = vector.shape_cast %12 : vector<1x1x10x16x16xbf16> to vector<10x16x16xbf16>
    %c0_31 = arith.constant 0 : index
    %c0_32 = arith.constant 0 : index
    %c64 = arith.constant 64 : index
    %14 = vector.load %arg15[%c0_31, %c0_32, %c64] : memref<10x16x256xbf16, #tpu.memory_space<vmem>>, vector<10x16x16xbf16>
    tpu.vector_store %arg15[%c0_31, %c0_32, %c64], %13 {strides = array<i32>} : memref<10x16x256xbf16, #tpu.memory_space<vmem>>, vector<10x16x16xbf16>,
    %c0_33 = arith.constant 0 : index
    %c0_34 = arith.constant 0 : index
    %c1_35 = arith.constant 1 : index
    %c2_36 = arith.constant 2 : index
    %c0_37 = arith.constant 0 : index
    %15 = vector.load %arg2[%c0_33, %c0_34, %c1_35, %c2_36, %c0_37] : memref<1x1x12x18x16xbf16, #tpu.memory_space<vmem>>, vector<1x1x10x16x16xbf16>
    %16 = vector.shape_cast %15 : vector<1x1x10x16x16xbf16> to vector<10x16x16xbf16>
    %c0_38 = arith.constant 0 : index
    %c0_39 = arith.constant 0 : index
    %c80 = arith.constant 80 : index
    %17 = vector.load %arg15[%c0_38, %c0_39, %c80] : memref<10x16x256xbf16, #tpu.memory_space<vmem>>, vector<10x16x16xbf16>
    tpu.vector_store %arg15[%c0_38, %c0_39, %c80], %16 {strides = array<i32>} : memref<10x16x256xbf16, #tpu.memory_space<vmem>>, vector<10x16x16xbf16>,
    %c0_40 = arith.constant 0 : index
    %c0_41 = arith.constant 0 : index
    %c2_42 = arith.constant 2 : index
    %c0_43 = arith.constant 0 : index
    %c0_44 = arith.constant 0 : index
    %18 = vector.load %arg2[%c0_40, %c0_41, %c2_42, %c0_43, %c0_44] : memref<1x1x12x18x16xbf16, #tpu.memory_space<vmem>>, vector<1x1x10x16x16xbf16>
    %19 = vector.shape_cast %18 : vector<1x1x10x16x16xbf16> to vector<10x16x16xbf16>
    %c0_45 = arith.constant 0 : index
    %c0_46 = arith.constant 0 : index
    %c96 = arith.constant 96 : index
    %20 = vector.load %arg15[%c0_45, %c0_46, %c96] : memref<10x16x256xbf16, #tpu.memory_space<vmem>>, vector<10x16x16xbf16>
    tpu.vector_store %arg15[%c0_45, %c0_46, %c96], %19 {strides = array<i32>} : memref<10x16x256xbf16, #tpu.memory_space<vmem>>, vector<10x16x16xbf16>,
    %c0_47 = arith.constant 0 : index
    %c0_48 = arith.constant 0 : index
    %c2_49 = arith.constant 2 : index
    %c1_50 = arith.constant 1 : index
    %c0_51 = arith.constant 0 : index
    %21 = vector.load %arg2[%c0_47, %c0_48, %c2_49, %c1_50, %c0_51] : memref<1x1x12x18x16xbf16, #tpu.memory_space<vmem>>, vector<1x1x10x16x16xbf16>
    %22 = vector.shape_cast %21 : vector<1x1x10x16x16xbf16> to vector<10x16x16xbf16>
    %c0_52 = arith.constant 0 : index
    %c0_53 = arith.constant 0 : index
    %c112 = arith.constant 112 : index
    %23 = vector.load %arg15[%c0_52, %c0_53, %c112] : memref<10x16x256xbf16, #tpu.memory_space<vmem>>, vector<10x16x16xbf16>
    tpu.vector_store %arg15[%c0_52, %c0_53, %c112], %22 {strides = array<i32>} : memref<10x16x256xbf16, #tpu.memory_space<vmem>>, vector<10x16x16xbf16>,
    %c0_54 = arith.constant 0 : index
    %c0_55 = arith.constant 0 : index
    %c2_56 = arith.constant 2 : index
    %c2_57 = arith.constant 2 : index
    %c0_58 = arith.constant 0 : index
    %24 = vector.load %arg2[%c0_54, %c0_55, %c2_56, %c2_57, %c0_58] : memref<1x1x12x18x16xbf16, #tpu.memory_space<vmem>>, vector<1x1x10x16x16xbf16>
    %25 = vector.shape_cast %24 : vector<1x1x10x16x16xbf16> to vector<10x16x16xbf16>
    %c0_59 = arith.constant 0 : index
    %c0_60 = arith.constant 0 : index
    %c128 = arith.constant 128 : index
    %26 = vector.load %arg15[%c0_59, %c0_60, %c128] : memref<10x16x256xbf16, #tpu.memory_space<vmem>>, vector<10x16x16xbf16>
    tpu.vector_store %arg15[%c0_59, %c0_60, %c128], %25 {strides = array<i32>} : memref<10x16x256xbf16, #tpu.memory_space<vmem>>, vector<10x16x16xbf16>,
    %cst = arith.constant 0.000000e+00 : bf16
    %27 = vector.broadcast %cst : bf16 to vector<10x16x112xbf16>
    %c0_61 = arith.constant 0 : index
    %c0_62 = arith.constant 0 : index
    %c144 = arith.constant 144 : index
    %28 = vector.load %arg15[%c0_61, %c0_62, %c144] : memref<10x16x256xbf16, #tpu.memory_space<vmem>>, vector<10x16x112xbf16>
    tpu.vector_store %arg15[%c0_61, %c0_62, %c144], %27 {strides = array<i32>} : memref<10x16x256xbf16, #tpu.memory_space<vmem>>, vector<10x16x112xbf16>,
    %c0_63 = arith.constant 0 : index
    %c0_64 = arith.constant 0 : index
    %c0_65 = arith.constant 0 : index
    %29 = vector.load %arg15[%c0_63, %c0_64, %c0_65] : memref<10x16x256xbf16, #tpu.memory_space<vmem>>, vector<10x16x256xbf16>
    %30 = vector.shape_cast %29 : vector<10x16x256xbf16> to vector<160x256xbf16>
    %c0_66 = arith.constant 0 : index
    %c0_67 = arith.constant 0 : index
    %31 = vector.load %arg3[%c0_66, %c0_67] : memref<256x128xbf16, #tpu.memory_space<vmem>>, vector<256x128xbf16>
    %cst_68 = arith.constant dense<0.000000e+00> : vector<160x128xf32>
    %32 = tpu.matmul %30, %31, %cst_68 {dimension_numbers = #tpu.dot_dimension_numbers<[1], [0], [0], [1], [0, 0, 1, 1], [], []>} : vector<160x256xbf16>, vector<256x128xbf16>, vector<160x128xf32> -> vector<160x128xf32>
    %c0_69 = arith.constant 0 : index
    %c0_70 = arith.constant 0 : index
    %33 = vector.load %arg4[%c0_69, %c0_70] : memref<1x128xf32, #tpu.memory_space<vmem>>, vector<1x128xf32>
    %34 = vector.broadcast %33 : vector<1x128xf32> to vector<160x128xf32>
    %35 = arith.addf %32, %34 : vector<160x128xf32>
    %cst_71 = arith.constant 0.000000e+00 : f32
    %36 = vector.broadcast %cst_71 : f32 to vector<160x128xf32>
    %37 = arith.maximumf %35, %36 : vector<160x128xf32>
    %38 = vector.extract_strided_slice %37 {offsets = [16, 0], sizes = [128, 128], strides = [1, 1]} : vector<160x128xf32> to vector<128x128xf32>
    %c0_72 = arith.constant 0 : index
    %c0_73 = arith.constant 0 : index
    %39 = vector.load %arg5[%c0_72, %c0_73] : memref<1x128xf32, #tpu.memory_space<vmem>>, vector<1x128xf32>
    %40 = vector.broadcast %39 : vector<1x128xf32> to vector<128x128xf32>
    %41 = arith.mulf %38, %40 : vector<128x128xf32>
    %c0_74 = arith.constant 0 : index
    %c0_75 = arith.constant 0 : index
    %42 = vector.load %arg6[%c0_74, %c0_75] : memref<1x128xf32, #tpu.memory_space<vmem>>, vector<1x128xf32>
    %43 = vector.broadcast %42 : vector<1x128xf32> to vector<128x128xf32>
    %44 = arith.addf %41, %43 : vector<128x128xf32>
    %cst_76 = arith.constant 0.000000e+00 : f32
    %45 = vector.broadcast %cst_76 : f32 to vector<128x128xf32>
    %46 = arith.maximumf %44, %45 : vector<128x128xf32>
    %47 = arith.truncf %46 : vector<128x128xf32> to vector<128x128xbf16>
    %c0_77 = arith.constant 0 : index
    %c0_78 = arith.constant 0 : index
    %48 = vector.load %arg7[%c0_77, %c0_78] : memref<128x8xbf16, #tpu.memory_space<vmem>>, vector<128x8xbf16>
    %cst_79 = arith.constant dense<0.000000e+00> : vector<128x8xf32>
    %49 = tpu.matmul %47, %48, %cst_79 {dimension_numbers = #tpu.dot_dimension_numbers<[1], [0], [0], [1], [0, 0, 1, 1], [], []>} : vector<128x128xbf16>, vector<128x8xbf16>, vector<128x8xf32> -> vector<128x8xf32>
    %c0_80 = arith.constant 0 : index
    %c0_81 = arith.constant 0 : index
    %50 = vector.load %arg8[%c0_80, %c0_81] : memref<1x8xf32, #tpu.memory_space<vmem>>, vector<1x8xf32>
    %51 = vector.broadcast %50 : vector<1x8xf32> to vector<128x8xf32>
    %52 = arith.addf %49, %51 : vector<128x8xf32>
    %c0_82 = arith.constant 0 : index
    %c0_83 = arith.constant 0 : index
    %c0_84 = arith.constant 0 : index
    %53 = vector.load %arg13[%c0_82, %c0_83, %c0_84] : memref<1x128x8xf32, #tpu.memory_space<vmem>>, vector<1x128x8xf32>
    %54 = vector.shape_cast %53 : vector<1x128x8xf32> to vector<128x8xf32>
    %55 = vector.shape_cast %52 : vector<128x8xf32> to vector<1x128x8xf32>
    tpu.vector_store %arg13[%c0_82, %c0_83, %c0_84], %55 {strides = array<i32>} : memref<1x128x8xf32, #tpu.memory_space<vmem>>, vector<1x128x8xf32>,
    %c0_85 = arith.constant 0 : index
    %c0_86 = arith.constant 0 : index
    %56 = vector.load %arg9[%c0_85, %c0_86] : memref<1x128xf32, #tpu.memory_space<vmem>>, vector<1x128xf32>
    %57 = vector.broadcast %56 : vector<1x128xf32> to vector<160x128xf32>
    %58 = arith.mulf %37, %57 : vector<160x128xf32>
    %c0_87 = arith.constant 0 : index
    %c0_88 = arith.constant 0 : index
    %59 = vector.load %arg10[%c0_87, %c0_88] : memref<1x128xf32, #tpu.memory_space<vmem>>, vector<1x128xf32>
    %60 = vector.broadcast %59 : vector<1x128xf32> to vector<160x128xf32>
    %61 = arith.addf %58, %60 : vector<160x128xf32>
    %cst_89 = arith.constant 0.000000e+00 : f32
    %62 = vector.broadcast %cst_89 : f32 to vector<160x128xf32>
    %63 = arith.maximumf %61, %62 : vector<160x128xf32>
    %64 = arith.truncf %63 : vector<160x128xf32> to vector<160x128xbf16>
    %c0_90 = arith.constant 0 : index
    %c0_91 = arith.constant 0 : index
    %65 = vector.load %arg11[%c0_90, %c0_91] : memref<128x128xbf16, #tpu.memory_space<vmem>>, vector<128x128xbf16>
    %cst_92 = arith.constant dense<0.000000e+00> : vector<160x128xf32>
    %66 = tpu.matmul %64, %65, %cst_92 {dimension_numbers = #tpu.dot_dimension_numbers<[1], [0], [0], [1], [0, 0, 1, 1], [], []>} : vector<160x128xbf16>, vector<128x128xbf16>, vector<160x128xf32> -> vector<160x128xf32>
    %67 = vector.shape_cast %66 : vector<160x128xf32> to vector<10x16x128xf32>
    %c8_i32 = arith.constant 8 : i32
    %68 = arith.muli %arg1, %c8_i32 : i32
    %69 = tpu.iota {dimensions = array<i32: 0>} : vector<10x1x1xi32>
    %c1_i32 = arith.constant 1 : i32
    %70 = arith.subi %68, %c1_i32 : i32
    %71 = vector.broadcast %70 : i32 to vector<10x1x1xi32>
    %72 = arith.addi %71, %69 : vector<10x1x1xi32>
    %c0_i32 = arith.constant 0 : i32
    %73 = vector.broadcast %c0_i32 : i32 to vector<10x1x1xi32>
    %74 = arith.cmpi sge, %72, %73 : vector<10x1x1xi32>
    %c16_i32 = arith.constant 16 : i32
    %75 = vector.broadcast %c16_i32 : i32 to vector<10x1x1xi32>
    %76 = arith.cmpi slt, %72, %75 : vector<10x1x1xi32>
    %77 = arith.andi %74, %76 : vector<10x1x1xi1>
    %cst_93 = arith.constant 0.000000e+00 : f32
    %78 = vector.shape_cast %77 : vector<10x1x1xi1> to vector<10x1x1xi1>
    %79 = vector.broadcast %78 : vector<10x1x1xi1> to vector<10x16x128xi1>
    %80 = vector.broadcast %cst_93 : f32 to vector<10x16x128xf32>
    %81 = arith.select %79, %67, %80 : vector<10x16x128xi1>, vector<10x16x128xf32>
    %82 = vector.extract_strided_slice %81 {offsets = [0, 0, 32], sizes = [10, 16, 8], strides = [1, 1, 1]} : vector<10x16x128xf32> to vector<10x16x8xf32>
    %83 = vector.extract_strided_slice %82 {offsets = [1, 0, 0], sizes = [8, 16, 8], strides = [1, 1, 1]} : vector<10x16x8xf32> to vector<8x16x8xf32>
    %84 = vector.extract_strided_slice %81 {offsets = [0, 0, 96], sizes = [10, 16, 8], strides = [1, 1, 1]} : vector<10x16x128xf32> to vector<10x16x8xf32>
    %85 = vector.extract_strided_slice %84 {offsets = [0, 0, 0], sizes = [8, 16, 8], strides = [1, 1, 1]} : vector<10x16x8xf32> to vector<8x16x8xf32>
    %86 = arith.addf %83, %85 : vector<8x16x8xf32>
    %87 = vector.extract_strided_slice %81 {offsets = [0, 0, 40], sizes = [10, 16, 8], strides = [1, 1, 1]} : vector<10x16x128xf32> to vector<10x16x8xf32>
    %88 = vector.extract_strided_slice %87 {offsets = [1, 0, 0], sizes = [8, 16, 8], strides = [1, 1, 1]} : vector<10x16x8xf32> to vector<8x16x8xf32>
    %89 = vector.extract_strided_slice %81 {offsets = [0, 0, 104], sizes = [10, 16, 8], strides = [1, 1, 1]} : vector<10x16x128xf32> to vector<10x16x8xf32>
    %90 = vector.extract_strided_slice %89 {offsets = [0, 0, 0], sizes = [8, 16, 8], strides = [1, 1, 1]} : vector<10x16x8xf32> to vector<8x16x8xf32>
    %91 = arith.addf %88, %90 : vector<8x16x8xf32>
    %92 = vector.extract_strided_slice %81 {offsets = [0, 0, 48], sizes = [10, 16, 8], strides = [1, 1, 1]} : vector<10x16x128xf32> to vector<10x16x8xf32>
    %93 = vector.extract_strided_slice %92 {offsets = [1, 0, 0], sizes = [8, 16, 8], strides = [1, 1, 1]} : vector<10x16x8xf32> to vector<8x16x8xf32>
    %94 = vector.extract_strided_slice %81 {offsets = [0, 0, 112], sizes = [10, 16, 8], strides = [1, 1, 1]} : vector<10x16x128xf32> to vector<10x16x8xf32>
    %95 = vector.extract_strided_slice %94 {offsets = [0, 0, 0], sizes = [8, 16, 8], strides = [1, 1, 1]} : vector<10x16x8xf32> to vector<8x16x8xf32>
    %96 = arith.addf %93, %95 : vector<8x16x8xf32>
    %97 = vector.extract_strided_slice %81 {offsets = [0, 0, 56], sizes = [10, 16, 8], strides = [1, 1, 1]} : vector<10x16x128xf32> to vector<10x16x8xf32>
    %98 = vector.extract_strided_slice %97 {offsets = [1, 0, 0], sizes = [8, 16, 8], strides = [1, 1, 1]} : vector<10x16x8xf32> to vector<8x16x8xf32>
    %99 = vector.extract_strided_slice %81 {offsets = [0, 0, 120], sizes = [10, 16, 8], strides = [1, 1, 1]} : vector<10x16x128xf32> to vector<10x16x8xf32>
    %100 = vector.extract_strided_slice %99 {offsets = [0, 0, 0], sizes = [8, 16, 8], strides = [1, 1, 1]} : vector<10x16x8xf32> to vector<8x16x8xf32>
    %101 = arith.addf %98, %100 : vector<8x16x8xf32>
    %102 = vector.extract_strided_slice %81 {offsets = [0, 0, 64], sizes = [10, 16, 8], strides = [1, 1, 1]} : vector<10x16x128xf32> to vector<10x16x8xf32>
    %103 = vector.extract_strided_slice %102 {offsets = [1, 0, 0], sizes = [8, 16, 8], strides = [1, 1, 1]} : vector<10x16x8xf32> to vector<8x16x8xf32>
    %104 = vector.extract_strided_slice %81 {offsets = [0, 0, 0], sizes = [10, 16, 8], strides = [1, 1, 1]} : vector<10x16x128xf32> to vector<10x16x8xf32>
    %105 = vector.extract_strided_slice %104 {offsets = [2, 0, 0], sizes = [8, 16, 8], strides = [1, 1, 1]} : vector<10x16x8xf32> to vector<8x16x8xf32>
    %106 = arith.addf %103, %105 : vector<8x16x8xf32>
    %107 = vector.extract_strided_slice %81 {offsets = [0, 0, 72], sizes = [10, 16, 8], strides = [1, 1, 1]} : vector<10x16x128xf32> to vector<10x16x8xf32>
    %108 = vector.extract_strided_slice %107 {offsets = [1, 0, 0], sizes = [8, 16, 8], strides = [1, 1, 1]} : vector<10x16x8xf32> to vector<8x16x8xf32>
    %109 = vector.extract_strided_slice %81 {offsets = [0, 0, 8], sizes = [10, 16, 8], strides = [1, 1, 1]} : vector<10x16x128xf32> to vector<10x16x8xf32>
    %110 = vector.extract_strided_slice %109 {offsets = [2, 0, 0], sizes = [8, 16, 8], strides = [1, 1, 1]} : vector<10x16x8xf32> to vector<8x16x8xf32>
    %111 = arith.addf %108, %110 : vector<8x16x8xf32>
    %112 = vector.extract_strided_slice %81 {offsets = [0, 0, 80], sizes = [10, 16, 8], strides = [1, 1, 1]} : vector<10x16x128xf32> to vector<10x16x8xf32>
    %113 = vector.extract_strided_slice %112 {offsets = [1, 0, 0], sizes = [8, 16, 8], strides = [1, 1, 1]} : vector<10x16x8xf32> to vector<8x16x8xf32>
    %114 = vector.extract_strided_slice %81 {offsets = [0, 0, 16], sizes = [10, 16, 8], strides = [1, 1, 1]} : vector<10x16x128xf32> to vector<10x16x8xf32>
    %115 = vector.extract_strided_slice %114 {offsets = [2, 0, 0], sizes = [8, 16, 8], strides = [1, 1, 1]} : vector<10x16x8xf32> to vector<8x16x8xf32>
    %116 = arith.addf %113, %115 : vector<8x16x8xf32>
    %117 = vector.extract_strided_slice %81 {offsets = [0, 0, 88], sizes = [10, 16, 8], strides = [1, 1, 1]} : vector<10x16x128xf32> to vector<10x16x8xf32>
    %118 = vector.extract_strided_slice %117 {offsets = [1, 0, 0], sizes = [8, 16, 8], strides = [1, 1, 1]} : vector<10x16x8xf32> to vector<8x16x8xf32>
    %119 = vector.extract_strided_slice %81 {offsets = [0, 0, 24], sizes = [10, 16, 8], strides = [1, 1, 1]} : vector<10x16x128xf32> to vector<10x16x8xf32>
    %120 = vector.extract_strided_slice %119 {offsets = [2, 0, 0], sizes = [8, 16, 8], strides = [1, 1, 1]} : vector<10x16x8xf32> to vector<8x16x8xf32>
    %121 = arith.addf %118, %120 : vector<8x16x8xf32>
    %cst_94 = arith.constant 0.000000e+00 : f32
    %122 = vector.broadcast %cst_94 : f32 to vector<8x1x8xf32>
    %123 = vector.extract_strided_slice %101 {offsets = [0, 0, 0], sizes = [8, 15, 8], strides = [1, 1, 1]} : vector<8x16x8xf32> to vector<8x15x8xf32>
    %124 = tpu.concatenate %122, %123 in 1 : vector<8x1x8xf32>, vector<8x15x8xf32> -> vector<8x16x8xf32>
    %125 = arith.addf %91, %124 : vector<8x16x8xf32>
    %cst_95 = arith.constant 0.000000e+00 : f32
    %126 = vector.broadcast %cst_95 : f32 to vector<8x1x8xf32>
    %127 = vector.extract_strided_slice %86 {offsets = [0, 1, 0], sizes = [8, 15, 8], strides = [1, 1, 1]} : vector<8x16x8xf32> to vector<8x15x8xf32>
    %128 = tpu.concatenate %127, %126 in 1 : vector<8x15x8xf32>, vector<8x1x8xf32> -> vector<8x16x8xf32>
    %129 = arith.addf %96, %128 : vector<8x16x8xf32>
    %cst_96 = arith.constant 0.000000e+00 : f32
    %130 = vector.broadcast %cst_96 : f32 to vector<8x1x8xf32>
    %131 = vector.extract_strided_slice %121 {offsets = [0, 0, 0], sizes = [8, 15, 8], strides = [1, 1, 1]} : vector<8x16x8xf32> to vector<8x15x8xf32>
    %132 = tpu.concatenate %130, %131 in 1 : vector<8x1x8xf32>, vector<8x15x8xf32> -> vector<8x16x8xf32>
    %133 = arith.addf %111, %132 : vector<8x16x8xf32>
    %cst_97 = arith.constant 0.000000e+00 : f32
    %134 = vector.broadcast %cst_97 : f32 to vector<8x1x8xf32>
    %135 = vector.extract_strided_slice %106 {offsets = [0, 1, 0], sizes = [8, 15, 8], strides = [1, 1, 1]} : vector<8x16x8xf32> to vector<8x15x8xf32>
    %136 = tpu.concatenate %135, %134 in 1 : vector<8x15x8xf32>, vector<8x1x8xf32> -> vector<8x16x8xf32>
    %137 = arith.addf %116, %136 : vector<8x16x8xf32>
    %138 = tpu.concatenate %125, %129, %133, %137 in 2 : vector<8x16x8xf32>, vector<8x16x8xf32>, vector<8x16x8xf32>, vector<8x16x8xf32> -> vector<8x16x32xf32>
    %c0_98 = arith.constant 0 : index
    %c0_99 = arith.constant 0 : index
    %139 = vector.load %arg12[%c0_98, %c0_99] : memref<1x32xf32, #tpu.memory_space<vmem>>, vector<1x32xf32>
    %140 = vector.shape_cast %139 : vector<1x32xf32> to vector<1x1x32xf32>
    %141 = vector.broadcast %140 : vector<1x1x32xf32> to vector<8x16x32xf32>
    %142 = arith.addf %138, %141 : vector<8x16x32xf32>
    %cst_100 = arith.constant 0.000000e+00 : f32
    %143 = vector.broadcast %cst_100 : f32 to vector<8x16x32xf32>
    %144 = arith.maximumf %142, %143 : vector<8x16x32xf32>
    %145 = arith.truncf %144 : vector<8x16x32xf32> to vector<8x16x32xbf16>
    %c0_101 = arith.constant 0 : index
    %c0_102 = arith.constant 0 : index
    %c0_103 = arith.constant 0 : index
    %c0_104 = arith.constant 0 : index
    %146 = vector.load %arg14[%c0_101, %c0_102, %c0_103, %c0_104] : memref<1x8x16x32xbf16, #tpu.memory_space<vmem>>, vector<1x8x16x32xbf16>
    %147 = vector.shape_cast %146 : vector<1x8x16x32xbf16> to vector<8x16x32xbf16>
    %148 = vector.shape_cast %145 : vector<8x16x32xbf16> to vector<1x8x16x32xbf16>
    tpu.vector_store %arg14[%c0_101, %c0_102, %c0_103, %c0_104], %148 {strides = array<i32>} : memref<1x8x16x32xbf16, #tpu.memory_space<vmem>>, vector<1x8x16x32xbf16>,
    return
  }
  func.func @transform_0(%arg0: i32, %arg1: i32) -> (i32, i32, i32, i32, i32) {
    %c0_i32 = arith.constant 0 : i32
    %c0_i32_0 = arith.constant 0 : i32
    %c0_i32_1 = arith.constant 0 : i32
    %c0_i32_2 = arith.constant 0 : i32
    return %arg0, %arg1, %c0_i32, %c0_i32_0, %c0_i32_1 : i32, i32, i32, i32, i32
  }
  func.func @transform_1(%arg0: i32, %arg1: i32) -> (i32, i32) {
    %c0_i32 = arith.constant 0 : i32
    %c0_i32_0 = arith.constant 0 : i32
    %c0_i32_1 = arith.constant 0 : i32
    return %c0_i32, %c0_i32_0 : i32, i32
  }
  func.func @transform_2(%arg0: i32, %arg1: i32) -> (i32, i32) {
    %c0_i32 = arith.constant 0 : i32
    %c0_i32_0 = arith.constant 0 : i32
    %c0_i32_1 = arith.constant 0 : i32
    return %c0_i32, %c0_i32_0 : i32, i32
  }
  func.func @transform_3(%arg0: i32, %arg1: i32) -> (i32, i32) {
    %c0_i32 = arith.constant 0 : i32
    %c0_i32_0 = arith.constant 0 : i32
    %c0_i32_1 = arith.constant 0 : i32
    return %c0_i32, %c0_i32_0 : i32, i32
  }
  func.func @transform_4(%arg0: i32, %arg1: i32) -> (i32, i32) {
    %c0_i32 = arith.constant 0 : i32
    %c0_i32_0 = arith.constant 0 : i32
    %c0_i32_1 = arith.constant 0 : i32
    return %c0_i32, %c0_i32_0 : i32, i32
  }
  func.func @transform_5(%arg0: i32, %arg1: i32) -> (i32, i32) {
    %c0_i32 = arith.constant 0 : i32
    %c0_i32_0 = arith.constant 0 : i32
    %c0_i32_1 = arith.constant 0 : i32
    return %c0_i32, %c0_i32_0 : i32, i32
  }
  func.func @transform_6(%arg0: i32, %arg1: i32) -> (i32, i32) {
    %c0_i32 = arith.constant 0 : i32
    %c0_i32_0 = arith.constant 0 : i32
    %c0_i32_1 = arith.constant 0 : i32
    return %c0_i32, %c0_i32_0 : i32, i32
  }
  func.func @transform_7(%arg0: i32, %arg1: i32) -> (i32, i32) {
    %c0_i32 = arith.constant 0 : i32
    %c0_i32_0 = arith.constant 0 : i32
    %c0_i32_1 = arith.constant 0 : i32
    return %c0_i32, %c0_i32_0 : i32, i32
  }
  func.func @transform_8(%arg0: i32, %arg1: i32) -> (i32, i32) {
    %c0_i32 = arith.constant 0 : i32
    %c0_i32_0 = arith.constant 0 : i32
    %c0_i32_1 = arith.constant 0 : i32
    return %c0_i32, %c0_i32_0 : i32, i32
  }
  func.func @transform_9(%arg0: i32, %arg1: i32) -> (i32, i32) {
    %c0_i32 = arith.constant 0 : i32
    %c0_i32_0 = arith.constant 0 : i32
    %c0_i32_1 = arith.constant 0 : i32
    return %c0_i32, %c0_i32_0 : i32, i32
  }
  func.func @transform_10(%arg0: i32, %arg1: i32) -> (i32, i32) {
    %c0_i32 = arith.constant 0 : i32
    %c0_i32_0 = arith.constant 0 : i32
    %c0_i32_1 = arith.constant 0 : i32
    return %c0_i32, %c0_i32_0 : i32, i32
  }
  func.func @transform_11(%arg0: i32, %arg1: i32) -> (i32, i32, i32) {
    %c0_i32 = arith.constant 0 : i32
    %c0_i32_0 = arith.constant 0 : i32
    return %arg0, %arg1, %c0_i32 : i32, i32, i32
  }
  func.func @transform_12(%arg0: i32, %arg1: i32) -> (i32, i32, i32, i32) {
    %c0_i32 = arith.constant 0 : i32
    %c0_i32_0 = arith.constant 0 : i32
    %c0_i32_1 = arith.constant 0 : i32
    return %arg0, %arg1, %c0_i32, %c0_i32_0 : i32, i32, i32, i32
  }
}

</mosaic_0001>

<llo_original>
// kernel: tpu_custom_call.1
$region0: #{tpu_custom_call.1}
  #allocation0 [shape = 'u32[]', space=smem, size = 0x4, offset = 0x4, fixed_abs, tag = 'smem constant byte address 0x4 - core index']
  #allocation1 [shape = 'u32[144,128]{1,0:T(1,128)}', space=vmem, size = 0x12000, scoped, tag = 'internal scratch']
  #allocation2 [shape = 'bf16[10,16,256]{2,1,0:T(16,128)(2,1)}', space=vmem, size = 0x14000, scoped, tag = 'scratch operand']
  %s0 = inlined_call_operand.vmem [shape: bf16[2,2,12,18,16], index: 0, kind: input, shape index: {}]
  %s1 = inlined_call_operand.vmem [shape: bf16[256,128], index: 1, kind: input, shape index: {}]
  %s2 = inlined_call_operand.vmem [shape: f32[1,128], index: 2, kind: input, shape index: {}]
  %s3 = inlined_call_operand.vmem [shape: f32[1,128], index: 3, kind: input, shape index: {}]
  %s4 = inlined_call_operand.vmem [shape: f32[1,128], index: 4, kind: input, shape index: {}]
  %s5 = inlined_call_operand.vmem [shape: bf16[128,8], index: 5, kind: input, shape index: {}]
  %s6 = inlined_call_operand.vmem [shape: f32[1,8], index: 6, kind: input, shape index: {}]
  %s7 = inlined_call_operand.vmem [shape: f32[1,128], index: 7, kind: input, shape index: {}]
  %s8 = inlined_call_operand.vmem [shape: f32[1,128], index: 8, kind: input, shape index: {}]
  %s9 = inlined_call_operand.vmem [shape: bf16[128,128], index: 9, kind: input, shape index: {}]
  %s10 = inlined_call_operand.vmem [shape: f32[1,32], index: 10, kind: input, shape index: {}]
  %s11 = inlined_call_operand.vmem [shape: f32[2,256,8], index: 11, kind: output, shape index: {0}]
  %s12 = inlined_call_operand.hbm [shape: bf16[2,16,16,32], index: 12, kind: output, shape index: {1}]
  %13 = xla_tuple %s11, %s12
  %s14 = sld [smem:[#allocation0]]
  $region85: #{tpu_custom_call.1} parent=0
    _
  %s16 = ssub.s32 1, %s14
  %s17 = scalar_select 0, %s16, %s14
  $region1: #{tpu_custom_call.1} parent=0
    #allocation3 [shape = 'u8[65536]{0}', space=vmem, size = 0x10000, scoped, tag = 'output window, operand 1']
    #allocation4 [shape = 's32[2]{0}', space=sflag, size = 0x8, scoped, tag = 'scoped memory for tpu_custom_call.1']
    %18 = vsyncpa [#allocation4], 0
    %s19 = scalar_lea.sflag [#allocation4], 1
    %20 = vsyncpa %s19, 0
    loop: start=0, step=1, limit=6
    $region2: #{tpu_custom_call.1} parent=1 // loop_pre_header
      _
    $region3: #{tpu_custom_call.1} parent=1 // loop_header
      %s22 = sphi 0, %s26
      %p23 = scmp.ge.s32.totalorder %s22, 6
      %s29 = sphi 0, %s41
      %s30 = sphi 0, %s37
      %s31 = sphi 0, %s29
      %s32 = sphi 0, %s30
      %s33 = sphi 0, %s31
      %s34 = sphi 0, %s32
      %s46 = sphi 0, %s48
      %s49 = sphi 0, %s46
      %s50 = sphi 0, %s49
      %s66 = sphi 0, %s50
      %s70 = sphi 0, %s70
      %s72 = sphi 0, %s70
      %s73 = sphi 0, %s72
      %s87 = sphi 0, %s73
      %s91 = sphi 0, %s91
      %s93 = sphi 0, %s91
      %s94 = sphi 0, %s93
      %s108 = sphi 0, %s94
      %s112 = sphi 0, %s112
      %s114 = sphi 0, %s112
      %s115 = sphi 0, %s114
      %s129 = sphi 0, %s115
      %s133 = sphi 0, %s133
      %s135 = sphi 0, %s133
      %s136 = sphi 0, %s135
      %s150 = sphi 0, %s136
      %s154 = sphi 0, %s154
      %s156 = sphi 0, %s154
      %s157 = sphi 0, %s156
      %s171 = sphi 0, %s157
      %s175 = sphi 0, %s175
      %s177 = sphi 0, %s175
      %s178 = sphi 0, %s177
      %s192 = sphi 0, %s178
      %s196 = sphi 0, %s196
      %s198 = sphi 0, %s196
      %s199 = sphi 0, %s198
      %s213 = sphi 0, %s199
      %s217 = sphi 0, %s217
      %s219 = sphi 0, %s217
      %s220 = sphi 0, %s219
      %s234 = sphi 0, %s220
      %s238 = sphi 0, %s238
      %s240 = sphi 0, %s238
      %s241 = sphi 0, %s240
      %s255 = sphi 0, %s241
      %s259 = sphi 0, %s259
      %s261 = sphi 0, %s259
      %s262 = sphi 0, %s261
      %s276 = sphi 0, %s262
      %s284 = sphi 0, %s286
      %s287 = sphi 0, %s284
      %s288 = sphi 0, %s287
      %s304 = sphi 0, %s288
      %s312 = sphi 0, %s314
      %s315 = sphi 0, %s312
      %s316 = sphi 0, %s315
      %s332 = sphi 0, %s316
    $region4: #{tpu_custom_call.1} parent=1 // loop_header_branch
      %25 = sbr.rel (%p23) target = $region8
    $region5: #{tpu_custom_call.1} parent=1 // loop_body
      %s27 = ssub.s32 %s22, 1
      %s28 = ssub.s32 %s22, 2
      %s35 = sadd.s32 1, %s30
      %p36 = scmp.ge.s32.totalorder %s35, 2
      %s37 = scalar_select %p36, 0, %s35
      %s38 = sadd.s32 1, %s29
      %s39 = scalar_select %p36, %s38, %s29
      %p40 = scmp.ge.s32.totalorder %s39, 2
      %s41 = scalar_select %p40, 0, %s39
      %s42 = ssub.s32 %s29, %s41
      %s43 = ssub.s32 %s30, %s37
      %s44 = sor.u32 %s42, %s43
      %p45 = scmp.eq.s32.totalorder %s44, 0
      %s47 = sadd.s32 %s46, 1
      %s48 = scalar_select %p45, %s46, %s47
      %p51 = pneg %p45
      %p52 = scmp.eq.s32.totalorder %s22, 3
      %p53 = por %p51, %p52
      %p54 = scmp.ne.s32.totalorder %s46, %s49
      %p55 = scmp.eq.s32.totalorder %s22, 0
      %p56 = por %p54, %p55
      %p57 = scmp.ne.s32.totalorder %s46, %s49
      %p58 = scmp.eq.s32.totalorder %s27, 3
      %p59 = por %p57, %p58
      %p60 = scmp.ne.s32.totalorder %s49, %s50
      %p61 = scmp.eq.s32.totalorder %s27, 0
      %p62 = por %p60, %p61
      %p63 = scmp.ne.s32.totalorder %s49, %s50
      %p64 = scmp.eq.s32.totalorder %s28, 3
      %p65 = por %p63, %p64
      %p67 = scmp.ne.s32.totalorder %s50, %s66
      %p68 = scmp.eq.s32.totalorder %s28, 0
      %p69 = por %p67, %p68
      %s71 = sadd.s32 %s70, 1
      %p74 = scmp.eq.s32.totalorder %s22, 3
      %p75 = scmp.ne.s32.totalorder %s70, %s72
      %p76 = scmp.eq.s32.totalorder %s22, 0
      %p77 = por %p75, %p76
      %p78 = scmp.ne.s32.totalorder %s70, %s72
      %p79 = scmp.eq.s32.totalorder %s27, 3
      %p80 = por %p78, %p79
      %p81 = scmp.ne.s32.totalorder %s72, %s73
      %p82 = scmp.eq.s32.totalorder %s27, 0
      %p83 = por %p81, %p82
      %p84 = scmp.ne.s32.totalorder %s72, %s73
      %p85 = scmp.eq.s32.totalorder %s28, 3
      %p86 = por %p84, %p85
      %p88 = scmp.ne.s32.totalorder %s73, %s87
      %p89 = scmp.eq.s32.totalorder %s28, 0
      %p90 = por %p88, %p89
      %s92 = sadd.s32 %s91, 1
      %p95 = scmp.eq.s32.totalorder %s22, 3
      %p96 = scmp.ne.s32.totalorder %s91, %s93
      %p97 = scmp.eq.s32.totalorder %s22, 0
      %p98 = por %p96, %p97
      %p99 = scmp.ne.s32.totalorder %s91, %s93
      %p100 = scmp.eq.s32.totalorder %s27, 3
      %p101 = por %p99, %p100
      %p102 = scmp.ne.s32.totalorder %s93, %s94
      %p103 = scmp.eq.s32.totalorder %s27, 0
      %p104 = por %p102, %p103
      %p105 = scmp.ne.s32.totalorder %s93, %s94
      %p106 = scmp.eq.s32.totalorder %s28, 3
      %p107 = por %p105, %p106
      %p109 = scmp.ne.s32.totalorder %s94, %s108
      %p110 = scmp.eq.s32.totalorder %s28, 0
      %p111 = por %p109, %p110
      %s113 = sadd.s32 %s112, 1
      %p116 = scmp.eq.s32.totalorder %s22, 3
      %p117 = scmp.ne.s32.totalorder %s112, %s114
      %p118 = scmp.eq.s32.totalorder %s22, 0
      %p119 = por %p117, %p118
      %p120 = scmp.ne.s32.totalorder %s112, %s114
      %p121 = scmp.eq.s32.totalorder %s27, 3
      %p122 = por %p120, %p121
      %p123 = scmp.ne.s32.totalorder %s114, %s115
      %p124 = scmp.eq.s32.totalorder %s27, 0
      %p125 = por %p123, %p124
      %p126 = scmp.ne.s32.totalorder %s114, %s115
      %p127 = scmp.eq.s32.totalorder %s28, 3
      %p128 = por %p126, %p127
      %p130 = scmp.ne.s32.totalorder %s115, %s129
      %p131 = scmp.eq.s32.totalorder %s28, 0
      %p132 = por %p130, %p131
      %s134 = sadd.s32 %s133, 1
      %p137 = scmp.eq.s32.totalorder %s22, 3
      %p138 = scmp.ne.s32.totalorder %s133, %s135
      %p139 = scmp.eq.s32.totalorder %s22, 0
      %p140 = por %p138, %p139
      %p141 = scmp.ne.s32.totalorder %s133, %s135
      %p142 = scmp.eq.s32.totalorder %s27, 3
      %p143 = por %p141, %p142
      %p144 = scmp.ne.s32.totalorder %s135, %s136
      %p145 = scmp.eq.s32.totalorder %s27, 0
      %p146 = por %p144, %p145
      %p147 = scmp.ne.s32.totalorder %s135, %s136
      %p148 = scmp.eq.s32.totalorder %s28, 3
      %p149 = por %p147, %p148
      %p151 = scmp.ne.s32.totalorder %s136, %s150
      %p152 = scmp.eq.s32.totalorder %s28, 0
      %p153 = por %p151, %p152
      %s155 = sadd.s32 %s154, 1
      %p158 = scmp.eq.s32.totalorder %s22, 3
      %p159 = scmp.ne.s32.totalorder %s154, %s156
      %p160 = scmp.eq.s32.totalorder %s22, 0
      %p161 = por %p159, %p160
      %p162 = scmp.ne.s32.totalorder %s154, %s156
      %p163 = scmp.eq.s32.totalorder %s27, 3
      %p164 = por %p162, %p163
      %p165 = scmp.ne.s32.totalorder %s156, %s157
      %p166 = scmp.eq.s32.totalorder %s27, 0
      %p167 = por %p165, %p166
      %p168 = scmp.ne.s32.totalorder %s156, %s157
      %p169 = scmp.eq.s32.totalorder %s28, 3
      %p170 = por %p168, %p169
      %p172 = scmp.ne.s32.totalorder %s157, %s171
      %p173 = scmp.eq.s32.totalorder %s28, 0
      %p174 = por %p172, %p173
      %s176 = sadd.s32 %s175, 1
      %p179 = scmp.eq.s32.totalorder %s22, 3
      %p180 = scmp.ne.s32.totalorder %s175, %s177
      %p181 = scmp.eq.s32.totalorder %s22, 0
      %p182 = por %p180, %p181
      %p183 = scmp.ne.s32.totalorder %s175, %s177
      %p184 = scmp.eq.s32.totalorder %s27, 3
      %p185 = por %p183, %p184
      %p186 = scmp.ne.s32.totalorder %s177, %s178
      %p187 = scmp.eq.s32.totalorder %s27, 0
      %p188 = por %p186, %p187
      %p189 = scmp.ne.s32.totalorder %s177, %s178
      %p190 = scmp.eq.s32.totalorder %s28, 3
      %p191 = por %p189, %p190
      %p193 = scmp.ne.s32.totalorder %s178, %s192
      %p194 = scmp.eq.s32.totalorder %s28, 0
      %p195 = por %p193, %p194
      %s197 = sadd.s32 %s196, 1
      %p200 = scmp.eq.s32.totalorder %s22, 3
      %p201 = scmp.ne.s32.totalorder %s196, %s198
      %p202 = scmp.eq.s32.totalorder %s22, 0
      %p203 = por %p201, %p202
      %p204 = scmp.ne.s32.totalorder %s196, %s198
      %p205 = scmp.eq.s32.totalorder %s27, 3
      %p206 = por %p204, %p205
      %p207 = scmp.ne.s32.totalorder %s198, %s199
      %p208 = scmp.eq.s32.totalorder %s27, 0
      %p209 = por %p207, %p208
      %p210 = scmp.ne.s32.totalorder %s198, %s199
      %p211 = scmp.eq.s32.totalorder %s28, 3
      %p212 = por %p210, %p211
      %p214 = scmp.ne.s32.totalorder %s199, %s213
      %p215 = scmp.eq.s32.totalorder %s28, 0
      %p216 = por %p214, %p215
      %s218 = sadd.s32 %s217, 1
      %p221 = scmp.eq.s32.totalorder %s22, 3
      %p222 = scmp.ne.s32.totalorder %s217, %s219
      %p223 = scmp.eq.s32.totalorder %s22, 0
      %p224 = por %p222, %p223
      %p225 = scmp.ne.s32.totalorder %s217, %s219
      %p226 = scmp.eq.s32.totalorder %s27, 3
      %p227 = por %p225, %p226
      %p228 = scmp.ne.s32.totalorder %s219, %s220
      %p229 = scmp.eq.s32.totalorder %s27, 0
      %p230 = por %p228, %p229
      %p231 = scmp.ne.s32.totalorder %s219, %s220
      %p232 = scmp.eq.s32.totalorder %s28, 3
      %p233 = por %p231, %p232
      %p235 = scmp.ne.s32.totalorder %s220, %s234
      %p236 = scmp.eq.s32.totalorder %s28, 0
      %p237 = por %p235, %p236
      %s239 = sadd.s32 %s238, 1
      %p242 = scmp.eq.s32.totalorder %s22, 3
      %p243 = scmp.ne.s32.totalorder %s238, %s240
      %p244 = scmp.eq.s32.totalorder %s22, 0
      %p245 = por %p243, %p244
      %p246 = scmp.ne.s32.totalorder %s238, %s240
      %p247 = scmp.eq.s32.totalorder %s27, 3
      %p248 = por %p246, %p247
      %p249 = scmp.ne.s32.totalorder %s240, %s241
      %p250 = scmp.eq.s32.totalorder %s27, 0
      %p251 = por %p249, %p250
      %p252 = scmp.ne.s32.totalorder %s240, %s241
      %p253 = scmp.eq.s32.totalorder %s28, 3
      %p254 = por %p252, %p253
      %p256 = scmp.ne.s32.totalorder %s241, %s255
      %p257 = scmp.eq.s32.totalorder %s28, 0
      %p258 = por %p256, %p257
      %s260 = sadd.s32 %s259, 1
      %p263 = scmp.eq.s32.totalorder %s22, 3
      %p264 = scmp.ne.s32.totalorder %s259, %s261
      %p265 = scmp.eq.s32.totalorder %s22, 0
      %p266 = por %p264, %p265
      %p267 = scmp.ne.s32.totalorder %s259, %s261
      %p268 = scmp.eq.s32.totalorder %s27, 3
      %p269 = por %p267, %p268
      %p270 = scmp.ne.s32.totalorder %s261, %s262
      %p271 = scmp.eq.s32.totalorder %s27, 0
      %p272 = por %p270, %p271
      %p273 = scmp.ne.s32.totalorder %s261, %s262
      %p274 = scmp.eq.s32.totalorder %s28, 3
      %p275 = por %p273, %p274
      %p277 = scmp.ne.s32.totalorder %s262, %s276
      %p278 = scmp.eq.s32.totalorder %s28, 0
      %p279 = por %p277, %p278
      %s280 = ssub.s32 %s29, %s41
      %s281 = ssub.s32 %s30, %s37
      %s282 = sor.u32 %s280, %s281
      %p283 = scmp.eq.s32.totalorder %s282, 0
      %s285 = sadd.s32 %s284, 1
      %s286 = scalar_select %p283, %s284, %s285
      %p289 = pneg %p283
      %p290 = scmp.eq.s32.totalorder %s22, 3
      %p291 = por %p289, %p290
      %p292 = scmp.ne.s32.totalorder %s284, %s287
      %p293 = scmp.eq.s32.totalorder %s22, 0
      %p294 = por %p292, %p293
      %p295 = scmp.ne.s32.totalorder %s284, %s287
      %p296 = scmp.eq.s32.totalorder %s27, 3
      %p297 = por %p295, %p296
      %p298 = scmp.ne.s32.totalorder %s287, %s288
      %p299 = scmp.eq.s32.totalorder %s27, 0
      %p300 = por %p298, %p299
      %p301 = scmp.ne.s32.totalorder %s287, %s288
      %p302 = scmp.eq.s32.totalorder %s28, 3
      %p303 = por %p301, %p302
      %p305 = scmp.ne.s32.totalorder %s288, %s304
      %p306 = scmp.eq.s32.totalorder %s28, 0
      %p307 = por %p305, %p306
      %s308 = ssub.s32 %s29, %s41
      %s309 = ssub.s32 %s30, %s37
      %s310 = sor.u32 %s308, %s309
      %p311 = scmp.eq.s32.totalorder %s310, 0
      %s313 = sadd.s32 %s312, 1
      %s314 = scalar_select %p311, %s312, %s313
      %p317 = pneg %p311
      %p318 = scmp.eq.s32.totalorder %s22, 3
      %p319 = por %p317, %p318
      %p320 = scmp.ne.s32.totalorder %s312, %s315
      %p321 = scmp.eq.s32.totalorder %s22, 0
      %p322 = por %p320, %p321
      %p323 = scmp.ne.s32.totalorder %s312, %s315
      %p324 = scmp.eq.s32.totalorder %s27, 3
      %p325 = por %p323, %p324
      %p326 = scmp.ne.s32.totalorder %s315, %s316
      %p327 = scmp.eq.s32.totalorder %s27, 0
      %p328 = por %p326, %p327
      %p329 = scmp.ne.s32.totalorder %s315, %s316
      %p330 = scmp.eq.s32.totalorder %s28, 3
      %p331 = por %p329, %p330
      %p333 = scmp.ne.s32.totalorder %s316, %s332
      %p334 = scmp.eq.s32.totalorder %s28, 0
      %p335 = por %p333, %p334
      %p336 = scmp.le.s32.totalorder 1, %s22
      %p337 = scmp.lt.s32.totalorder %s22, 5
      %p338 = pnand %p336, %p337
      %p339 = pneg %p338
      // Predicated region
      $region9: #{tpu_custom_call.1} parent=5 // pred_check
        _
      $region10: #{tpu_custom_call.1} parent=5 // pred_check_branch
        %341 = sbr.rel (%p338) target = $region12
      $region11: #{tpu_custom_call.1} parent=5 // pred_region
        %s342 = ssub.s32 %s22, 1
        // Predicated region
        $region13: #{tpu_custom_call.1} parent=11 // pred_check
          %p343 = pneg %p83
        $region14: #{tpu_custom_call.1} parent=11 // pred_check_branch
          %345 = sbr.rel (%p343) target = $region16
        $region15: #{tpu_custom_call.1} parent=11 // pred_region
          _
        $region16: #{tpu_custom_call.1} parent=11 // pred_fallthru
          _
        // Predicated region
        $region17: #{tpu_custom_call.1} parent=11 // pred_check
          %p346 = pneg %p104
        $region18: #{tpu_custom_call.1} parent=11 // pred_check_branch
          %348 = sbr.rel (%p346) target = $region20
        $region19: #{tpu_custom_call.1} parent=11 // pred_region
          _
        $region20: #{tpu_custom_call.1} parent=11 // pred_fallthru
          _
        // Predicated region
        $region21: #{tpu_custom_call.1} parent=11 // pred_check
          %p349 = pneg %p125
        $region22: #{tpu_custom_call.1} parent=11 // pred_check_branch
          %351 = sbr.rel (%p349) target = $region24
        $region23: #{tpu_custom_call.1} parent=11 // pred_region
          _
        $region24: #{tpu_custom_call.1} parent=11 // pred_fallthru
          _
        // Predicated region
        $region25: #{tpu_custom_call.1} parent=11 // pred_check
          %p352 = pneg %p146
        $region26: #{tpu_custom_call.1} parent=11 // pred_check_branch
          %354 = sbr.rel (%p352) target = $region28
        $region27: #{tpu_custom_call.1} parent=11 // pred_region
          _
        $region28: #{tpu_custom_call.1} parent=11 // pred_fallthru
          _
        // Predicated region
        $region29: #{tpu_custom_call.1} parent=11 // pred_check
          %p355 = pneg %p167
        $region30: #{tpu_custom_call.1} parent=11 // pred_check_branch
          %357 = sbr.rel (%p355) target = $region32
        $region31: #{tpu_custom_call.1} parent=11 // pred_region
          _
        $region32: #{tpu_custom_call.1} parent=11 // pred_fallthru
          _
        // Predicated region
        $region33: #{tpu_custom_call.1} parent=11 // pred_check
          %p358 = pneg %p188
        $region34: #{tpu_custom_call.1} parent=11 // pred_check_branch
          %360 = sbr.rel (%p358) target = $region36
        $region35: #{tpu_custom_call.1} parent=11 // pred_region
          _
        $region36: #{tpu_custom_call.1} parent=11 // pred_fallthru
          _
        // Predicated region
        $region37: #{tpu_custom_call.1} parent=11 // pred_check
          %p361 = pneg %p209
        $region38: #{tpu_custom_call.1} parent=11 // pred_check_branch
          %363 = sbr.rel (%p361) target = $region40
        $region39: #{tpu_custom_call.1} parent=11 // pred_region
          _
        $region40: #{tpu_custom_call.1} parent=11 // pred_fallthru
          _
        // Predicated region
        $region41: #{tpu_custom_call.1} parent=11 // pred_check
          %p364 = pneg %p230
        $region42: #{tpu_custom_call.1} parent=11 // pred_check_branch
          %366 = sbr.rel (%p364) target = $region44
        $region43: #{tpu_custom_call.1} parent=11 // pred_region
          _
        $region44: #{tpu_custom_call.1} parent=11 // pred_fallthru
          _
        // Predicated region
        $region45: #{tpu_custom_call.1} parent=11 // pred_check
          %p367 = pneg %p251
        $region46: #{tpu_custom_call.1} parent=11 // pred_check_branch
          %369 = sbr.rel (%p367) target = $region48
        $region47: #{tpu_custom_call.1} parent=11 // pred_region
          _
        $region48: #{tpu_custom_call.1} parent=11 // pred_fallthru
          _
        // Predicated region
        $region49: #{tpu_custom_call.1} parent=11 // pred_check
          %p370 = pneg %p272
        $region50: #{tpu_custom_call.1} parent=11 // pred_check_branch
          %372 = sbr.rel (%p370) target = $region52
        $region51: #{tpu_custom_call.1} parent=11 // pred_region
          _
        $region52: #{tpu_custom_call.1} parent=11 // pred_fallthru
          _
      $region12: #{tpu_custom_call.1} parent=5 // pred_fallthru
        _
      %p373 = scmp.lt.s32.totalorder %s22, 4
      // Predicated region
      $region53: #{tpu_custom_call.1} parent=5 // pred_check
        %p374 = pneg %p373
      $region54: #{tpu_custom_call.1} parent=5 // pred_check_branch
        %376 = sbr.rel (%p374) target = $region56
      $region55: #{tpu_custom_call.1} parent=5 // pred_region
        // Predicated region
        $region57: #{tpu_custom_call.1} parent=55 // pred_check
          %p377 = pneg %p56
        $region58: #{tpu_custom_call.1} parent=55 // pred_check_branch
          %379 = sbr.rel (%p377) target = $region60
        $region59: #{tpu_custom_call.1} parent=55 // pred_region
          %p380 = scmp.lt.s32.totalorder %s29, 1
          %s381 = scalar_select %p380, %s29, 1
          %p382 = scmp.lt.s32.totalorder %s30, 1
          %s383 = scalar_select %p382, %s30, 1
          %s384 = smul.addr %s383, 36
          %s385 = smul.addr %s381, 72
          %s386 = sadd.s32 %s384, %s385
          %s387 = smul.addr %s386, 4
          %s388 = scalar_lea.vmem %s0, %s387
        $region60: #{tpu_custom_call.1} parent=55 // pred_fallthru
          _
      $region56: #{tpu_custom_call.1} parent=5 // pred_fallthru
        _
      %p389 = scmp.le.s32.totalorder 1, %s22
      %p390 = scmp.lt.s32.totalorder %s22, 5
      %p391 = pnand %p389, %p390
      %p392 = pneg %p391
      // Predicated region
      $region61: #{tpu_custom_call.1} parent=5 // pred_check
        _
      $region62: #{tpu_custom_call.1} parent=5 // pred_check_branch
        %394 = sbr.rel (%p391) target = $region64
      $region63: #{tpu_custom_call.1} parent=5 // pred_region
        %s395 = ssub.s32 %s22, 1
        %p396 = scmp.lt.s32.totalorder %s31, 1
        %s397 = scalar_select %p396, %s31, 1
        %p398 = scmp.lt.s32.totalorder %s32, 1
        %s399 = scalar_select %p398, %s32, 1
        %s400 = smul.addr %s399, 36
        %s401 = smul.addr %s397, 72
        %s402 = sadd.s32 %s400, %s401
        %s403 = smul.addr %s402, 4
        %s404 = scalar_lea.vmem %s0, %s403
        %p405 = pneg %p62
        %p406 = pneg %p59
        %p407 = pneg %p83
        %p408 = pneg %p80
        %p409 = pneg %p104
        %p410 = pneg %p101
        %p411 = pneg %p125
        %p412 = pneg %p122
        %p413 = pneg %p146
        %p414 = pneg %p143
        %p415 = pneg %p167
        %p416 = pneg %p164
        %p417 = pneg %p188
        %p418 = pneg %p185
        %p419 = pneg %p209
        %p420 = pneg %p206
        %p421 = pneg %p230
        %p422 = pneg %p227
        %p423 = pneg %p251
        %p424 = pneg %p248
        %p425 = pneg %p272
        %p426 = pneg %p269
        %p427 = pneg %p300
        %p428 = pneg %p297
        %s429 = smul.u32 16, %s32
        %p430 = scmp.lt.s32.totalorder %s31, 1
        %s431 = scalar_select %p430, %s31, 1
        %p432 = scmp.lt.s32.totalorder %s429, 31
        %s433 = scalar_select %p432, %s429, 31
        %s434 = smul.addr %s431, 32
        %s435 = sadd.s32 %s433, %s434
        %s436 = smul.addr %s435, 8
        %s437 = scalar_lea.vmem %s11, %s436
        %p438 = pneg %p328
        %p439 = pneg %p325
        %s440 = sand.u32 %s315, 1
        %s441 = scalar_lea.sflag [#allocation4], %s440
        %s442 = sand.u32 %s315, 1
        %s443 = smul.addr %s442, 64
        %s444 = scalar_lea.vmem [#allocation3], %s443
        %p445 = scmp.lt.s32.totalorder %s31, 1
        %s446 = scalar_select %p445, %s31, 1
        %p447 = scmp.lt.s32.totalorder %s32, 1
        %s448 = scalar_select %p447, %s32, 1
        %s449 = smul.addr %s448, 36
        %s450 = smul.addr %s446, 72
        %s451 = sadd.s32 %s449, %s450
        %s452 = smul.addr %s451, 4
        %s453 = scalar_lea.vmem %s0, %s452
        %s454 = smul.u32 16, %s32
        %p455 = scmp.lt.s32.totalorder %s31, 1
        %s456 = scalar_select %p455, %s31, 1
        %p457 = scmp.lt.s32.totalorder %s454, 31
        %s458 = scalar_select %p457, %s454, 31
        %s459 = smul.addr %s456, 32
        %s460 = sadd.s32 %s458, %s459
        %s461 = smul.addr %s460, 8
        %s462 = scalar_lea.vmem %s11, %s461
        %s463 = smul.u32 16, %s32
        %s464 = smul.u32 8, %s32
        %v466 = vld [vmem:[%s453] sm:$0xf]
        %v467 = vld [vmem:[%s453 + $0x4] sm:$0xf]
        %v468 = vld [vmem:[%s453 + $0xc] sm:$0xf]
        %v469 = vld [vmem:[%s453 + $0x10] sm:$0xf]
        %v470 = vld [vmem:[%s453 + $0x18] sm:$0xf]
        %v471 = vld [vmem:[%s453 + $0x1c] sm:$0xf]
        %v472 = vld [vmem:[%s453 + $0x24] sm:$0xf]
        %v473 = vld [vmem:[%s453 + $0x28] sm:$0xf]
        %v474 = vld [vmem:[%s453 + $0x30] sm:$0xf]
        %v475 = vld [vmem:[%s453 + $0x34] sm:$0xf]
        %v476 = vld [vmem:[%s453 + $0x3c] sm:$0xf]
        %v477 = vld [vmem:[%s453 + $0x40] sm:$0xf]
        %v478 = vld [vmem:[%s453 + $0x48] sm:$0xf]
        %v479 = vld [vmem:[%s453 + $0x4c] sm:$0xf]
        %v480 = vld [vmem:[%s453 + $0x54] sm:$0xf]
        %v481 = vld [vmem:[%s453 + $0x58] sm:$0xf]
        %v482 = vld [vmem:[%s453 + $0x60] sm:$0xf]
        %v483 = vld [vmem:[%s453 + $0x64] sm:$0xf]
        %v484 = vld [vmem:[%s453 + $0x6c] sm:$0xf]
        %v485 = vld [vmem:[%s453 + $0x70] sm:$0xf]
        %v506 = vunpack.c.l.b16 %v466
        %v507 = vunpack.c.l.b16 %v467
        %v508 = vunpack.c.l.b16 %v468
        %v509 = vunpack.c.l.b16 %v469
        %v510 = vunpack.c.l.b16 %v470
        %v511 = vunpack.c.l.b16 %v471
        %v512 = vunpack.c.l.b16 %v472
        %v513 = vunpack.c.l.b16 %v473
        %v514 = vunpack.c.l.b16 %v474
        %v515 = vunpack.c.l.b16 %v475
        %v516 = vunpack.c.l.b16 %v476
        %v517 = vunpack.c.l.b16 %v477
        %v518 = vunpack.c.l.b16 %v478
        %v519 = vunpack.c.l.b16 %v479
        %v520 = vunpack.c.l.b16 %v480
        %v521 = vunpack.c.l.b16 %v481
        %v522 = vunpack.c.l.b16 %v482
        %v523 = vunpack.c.l.b16 %v483
        %v524 = vunpack.c.l.b16 %v484
        %v525 = vunpack.c.l.b16 %v485
        %v526 = vpack.c.b16 %v507, %v506
        %v527 = vpack.c.b16 %v509, %v508
        %v528 = vpack.c.b16 %v511, %v510
        %v529 = vpack.c.b16 %v513, %v512
        %v530 = vpack.c.b16 %v515, %v514
        %v531 = vpack.c.b16 %v517, %v516
        %v532 = vpack.c.b16 %v519, %v518
        %v533 = vpack.c.b16 %v521, %v520
        %v534 = vpack.c.b16 %v523, %v522
        %v535 = vpack.c.b16 %v525, %v524
        %vm546 = vcmask 130048
        %547 = vst.msk [vmem:[#allocation2] sm:$0xff] %vm546, %v526
        %548 = vst.msk [vmem:[#allocation2 + $0x10] sm:$0xff] %vm546, %v527
        %549 = vst.msk [vmem:[#allocation2 + $0x20] sm:$0xff] %vm546, %v528
        %550 = vst.msk [vmem:[#allocation2 + $0x30] sm:$0xff] %vm546, %v529
        %551 = vst.msk [vmem:[#allocation2 + $0x40] sm:$0xff] %vm546, %v530
        %552 = vst.msk [vmem:[#allocation2 + $0x50] sm:$0xff] %vm546, %v531
        %553 = vst.msk [vmem:[#allocation2 + $0x60] sm:$0xff] %vm546, %v532
        %554 = vst.msk [vmem:[#allocation2 + $0x70] sm:$0xff] %vm546, %v533
        %555 = vst.msk [vmem:[#allocation2 + $0x80] sm:$0xff] %vm546, %v534
        %556 = vst.msk [vmem:[#allocation2 + $0x90] sm:$0xff] %vm546, %v535
        %v557 = vld [vmem:[%s453] sm:$0xf]
        %v558 = vld [vmem:[%s453 + $0x4] sm:$0xf]
        %v559 = vld [vmem:[%s453 + $0x8] sm:$0x1]
        %v560 = vld [vmem:[%s453 + $0xc] sm:$0xf]
        %v561 = vld [vmem:[%s453 + $0x10] sm:$0xf]
        %v562 = vld [vmem:[%s453 + $0x14] sm:$0x1]
        %v563 = vld [vmem:[%s453 + $0x18] sm:$0xf]
        %v564 = vld [vmem:[%s453 + $0x1c] sm:$0xf]
        %v565 = vld [vmem:[%s453 + $0x20] sm:$0x1]
        %v566 = vld [vmem:[%s453 + $0x24] sm:$0xf]
        %v567 = vld [vmem:[%s453 + $0x28] sm:$0xf]
        %v568 = vld [vmem:[%s453 + $0x2c] sm:$0x1]
        %v569 = vld [vmem:[%s453 + $0x30] sm:$0xf]
        %v570 = vld [vmem:[%s453 + $0x34] sm:$0xf]
        %v571 = vld [vmem:[%s453 + $0x38] sm:$0x1]
        %v572 = vld [vmem:[%s453 + $0x3c] sm:$0xf]
        %v573 = vld [vmem:[%s453 + $0x40] sm:$0xf]
        %v574 = vld [vmem:[%s453 + $0x44] sm:$0x1]
        %v575 = vld [vmem:[%s453 + $0x48] sm:$0xf]
        %v576 = vld [vmem:[%s453 + $0x4c] sm:$0xf]
        %v577 = vld [vmem:[%s453 + $0x50] sm:$0x1]
        %v578 = vld [vmem:[%s453 + $0x54] sm:$0xf]
        %v579 = vld [vmem:[%s453 + $0x58] sm:$0xf]
        %v580 = vld [vmem:[%s453 + $0x5c] sm:$0x1]
        %v581 = vld [vmem:[%s453 + $0x60] sm:$0xf]
        %v582 = vld [vmem:[%s453 + $0x64] sm:$0xf]
        %v583 = vld [vmem:[%s453 + $0x68] sm:$0x1]
        %v584 = vld [vmem:[%s453 + $0x6c] sm:$0xf]
        %v585 = vld [vmem:[%s453 + $0x70] sm:$0xf]
        %v586 = vld [vmem:[%s453 + $0x74] sm:$0x1]
        %v617 = vunpack.c.l.b16 %v557
        %v618 = vunpack.c.l.b16 %v558
        %v619 = vunpack.c.l.b16 %v559
        %v620 = vunpack.c.l.b16 %v560
        %v621 = vunpack.c.l.b16 %v561
        %v622 = vunpack.c.l.b16 %v562
        %v623 = vunpack.c.l.b16 %v563
        %v624 = vunpack.c.l.b16 %v564
        %v625 = vunpack.c.l.b16 %v565
        %v626 = vunpack.c.l.b16 %v566
        %v627 = vunpack.c.l.b16 %v567
        %v628 = vunpack.c.l.b16 %v568
        %v629 = vunpack.c.l.b16 %v569
        %v630 = vunpack.c.l.b16 %v570
        %v631 = vunpack.c.l.b16 %v571
        %v632 = vunpack.c.l.b16 %v572
        %v633 = vunpack.c.l.b16 %v573
        %v634 = vunpack.c.l.b16 %v574
        %v635 = vunpack.c.l.b16 %v575
        %v636 = vunpack.c.l.b16 %v576
        %v637 = vunpack.c.l.b16 %v577
        %v638 = vunpack.c.l.b16 %v578
        %v639 = vunpack.c.l.b16 %v579
        %v640 = vunpack.c.l.b16 %v580
        %v641 = vunpack.c.l.b16 %v581
        %v642 = vunpack.c.l.b16 %v582
        %v643 = vunpack.c.l.b16 %v583
        %v644 = vunpack.c.l.b16 %v584
        %v645 = vunpack.c.l.b16 %v585
        %v646 = vunpack.c.l.b16 %v586
        %v647 = vpack.c.b16 %v618, %v617
        %v648 = vpack.c.b16 %v619, %v619
        %v649 = vpack.c.b16 %v621, %v620
        %v650 = vpack.c.b16 %v622, %v622
        %v651 = vpack.c.b16 %v624, %v623
        %v652 = vpack.c.b16 %v625, %v625
        %v653 = vpack.c.b16 %v627, %v626
        %v654 = vpack.c.b16 %v628, %v628
        %v655 = vpack.c.b16 %v630, %v629
        %v656 = vpack.c.b16 %v631, %v631
        %v657 = vpack.c.b16 %v633, %v632
        %v658 = vpack.c.b16 %v634, %v634
        %v659 = vpack.c.b16 %v636, %v635
        %v660 = vpack.c.b16 %v637, %v637
        %v661 = vpack.c.b16 %v639, %v638
        %v662 = vpack.c.b16 %v640, %v640
        %v663 = vpack.c.b16 %v642, %v641
        %v664 = vpack.c.b16 %v643, %v643
        %v665 = vpack.c.b16 %v645, %v644
        %v666 = vpack.c.b16 %v646, %v646
        %vm667 = vsmask.f32 7424
        %v669 = vshrl.u32 %v647, 16
        %v671 = vshll.u32 %v647, 16
        %v673 = vrot.slane %v671, 1
        %v674 = vor.u32 %v669, %v673
        %v676 = vshll.u32 %v648, 16
        %v678 = vrot.slane %v676, 1
        %v679 = vsel %vm667, %v674, %v678
        %v681 = vshrl.u32 %v649, 16
        %v683 = vshll.u32 %v649, 16
        %v685 = vrot.slane %v683, 1
        %v686 = vor.u32 %v681, %v685
        %v688 = vshll.u32 %v650, 16
        %v690 = vrot.slane %v688, 1
        %v691 = vsel %vm667, %v686, %v690
        %v693 = vshrl.u32 %v651, 16
        %v695 = vshll.u32 %v651, 16
        %v697 = vrot.slane %v695, 1
        %v698 = vor.u32 %v693, %v697
        %v700 = vshll.u32 %v652, 16
        %v702 = vrot.slane %v700, 1
        %v703 = vsel %vm667, %v698, %v702
        %v705 = vshrl.u32 %v653, 16
        %v707 = vshll.u32 %v653, 16
        %v709 = vrot.slane %v707, 1
        %v710 = vor.u32 %v705, %v709
        %v712 = vshll.u32 %v654, 16
        %v714 = vrot.slane %v712, 1
        %v715 = vsel %vm667, %v710, %v714
        %v717 = vshrl.u32 %v655, 16
        %v719 = vshll.u32 %v655, 16
        %v721 = vrot.slane %v719, 1
        %v722 = vor.u32 %v717, %v721
        %v724 = vshll.u32 %v656, 16
        %v726 = vrot.slane %v724, 1
        %v727 = vsel %vm667, %v722, %v726
        %v729 = vshrl.u32 %v657, 16
        %v731 = vshll.u32 %v657, 16
        %v733 = vrot.slane %v731, 1
        %v734 = vor.u32 %v729, %v733
        %v736 = vshll.u32 %v658, 16
        %v738 = vrot.slane %v736, 1
        %v739 = vsel %vm667, %v734, %v738
        %v741 = vshrl.u32 %v659, 16
        %v743 = vshll.u32 %v659, 16
        %v745 = vrot.slane %v743, 1
        %v746 = vor.u32 %v741, %v745
        %v748 = vshll.u32 %v660, 16
        %v750 = vrot.slane %v748, 1
        %v751 = vsel %vm667, %v746, %v750
        %v753 = vshrl.u32 %v661, 16
        %v755 = vshll.u32 %v661, 16
        %v757 = vrot.slane %v755, 1
        %v758 = vor.u32 %v753, %v757
        %v760 = vshll.u32 %v662, 16
        %v762 = vrot.slane %v760, 1
        %v763 = vsel %vm667, %v758, %v762
        %v765 = vshrl.u32 %v663, 16
        %v767 = vshll.u32 %v663, 16
        %v769 = vrot.slane %v767, 1
        %v770 = vor.u32 %v765, %v769
        %v772 = vshll.u32 %v664, 16
        %v774 = vrot.slane %v772, 1
        %v775 = vsel %vm667, %v770, %v774
        %v777 = vshrl.u32 %v665, 16
        %v779 = vshll.u32 %v665, 16
        %v781 = vrot.slane %v779, 1
        %v782 = vor.u32 %v777, %v781
        %v784 = vshll.u32 %v666, 16
        %v786 = vrot.slane %v784, 1
        %v787 = vsel %vm667, %v782, %v786
        %788 = vrot.lane.b32.xlu0 %v679, 16
        %v789 = vpop.permute.xlu0 %788
        %790 = vrot.lane.b32.xlu0 %v691, 16
        %v791 = vpop.permute.xlu0 %790
        %792 = vrot.lane.b32.xlu0 %v703, 16
        %v793 = vpop.permute.xlu0 %792
        %794 = vrot.lane.b32.xlu0 %v715, 16
        %v795 = vpop.permute.xlu0 %794
        %796 = vrot.lane.b32.xlu0 %v727, 16
        %v797 = vpop.permute.xlu0 %796
        %798 = vrot.lane.b32.xlu0 %v739, 16
        %v799 = vpop.permute.xlu0 %798
        %800 = vrot.lane.b32.xlu0 %v751, 16
        %v801 = vpop.permute.xlu0 %800
        %802 = vrot.lane.b32.xlu0 %v763, 16
        %v803 = vpop.permute.xlu0 %802
        %804 = vrot.lane.b32.xlu0 %v775, 16
        %v805 = vpop.permute.xlu0 %804
        %806 = vrot.lane.b32.xlu0 %v787, 16
        %v807 = vpop.permute.xlu0 %806
        %vm818 = vcmask 261248
        %819 = vst.msk [vmem:[#allocation2] sm:$0xff] %vm818, %v789
        %820 = vst.msk [vmem:[#allocation2 + $0x10] sm:$0xff] %vm818, %v791
        %821 = vst.msk [vmem:[#allocation2 + $0x20] sm:$0xff] %vm818, %v793
        %822 = vst.msk [vmem:[#allocation2 + $0x30] sm:$0xff] %vm818, %v795
        %823 = vst.msk [vmem:[#allocation2 + $0x40] sm:$0xff] %vm818, %v797
        %824 = vst.msk [vmem:[#allocation2 + $0x50] sm:$0xff] %vm818, %v799
        %825 = vst.msk [vmem:[#allocation2 + $0x60] sm:$0xff] %vm818, %v801
        %826 = vst.msk [vmem:[#allocation2 + $0x70] sm:$0xff] %vm818, %v803
        %827 = vst.msk [vmem:[#allocation2 + $0x80] sm:$0xff] %vm818, %v805
        %828 = vst.msk [vmem:[#allocation2 + $0x90] sm:$0xff] %vm818, %v807
        %v829 = vld [vmem:[%s453] sm:$0xe]
        %v830 = vld [vmem:[%s453 + $0x4] sm:$0xf]
        %v831 = vld [vmem:[%s453 + $0x8] sm:$0x1]
        %v832 = vld [vmem:[%s453 + $0xc] sm:$0xe]
        %v833 = vld [vmem:[%s453 + $0x10] sm:$0xf]
        %v834 = vld [vmem:[%s453 + $0x14] sm:$0x1]
        %v835 = vld [vmem:[%s453 + $0x18] sm:$0xe]
        %v836 = vld [vmem:[%s453 + $0x1c] sm:$0xf]
        %v837 = vld [vmem:[%s453 + $0x20] sm:$0x1]
        %v838 = vld [vmem:[%s453 + $0x24] sm:$0xe]
        %v839 = vld [vmem:[%s453 + $0x28] sm:$0xf]
        %v840 = vld [vmem:[%s453 + $0x2c] sm:$0x1]
        %v841 = vld [vmem:[%s453 + $0x30] sm:$0xe]
        %v842 = vld [vmem:[%s453 + $0x34] sm:$0xf]
        %v843 = vld [vmem:[%s453 + $0x38] sm:$0x1]
        %v844 = vld [vmem:[%s453 + $0x3c] sm:$0xe]
        %v845 = vld [vmem:[%s453 + $0x40] sm:$0xf]
        %v846 = vld [vmem:[%s453 + $0x44] sm:$0x1]
        %v847 = vld [vmem:[%s453 + $0x48] sm:$0xe]
        %v848 = vld [vmem:[%s453 + $0x4c] sm:$0xf]
        %v849 = vld [vmem:[%s453 + $0x50] sm:$0x1]
        %v850 = vld [vmem:[%s453 + $0x54] sm:$0xe]
        %v851 = vld [vmem:[%s453 + $0x58] sm:$0xf]
        %v852 = vld [vmem:[%s453 + $0x5c] sm:$0x1]
        %v853 = vld [vmem:[%s453 + $0x60] sm:$0xe]
        %v854 = vld [vmem:[%s453 + $0x64] sm:$0xf]
        %v855 = vld [vmem:[%s453 + $0x68] sm:$0x1]
        %v856 = vld [vmem:[%s453 + $0x6c] sm:$0xe]
        %v857 = vld [vmem:[%s453 + $0x70] sm:$0xf]
        %v858 = vld [vmem:[%s453 + $0x74] sm:$0x1]
        %v889 = vunpack.c.l.b16 %v829
        %v890 = vunpack.c.l.b16 %v830
        %v891 = vunpack.c.l.b16 %v831
        %v892 = vunpack.c.l.b16 %v832
        %v893 = vunpack.c.l.b16 %v833
        %v894 = vunpack.c.l.b16 %v834
        %v895 = vunpack.c.l.b16 %v835
        %v896 = vunpack.c.l.b16 %v836
        %v897 = vunpack.c.l.b16 %v837
        %v898 = vunpack.c.l.b16 %v838
        %v899 = vunpack.c.l.b16 %v839
        %v900 = vunpack.c.l.b16 %v840
        %v901 = vunpack.c.l.b16 %v841
        %v902 = vunpack.c.l.b16 %v842
        %v903 = vunpack.c.l.b16 %v843
        %v904 = vunpack.c.l.b16 %v844
        %v905 = vunpack.c.l.b16 %v845
        %v906 = vunpack.c.l.b16 %v846
        %v907 = vunpack.c.l.b16 %v847
        %v908 = vunpack.c.l.b16 %v848
        %v909 = vunpack.c.l.b16 %v849
        %v910 = vunpack.c.l.b16 %v850
        %v911 = vunpack.c.l.b16 %v851
        %v912 = vunpack.c.l.b16 %v852
        %v913 = vunpack.c.l.b16 %v853
        %v914 = vunpack.c.l.b16 %v854
        %v915 = vunpack.c.l.b16 %v855
        %v916 = vunpack.c.l.b16 %v856
        %v917 = vunpack.c.l.b16 %v857
        %v918 = vunpack.c.l.b16 %v858
        %v919 = vpack.c.b16 %v890, %v889
        %v920 = vpack.c.b16 %v891, %v891
        %v921 = vpack.c.b16 %v893, %v892
        %v922 = vpack.c.b16 %v894, %v894
        %v923 = vpack.c.b16 %v896, %v895
        %v924 = vpack.c.b16 %v897, %v897
        %v925 = vpack.c.b16 %v899, %v898
        %v926 = vpack.c.b16 %v900, %v900
        %v927 = vpack.c.b16 %v902, %v901
        %v928 = vpack.c.b16 %v903, %v903
        %v929 = vpack.c.b16 %v905, %v904
        %v930 = vpack.c.b16 %v906, %v906
        %v931 = vpack.c.b16 %v908, %v907
        %v932 = vpack.c.b16 %v909, %v909
        %v933 = vpack.c.b16 %v911, %v910
        %v934 = vpack.c.b16 %v912, %v912
        %v935 = vpack.c.b16 %v914, %v913
        %v936 = vpack.c.b16 %v915, %v915
        %v937 = vpack.c.b16 %v917, %v916
        %v938 = vpack.c.b16 %v918, %v918
        %vm939 = vcmask 1046528
        %v940 = vrot.slane %v919, 1
        %v941 = vrot.slane %v920, 1
        %v942 = vsel %vm939, %v940, %v941
        %v943 = vrot.slane %v921, 1
        %v944 = vrot.slane %v922, 1
        %v945 = vsel %vm939, %v943, %v944
        %v946 = vrot.slane %v923, 1
        %v947 = vrot.slane %v924, 1
        %v948 = vsel %vm939, %v946, %v947
        %v949 = vrot.slane %v925, 1
        %v950 = vrot.slane %v926, 1
        %v951 = vsel %vm939, %v949, %v950
        %v952 = vrot.slane %v927, 1
        %v953 = vrot.slane %v928, 1
        %v954 = vsel %vm939, %v952, %v953
        %v955 = vrot.slane %v929, 1
        %v956 = vrot.slane %v930, 1
        %v957 = vsel %vm939, %v955, %v956
        %v958 = vrot.slane %v931, 1
        %v959 = vrot.slane %v932, 1
        %v960 = vsel %vm939, %v958, %v959
        %v961 = vrot.slane %v933, 1
        %v962 = vrot.slane %v934, 1
        %v963 = vsel %vm939, %v961, %v962
        %v964 = vrot.slane %v935, 1
        %v965 = vrot.slane %v936, 1
        %v966 = vsel %vm939, %v964, %v965
        %v967 = vrot.slane %v937, 1
        %v968 = vrot.slane %v938, 1
        %v969 = vsel %vm939, %v967, %v968
        %970 = vrot.lane.b32.xlu0 %v942, 32
        %v971 = vpop.permute.xlu0 %970
        %972 = vrot.lane.b32.xlu0 %v945, 32
        %v973 = vpop.permute.xlu0 %972
        %974 = vrot.lane.b32.xlu0 %v948, 32
        %v975 = vpop.permute.xlu0 %974
        %976 = vrot.lane.b32.xlu0 %v951, 32
        %v977 = vpop.permute.xlu0 %976
        %978 = vrot.lane.b32.xlu0 %v954, 32
        %v979 = vpop.permute.xlu0 %978
        %980 = vrot.lane.b32.xlu0 %v957, 32
        %v981 = vpop.permute.xlu0 %980
        %982 = vrot.lane.b32.xlu0 %v960, 32
        %v983 = vpop.permute.xlu0 %982
        %984 = vrot.lane.b32.xlu0 %v963, 32
        %v985 = vpop.permute.xlu0 %984
        %986 = vrot.lane.b32.xlu0 %v966, 32
        %v987 = vpop.permute.xlu0 %986
        %988 = vrot.lane.b32.xlu0 %v969, 32
        %v989 = vpop.permute.xlu0 %988
        %vm1000 = vcmask 392448
        %1001 = vst.msk [vmem:[#allocation2] sm:$0xff] %vm1000, %v971
        %1002 = vst.msk [vmem:[#allocation2 + $0x10] sm:$0xff] %vm1000, %v973
        %1003 = vst.msk [vmem:[#allocation2 + $0x20] sm:$0xff] %vm1000, %v975
        %1004 = vst.msk [vmem:[#allocation2 + $0x30] sm:$0xff] %vm1000, %v977
        %1005 = vst.msk [vmem:[#allocation2 + $0x40] sm:$0xff] %vm1000, %v979
        %1006 = vst.msk [vmem:[#allocation2 + $0x50] sm:$0xff] %vm1000, %v981
        %1007 = vst.msk [vmem:[#allocation2 + $0x60] sm:$0xff] %vm1000, %v983
        %1008 = vst.msk [vmem:[#allocation2 + $0x70] sm:$0xff] %vm1000, %v985
        %1009 = vst.msk [vmem:[#allocation2 + $0x80] sm:$0xff] %vm1000, %v987
        %1010 = vst.msk [vmem:[#allocation2 + $0x90] sm:$0xff] %vm1000, %v989
        %s1011 = scalar_lea.vmem %s453, 12
        %v1012 = vld [vmem:[%s1011] sm:$0xf]
        %v1013 = vld [vmem:[%s1011 + $0x4] sm:$0xf]
        %v1014 = vld [vmem:[%s1011 + $0xc] sm:$0xf]
        %v1015 = vld [vmem:[%s1011 + $0x10] sm:$0xf]
        %v1016 = vld [vmem:[%s1011 + $0x18] sm:$0xf]
        %v1017 = vld [vmem:[%s1011 + $0x1c] sm:$0xf]
        %v1018 = vld [vmem:[%s1011 + $0x24] sm:$0xf]
        %v1019 = vld [vmem:[%s1011 + $0x28] sm:$0xf]
        %v1020 = vld [vmem:[%s1011 + $0x30] sm:$0xf]
        %v1021 = vld [vmem:[%s1011 + $0x34] sm:$0xf]
        %v1022 = vld [vmem:[%s1011 + $0x3c] sm:$0xf]
        %v1023 = vld [vmem:[%s1011 + $0x40] sm:$0xf]
        %v1024 = vld [vmem:[%s1011 + $0x48] sm:$0xf]
        %v1025 = vld [vmem:[%s1011 + $0x4c] sm:$0xf]
        %v1026 = vld [vmem:[%s1011 + $0x54] sm:$0xf]
        %v1027 = vld [vmem:[%s1011 + $0x58] sm:$0xf]
        %v1028 = vld [vmem:[%s1011 + $0x60] sm:$0xf]
        %v1029 = vld [vmem:[%s1011 + $0x64] sm:$0xf]
        %v1030 = vld [vmem:[%s1011 + $0x6c] sm:$0xf]
        %v1031 = vld [vmem:[%s1011 + $0x70] sm:$0xf]
        %v1052 = vunpack.c.l.b16 %v1012
        %v1053 = vunpack.c.l.b16 %v1013
        %v1054 = vunpack.c.l.b16 %v1014
        %v1055 = vunpack.c.l.b16 %v1015
        %v1056 = vunpack.c.l.b16 %v1016
        %v1057 = vunpack.c.l.b16 %v1017
        %v1058 = vunpack.c.l.b16 %v1018
        %v1059 = vunpack.c.l.b16 %v1019
        %v1060 = vunpack.c.l.b16 %v1020
        %v1061 = vunpack.c.l.b16 %v1021
        %v1062 = vunpack.c.l.b16 %v1022
        %v1063 = vunpack.c.l.b16 %v1023
        %v1064 = vunpack.c.l.b16 %v1024
        %v1065 = vunpack.c.l.b16 %v1025
        %v1066 = vunpack.c.l.b16 %v1026
        %v1067 = vunpack.c.l.b16 %v1027
        %v1068 = vunpack.c.l.b16 %v1028
        %v1069 = vunpack.c.l.b16 %v1029
        %v1070 = vunpack.c.l.b16 %v1030
        %v1071 = vunpack.c.l.b16 %v1031
        %v1072 = vpack.c.b16 %v1053, %v1052
        %v1073 = vpack.c.b16 %v1055, %v1054
        %v1074 = vpack.c.b16 %v1057, %v1056
        %v1075 = vpack.c.b16 %v1059, %v1058
        %v1076 = vpack.c.b16 %v1061, %v1060
        %v1077 = vpack.c.b16 %v1063, %v1062
        %v1078 = vpack.c.b16 %v1065, %v1064
        %v1079 = vpack.c.b16 %v1067, %v1066
        %v1080 = vpack.c.b16 %v1069, %v1068
        %v1081 = vpack.c.b16 %v1071, %v1070
        %1082 = vrot.lane.b32.xlu0 %v1072, 48
        %v1083 = vpop.permute.xlu0 %1082
        %1084 = vrot.lane.b32.xlu0 %v1073, 48
        %v1085 = vpop.permute.xlu0 %1084
        %1086 = vrot.lane.b32.xlu0 %v1074, 48
        %v1087 = vpop.permute.xlu0 %1086
        %1088 = vrot.lane.b32.xlu0 %v1075, 48
        %v1089 = vpop.permute.xlu0 %1088
        %1090 = vrot.lane.b32.xlu0 %v1076, 48
        %v1091 = vpop.permute.xlu0 %1090
        %1092 = vrot.lane.b32.xlu0 %v1077, 48
        %v1093 = vpop.permute.xlu0 %1092
        %1094 = vrot.lane.b32.xlu0 %v1078, 48
        %v1095 = vpop.permute.xlu0 %1094
        %1096 = vrot.lane.b32.xlu0 %v1079, 48
        %v1097 = vpop.permute.xlu0 %1096
        %1098 = vrot.lane.b32.xlu0 %v1080, 48
        %v1099 = vpop.permute.xlu0 %1098
        %1100 = vrot.lane.b32.xlu0 %v1081, 48
        %v1101 = vpop.permute.xlu0 %1100
        %vm1112 = vcmask 523648
        %1113 = vst.msk [vmem:[#allocation2] sm:$0xff] %vm1112, %v1083
        %1114 = vst.msk [vmem:[#allocation2 + $0x10] sm:$0xff] %vm1112, %v1085
        %1115 = vst.msk [vmem:[#allocation2 + $0x20] sm:$0xff] %vm1112, %v1087
        %1116 = vst.msk [vmem:[#allocation2 + $0x30] sm:$0xff] %vm1112, %v1089
        %1117 = vst.msk [vmem:[#allocation2 + $0x40] sm:$0xff] %vm1112, %v1091
        %1118 = vst.msk [vmem:[#allocation2 + $0x50] sm:$0xff] %vm1112, %v1093
        %1119 = vst.msk [vmem:[#allocation2 + $0x60] sm:$0xff] %vm1112, %v1095
        %1120 = vst.msk [vmem:[#allocation2 + $0x70] sm:$0xff] %vm1112, %v1097
        %1121 = vst.msk [vmem:[#allocation2 + $0x80] sm:$0xff] %vm1112, %v1099
        %1122 = vst.msk [vmem:[#allocation2 + $0x90] sm:$0xff] %vm1112, %v1101
        %v1123 = vld [vmem:[%s1011] sm:$0xf]
        %v1124 = vld [vmem:[%s1011 + $0x4] sm:$0xf]
        %v1125 = vld [vmem:[%s1011 + $0x8] sm:$0x1]
        %v1126 = vld [vmem:[%s1011 + $0xc] sm:$0xf]
        %v1127 = vld [vmem:[%s1011 + $0x10] sm:$0xf]
        %v1128 = vld [vmem:[%s1011 + $0x14] sm:$0x1]
        %v1129 = vld [vmem:[%s1011 + $0x18] sm:$0xf]
        %v1130 = vld [vmem:[%s1011 + $0x1c] sm:$0xf]
        %v1131 = vld [vmem:[%s1011 + $0x20] sm:$0x1]
        %v1132 = vld [vmem:[%s1011 + $0x24] sm:$0xf]
        %v1133 = vld [vmem:[%s1011 + $0x28] sm:$0xf]
        %v1134 = vld [vmem:[%s1011 + $0x2c] sm:$0x1]
        %v1135 = vld [vmem:[%s1011 + $0x30] sm:$0xf]
        %v1136 = vld [vmem:[%s1011 + $0x34] sm:$0xf]
        %v1137 = vld [vmem:[%s1011 + $0x38] sm:$0x1]
        %v1138 = vld [vmem:[%s1011 + $0x3c] sm:$0xf]
        %v1139 = vld [vmem:[%s1011 + $0x40] sm:$0xf]
        %v1140 = vld [vmem:[%s1011 + $0x44] sm:$0x1]
        %v1141 = vld [vmem:[%s1011 + $0x48] sm:$0xf]
        %v1142 = vld [vmem:[%s1011 + $0x4c] sm:$0xf]
        %v1143 = vld [vmem:[%s1011 + $0x50] sm:$0x1]
        %v1144 = vld [vmem:[%s1011 + $0x54] sm:$0xf]
        %v1145 = vld [vmem:[%s1011 + $0x58] sm:$0xf]
        %v1146 = vld [vmem:[%s1011 + $0x5c] sm:$0x1]
        %v1147 = vld [vmem:[%s1011 + $0x60] sm:$0xf]
        %v1148 = vld [vmem:[%s1011 + $0x64] sm:$0xf]
        %v1149 = vld [vmem:[%s1011 + $0x68] sm:$0x1]
        %v1150 = vld [vmem:[%s1011 + $0x6c] sm:$0xf]
        %v1151 = vld [vmem:[%s1011 + $0x70] sm:$0xf]
        %v1152 = vld [vmem:[%s1011 + $0x74] sm:$0x1]
        %v1183 = vunpack.c.l.b16 %v1123
        %v1184 = vunpack.c.l.b16 %v1124
        %v1185 = vunpack.c.l.b16 %v1125
        %v1186 = vunpack.c.l.b16 %v1126
        %v1187 = vunpack.c.l.b16 %v1127
        %v1188 = vunpack.c.l.b16 %v1128
        %v1189 = vunpack.c.l.b16 %v1129
        %v1190 = vunpack.c.l.b16 %v1130
        %v1191 = vunpack.c.l.b16 %v1131
        %v1192 = vunpack.c.l.b16 %v1132
        %v1193 = vunpack.c.l.b16 %v1133
        %v1194 = vunpack.c.l.b16 %v1134
        %v1195 = vunpack.c.l.b16 %v1135
        %v1196 = vunpack.c.l.b16 %v1136
        %v1197 = vunpack.c.l.b16 %v1137
        %v1198 = vunpack.c.l.b16 %v1138
        %v1199 = vunpack.c.l.b16 %v1139
        %v1200 = vunpack.c.l.b16 %v1140
        %v1201 = vunpack.c.l.b16 %v1141
        %v1202 = vunpack.c.l.b16 %v1142
        %v1203 = vunpack.c.l.b16 %v1143
        %v1204 = vunpack.c.l.b16 %v1144
        %v1205 = vunpack.c.l.b16 %v1145
        %v1206 = vunpack.c.l.b16 %v1146
        %v1207 = vunpack.c.l.b16 %v1147
        %v1208 = vunpack.c.l.b16 %v1148
        %v1209 = vunpack.c.l.b16 %v1149
        %v1210 = vunpack.c.l.b16 %v1150
        %v1211 = vunpack.c.l.b16 %v1151
        %v1212 = vunpack.c.l.b16 %v1152
        %v1213 = vpack.c.b16 %v1184, %v1183
        %v1214 = vpack.c.b16 %v1185, %v1185
        %v1215 = vpack.c.b16 %v1187, %v1186
        %v1216 = vpack.c.b16 %v1188, %v1188
        %v1217 = vpack.c.b16 %v1190, %v1189
        %v1218 = vpack.c.b16 %v1191, %v1191
        %v1219 = vpack.c.b16 %v1193, %v1192
        %v1220 = vpack.c.b16 %v1194, %v1194
        %v1221 = vpack.c.b16 %v1196, %v1195
        %v1222 = vpack.c.b16 %v1197, %v1197
        %v1223 = vpack.c.b16 %v1199, %v1198
        %v1224 = vpack.c.b16 %v1200, %v1200
        %v1225 = vpack.c.b16 %v1202, %v1201
        %v1226 = vpack.c.b16 %v1203, %v1203
        %v1227 = vpack.c.b16 %v1205, %v1204
        %v1228 = vpack.c.b16 %v1206, %v1206
        %v1229 = vpack.c.b16 %v1208, %v1207
        %v1230 = vpack.c.b16 %v1209, %v1209
        %v1231 = vpack.c.b16 %v1211, %v1210
        %v1232 = vpack.c.b16 %v1212, %v1212
        %v1234 = vshrl.u32 %v1213, 16
        %v1236 = vshll.u32 %v1213, 16
        %v1238 = vrot.slane %v1236, 1
        %v1239 = vor.u32 %v1234, %v1238
        %v1241 = vshll.u32 %v1214, 16
        %v1243 = vrot.slane %v1241, 1
        %v1244 = vsel %vm667, %v1239, %v1243
        %v1246 = vshrl.u32 %v1215, 16
        %v1248 = vshll.u32 %v1215, 16
        %v1250 = vrot.slane %v1248, 1
        %v1251 = vor.u32 %v1246, %v1250
        %v1253 = vshll.u32 %v1216, 16
        %v1255 = vrot.slane %v1253, 1
        %v1256 = vsel %vm667, %v1251, %v1255
        %v1258 = vshrl.u32 %v1217, 16
        %v1260 = vshll.u32 %v1217, 16
        %v1262 = vrot.slane %v1260, 1
        %v1263 = vor.u32 %v1258, %v1262
        %v1265 = vshll.u32 %v1218, 16
        %v1267 = vrot.slane %v1265, 1
        %v1268 = vsel %vm667, %v1263, %v1267
        %v1270 = vshrl.u32 %v1219, 16
        %v1272 = vshll.u32 %v1219, 16
        %v1274 = vrot.slane %v1272, 1
        %v1275 = vor.u32 %v1270, %v1274
        %v1277 = vshll.u32 %v1220, 16
        %v1279 = vrot.slane %v1277, 1
        %v1280 = vsel %vm667, %v1275, %v1279
        %v1282 = vshrl.u32 %v1221, 16
        %v1284 = vshll.u32 %v1221, 16
        %v1286 = vrot.slane %v1284, 1
        %v1287 = vor.u32 %v1282, %v1286
        %v1289 = vshll.u32 %v1222, 16
        %v1291 = vrot.slane %v1289, 1
        %v1292 = vsel %vm667, %v1287, %v1291
        %v1294 = vshrl.u32 %v1223, 16
        %v1296 = vshll.u32 %v1223, 16
        %v1298 = vrot.slane %v1296, 1
        %v1299 = vor.u32 %v1294, %v1298
        %v1301 = vshll.u32 %v1224, 16
        %v1303 = vrot.slane %v1301, 1
        %v1304 = vsel %vm667, %v1299, %v1303
        %v1306 = vshrl.u32 %v1225, 16
        %v1308 = vshll.u32 %v1225, 16
        %v1310 = vrot.slane %v1308, 1
        %v1311 = vor.u32 %v1306, %v1310
        %v1313 = vshll.u32 %v1226, 16
        %v1315 = vrot.slane %v1313, 1
        %v1316 = vsel %vm667, %v1311, %v1315
        %v1318 = vshrl.u32 %v1227, 16
        %v1320 = vshll.u32 %v1227, 16
        %v1322 = vrot.slane %v1320, 1
        %v1323 = vor.u32 %v1318, %v1322
        %v1325 = vshll.u32 %v1228, 16
        %v1327 = vrot.slane %v1325, 1
        %v1328 = vsel %vm667, %v1323, %v1327
        %v1330 = vshrl.u32 %v1229, 16
        %v1332 = vshll.u32 %v1229, 16
        %v1334 = vrot.slane %v1332, 1
        %v1335 = vor.u32 %v1330, %v1334
        %v1337 = vshll.u32 %v1230, 16
        %v1339 = vrot.slane %v1337, 1
        %v1340 = vsel %vm667, %v1335, %v1339
        %v1342 = vshrl.u32 %v1231, 16
        %v1344 = vshll.u32 %v1231, 16
        %v1346 = vrot.slane %v1344, 1
        %v1347 = vor.u32 %v1342, %v1346
        %v1349 = vshll.u32 %v1232, 16
        %v1351 = vrot.slane %v1349, 1
        %v1352 = vsel %vm667, %v1347, %v1351
        %1353 = vrot.lane.b32.xlu0 %v1244, 64
        %v1354 = vpop.permute.xlu0 %1353
        %1355 = vrot.lane.b32.xlu0 %v1256, 64
        %v1356 = vpop.permute.xlu0 %1355
        %1357 = vrot.lane.b32.xlu0 %v1268, 64
        %v1358 = vpop.permute.xlu0 %1357
        %1359 = vrot.lane.b32.xlu0 %v1280, 64
        %v1360 = vpop.permute.xlu0 %1359
        %1361 = vrot.lane.b32.xlu0 %v1292, 64
        %v1362 = vpop.permute.xlu0 %1361
        %1363 = vrot.lane.b32.xlu0 %v1304, 64
        %v1364 = vpop.permute.xlu0 %1363
        %1365 = vrot.lane.b32.xlu0 %v1316, 64
        %v1366 = vpop.permute.xlu0 %1365
        %1367 = vrot.lane.b32.xlu0 %v1328, 64
        %v1368 = vpop.permute.xlu0 %1367
        %1369 = vrot.lane.b32.xlu0 %v1340, 64
        %v1370 = vpop.permute.xlu0 %1369
        %1371 = vrot.lane.b32.xlu0 %v1352, 64
        %v1372 = vpop.permute.xlu0 %1371
        %vm1383 = vcmask 654848
        %1384 = vst.msk [vmem:[#allocation2] sm:$0xff] %vm1383, %v1354
        %1385 = vst.msk [vmem:[#allocation2 + $0x10] sm:$0xff] %vm1383, %v1356
        %1386 = vst.msk [vmem:[#allocation2 + $0x20] sm:$0xff] %vm1383, %v1358
        %1387 = vst.msk [vmem:[#allocation2 + $0x30] sm:$0xff] %vm1383, %v1360
        %1388 = vst.msk [vmem:[#allocation2 + $0x40] sm:$0xff] %vm1383, %v1362
        %1389 = vst.msk [vmem:[#allocation2 + $0x50] sm:$0xff] %vm1383, %v1364
        %1390 = vst.msk [vmem:[#allocation2 + $0x60] sm:$0xff] %vm1383, %v1366
        %1391 = vst.msk [vmem:[#allocation2 + $0x70] sm:$0xff] %vm1383, %v1368
        %1392 = vst.msk [vmem:[#allocation2 + $0x80] sm:$0xff] %vm1383, %v1370
        %1393 = vst.msk [vmem:[#allocation2 + $0x90] sm:$0xff] %vm1383, %v1372
        %v1394 = vld [vmem:[%s1011] sm:$0xe]
        %v1395 = vld [vmem:[%s1011 + $0x4] sm:$0xf]
        %v1396 = vld [vmem:[%s1011 + $0x8] sm:$0x1]
        %v1397 = vld [vmem:[%s1011 + $0xc] sm:$0xe]
        %v1398 = vld [vmem:[%s1011 + $0x10] sm:$0xf]
        %v1399 = vld [vmem:[%s1011 + $0x14] sm:$0x1]
        %v1400 = vld [vmem:[%s1011 + $0x18] sm:$0xe]
        %v1401 = vld [vmem:[%s1011 + $0x1c] sm:$0xf]
        %v1402 = vld [vmem:[%s1011 + $0x20] sm:$0x1]
        %v1403 = vld [vmem:[%s1011 + $0x24] sm:$0xe]
        %v1404 = vld [vmem:[%s1011 + $0x28] sm:$0xf]
        %v1405 = vld [vmem:[%s1011 + $0x2c] sm:$0x1]
        %v1406 = vld [vmem:[%s1011 + $0x30] sm:$0xe]
        %v1407 = vld [vmem:[%s1011 + $0x34] sm:$0xf]
        %v1408 = vld [vmem:[%s1011 + $0x38] sm:$0x1]
        %v1409 = vld [vmem:[%s1011 + $0x3c] sm:$0xe]
        %v1410 = vld [vmem:[%s1011 + $0x40] sm:$0xf]
        %v1411 = vld [vmem:[%s1011 + $0x44] sm:$0x1]
        %v1412 = vld [vmem:[%s1011 + $0x48] sm:$0xe]
        %v1413 = vld [vmem:[%s1011 + $0x4c] sm:$0xf]
        %v1414 = vld [vmem:[%s1011 + $0x50] sm:$0x1]
        %v1415 = vld [vmem:[%s1011 + $0x54] sm:$0xe]
        %v1416 = vld [vmem:[%s1011 + $0x58] sm:$0xf]
        %v1417 = vld [vmem:[%s1011 + $0x5c] sm:$0x1]
        %v1418 = vld [vmem:[%s1011 + $0x60] sm:$0xe]
        %v1419 = vld [vmem:[%s1011 + $0x64] sm:$0xf]
        %v1420 = vld [vmem:[%s1011 + $0x68] sm:$0x1]
        %v1421 = vld [vmem:[%s1011 + $0x6c] sm:$0xe]
        %v1422 = vld [vmem:[%s1011 + $0x70] sm:$0xf]
        %v1423 = vld [vmem:[%s1011 + $0x74] sm:$0x1]
        %v1454 = vunpack.c.l.b16 %v1394
        %v1455 = vunpack.c.l.b16 %v1395
        %v1456 = vunpack.c.l.b16 %v1396
        %v1457 = vunpack.c.l.b16 %v1397
        %v1458 = vunpack.c.l.b16 %v1398
        %v1459 = vunpack.c.l.b16 %v1399
        %v1460 = vunpack.c.l.b16 %v1400
        %v1461 = vunpack.c.l.b16 %v1401
        %v1462 = vunpack.c.l.b16 %v1402
        %v1463 = vunpack.c.l.b16 %v1403
        %v1464 = vunpack.c.l.b16 %v1404
        %v1465 = vunpack.c.l.b16 %v1405
        %v1466 = vunpack.c.l.b16 %v1406
        %v1467 = vunpack.c.l.b16 %v1407
        %v1468 = vunpack.c.l.b16 %v1408
        %v1469 = vunpack.c.l.b16 %v1409
        %v1470 = vunpack.c.l.b16 %v1410
        %v1471 = vunpack.c.l.b16 %v1411
        %v1472 = vunpack.c.l.b16 %v1412
        %v1473 = vunpack.c.l.b16 %v1413
        %v1474 = vunpack.c.l.b16 %v1414
        %v1475 = vunpack.c.l.b16 %v1415
        %v1476 = vunpack.c.l.b16 %v1416
        %v1477 = vunpack.c.l.b16 %v1417
        %v1478 = vunpack.c.l.b16 %v1418
        %v1479 = vunpack.c.l.b16 %v1419
        %v1480 = vunpack.c.l.b16 %v1420
        %v1481 = vunpack.c.l.b16 %v1421
        %v1482 = vunpack.c.l.b16 %v1422
        %v1483 = vunpack.c.l.b16 %v1423
        %v1484 = vpack.c.b16 %v1455, %v1454
        %v1485 = vpack.c.b16 %v1456, %v1456
        %v1486 = vpack.c.b16 %v1458, %v1457
        %v1487 = vpack.c.b16 %v1459, %v1459
        %v1488 = vpack.c.b16 %v1461, %v1460
        %v1489 = vpack.c.b16 %v1462, %v1462
        %v1490 = vpack.c.b16 %v1464, %v1463
        %v1491 = vpack.c.b16 %v1465, %v1465
        %v1492 = vpack.c.b16 %v1467, %v1466
        %v1493 = vpack.c.b16 %v1468, %v1468
        %v1494 = vpack.c.b16 %v1470, %v1469
        %v1495 = vpack.c.b16 %v1471, %v1471
        %v1496 = vpack.c.b16 %v1473, %v1472
        %v1497 = vpack.c.b16 %v1474, %v1474
        %v1498 = vpack.c.b16 %v1476, %v1475
        %v1499 = vpack.c.b16 %v1477, %v1477
        %v1500 = vpack.c.b16 %v1479, %v1478
        %v1501 = vpack.c.b16 %v1480, %v1480
        %v1502 = vpack.c.b16 %v1482, %v1481
        %v1503 = vpack.c.b16 %v1483, %v1483
        %v1504 = vrot.slane %v1484, 1
        %v1505 = vrot.slane %v1485, 1
        %v1506 = vsel %vm939, %v1504, %v1505
        %v1507 = vrot.slane %v1486, 1
        %v1508 = vrot.slane %v1487, 1
        %v1509 = vsel %vm939, %v1507, %v1508
        %v1510 = vrot.slane %v1488, 1
        %v1511 = vrot.slane %v1489, 1
        %v1512 = vsel %vm939, %v1510, %v1511
        %v1513 = vrot.slane %v1490, 1
        %v1514 = vrot.slane %v1491, 1
        %v1515 = vsel %vm939, %v1513, %v1514
        %v1516 = vrot.slane %v1492, 1
        %v1517 = vrot.slane %v1493, 1
        %v1518 = vsel %vm939, %v1516, %v1517
        %v1519 = vrot.slane %v1494, 1
        %v1520 = vrot.slane %v1495, 1
        %v1521 = vsel %vm939, %v1519, %v1520
        %v1522 = vrot.slane %v1496, 1
        %v1523 = vrot.slane %v1497, 1
        %v1524 = vsel %vm939, %v1522, %v1523
        %v1525 = vrot.slane %v1498, 1
        %v1526 = vrot.slane %v1499, 1
        %v1527 = vsel %vm939, %v1525, %v1526
        %v1528 = vrot.slane %v1500, 1
        %v1529 = vrot.slane %v1501, 1
        %v1530 = vsel %vm939, %v1528, %v1529
        %v1531 = vrot.slane %v1502, 1
        %v1532 = vrot.slane %v1503, 1
        %v1533 = vsel %vm939, %v1531, %v1532
        %1534 = vrot.lane.b32.xlu0 %v1506, 80
        %v1535 = vpop.permute.xlu0 %1534
        %1536 = vrot.lane.b32.xlu0 %v1509, 80
        %v1537 = vpop.permute.xlu0 %1536
        %1538 = vrot.lane.b32.xlu0 %v1512, 80
        %v1539 = vpop.permute.xlu0 %1538
        %1540 = vrot.lane.b32.xlu0 %v1515, 80
        %v1541 = vpop.permute.xlu0 %1540
        %1542 = vrot.lane.b32.xlu0 %v1518, 80
        %v1543 = vpop.permute.xlu0 %1542
        %1544 = vrot.lane.b32.xlu0 %v1521, 80
        %v1545 = vpop.permute.xlu0 %1544
        %1546 = vrot.lane.b32.xlu0 %v1524, 80
        %v1547 = vpop.permute.xlu0 %1546
        %1548 = vrot.lane.b32.xlu0 %v1527, 80
        %v1549 = vpop.permute.xlu0 %1548
        %1550 = vrot.lane.b32.xlu0 %v1530, 80
        %v1551 = vpop.permute.xlu0 %1550
        %1552 = vrot.lane.b32.xlu0 %v1533, 80
        %v1553 = vpop.permute.xlu0 %1552
        %vm1564 = vcmask 786048
        %1565 = vst.msk [vmem:[#allocation2] sm:$0xff] %vm1564, %v1535
        %1566 = vst.msk [vmem:[#allocation2 + $0x10] sm:$0xff] %vm1564, %v1537
        %1567 = vst.msk [vmem:[#allocation2 + $0x20] sm:$0xff] %vm1564, %v1539
        %1568 = vst.msk [vmem:[#allocation2 + $0x30] sm:$0xff] %vm1564, %v1541
        %1569 = vst.msk [vmem:[#allocation2 + $0x40] sm:$0xff] %vm1564, %v1543
        %1570 = vst.msk [vmem:[#allocation2 + $0x50] sm:$0xff] %vm1564, %v1545
        %1571 = vst.msk [vmem:[#allocation2 + $0x60] sm:$0xff] %vm1564, %v1547
        %1572 = vst.msk [vmem:[#allocation2 + $0x70] sm:$0xff] %vm1564, %v1549
        %1573 = vst.msk [vmem:[#allocation2 + $0x80] sm:$0xff] %vm1564, %v1551
        %1574 = vst.msk [vmem:[#allocation2 + $0x90] sm:$0xff] %vm1564, %v1553
        %s1575 = scalar_lea.vmem %s453, 24
        %v1576 = vld [vmem:[%s1575] sm:$0xf]
        %v1577 = vld [vmem:[%s1575 + $0x4] sm:$0xf]
        %v1578 = vld [vmem:[%s1575 + $0xc] sm:$0xf]
        %v1579 = vld [vmem:[%s1575 + $0x10] sm:$0xf]
        %v1580 = vld [vmem:[%s1575 + $0x18] sm:$0xf]
        %v1581 = vld [vmem:[%s1575 + $0x1c] sm:$0xf]
        %v1582 = vld [vmem:[%s1575 + $0x24] sm:$0xf]
        %v1583 = vld [vmem:[%s1575 + $0x28] sm:$0xf]
        %v1584 = vld [vmem:[%s1575 + $0x30] sm:$0xf]
        %v1585 = vld [vmem:[%s1575 + $0x34] sm:$0xf]
        %v1586 = vld [vmem:[%s1575 + $0x3c] sm:$0xf]
        %v1587 = vld [vmem:[%s1575 + $0x40] sm:$0xf]
        %v1588 = vld [vmem:[%s1575 + $0x48] sm:$0xf]
        %v1589 = vld [vmem:[%s1575 + $0x4c] sm:$0xf]
        %v1590 = vld [vmem:[%s1575 + $0x54] sm:$0xf]
        %v1591 = vld [vmem:[%s1575 + $0x58] sm:$0xf]
        %v1592 = vld [vmem:[%s1575 + $0x60] sm:$0xf]
        %v1593 = vld [vmem:[%s1575 + $0x64] sm:$0xf]
        %v1594 = vld [vmem:[%s1575 + $0x6c] sm:$0xf]
        %v1595 = vld [vmem:[%s1575 + $0x70] sm:$0xf]
        %v1616 = vunpack.c.l.b16 %v1576
        %v1617 = vunpack.c.l.b16 %v1577
        %v1618 = vunpack.c.l.b16 %v1578
        %v1619 = vunpack.c.l.b16 %v1579
        %v1620 = vunpack.c.l.b16 %v1580
        %v1621 = vunpack.c.l.b16 %v1581
        %v1622 = vunpack.c.l.b16 %v1582
        %v1623 = vunpack.c.l.b16 %v1583
        %v1624 = vunpack.c.l.b16 %v1584
        %v1625 = vunpack.c.l.b16 %v1585
        %v1626 = vunpack.c.l.b16 %v1586
        %v1627 = vunpack.c.l.b16 %v1587
        %v1628 = vunpack.c.l.b16 %v1588
        %v1629 = vunpack.c.l.b16 %v1589
        %v1630 = vunpack.c.l.b16 %v1590
        %v1631 = vunpack.c.l.b16 %v1591
        %v1632 = vunpack.c.l.b16 %v1592
        %v1633 = vunpack.c.l.b16 %v1593
        %v1634 = vunpack.c.l.b16 %v1594
        %v1635 = vunpack.c.l.b16 %v1595
        %v1636 = vpack.c.b16 %v1617, %v1616
        %v1637 = vpack.c.b16 %v1619, %v1618
        %v1638 = vpack.c.b16 %v1621, %v1620
        %v1639 = vpack.c.b16 %v1623, %v1622
        %v1640 = vpack.c.b16 %v1625, %v1624
        %v1641 = vpack.c.b16 %v1627, %v1626
        %v1642 = vpack.c.b16 %v1629, %v1628
        %v1643 = vpack.c.b16 %v1631, %v1630
        %v1644 = vpack.c.b16 %v1633, %v1632
        %v1645 = vpack.c.b16 %v1635, %v1634
        %1646 = vrot.lane.b32.xlu0 %v1636, 96
        %v1647 = vpop.permute.xlu0 %1646
        %1648 = vrot.lane.b32.xlu0 %v1637, 96
        %v1649 = vpop.permute.xlu0 %1648
        %1650 = vrot.lane.b32.xlu0 %v1638, 96
        %v1651 = vpop.permute.xlu0 %1650
        %1652 = vrot.lane.b32.xlu0 %v1639, 96
        %v1653 = vpop.permute.xlu0 %1652
        %1654 = vrot.lane.b32.xlu0 %v1640, 96
        %v1655 = vpop.permute.xlu0 %1654
        %1656 = vrot.lane.b32.xlu0 %v1641, 96
        %v1657 = vpop.permute.xlu0 %1656
        %1658 = vrot.lane.b32.xlu0 %v1642, 96
        %v1659 = vpop.permute.xlu0 %1658
        %1660 = vrot.lane.b32.xlu0 %v1643, 96
        %v1661 = vpop.permute.xlu0 %1660
        %1662 = vrot.lane.b32.xlu0 %v1644, 96
        %v1663 = vpop.permute.xlu0 %1662
        %1664 = vrot.lane.b32.xlu0 %v1645, 96
        %v1665 = vpop.permute.xlu0 %1664
        %vm1676 = vcmask 917248
        %1677 = vst.msk [vmem:[#allocation2] sm:$0xff] %vm1676, %v1647
        %1678 = vst.msk [vmem:[#allocation2 + $0x10] sm:$0xff] %vm1676, %v1649
        %1679 = vst.msk [vmem:[#allocation2 + $0x20] sm:$0xff] %vm1676, %v1651
        %1680 = vst.msk [vmem:[#allocation2 + $0x30] sm:$0xff] %vm1676, %v1653
        %1681 = vst.msk [vmem:[#allocation2 + $0x40] sm:$0xff] %vm1676, %v1655
        %1682 = vst.msk [vmem:[#allocation2 + $0x50] sm:$0xff] %vm1676, %v1657
        %1683 = vst.msk [vmem:[#allocation2 + $0x60] sm:$0xff] %vm1676, %v1659
        %1684 = vst.msk [vmem:[#allocation2 + $0x70] sm:$0xff] %vm1676, %v1661
        %1685 = vst.msk [vmem:[#allocation2 + $0x80] sm:$0xff] %vm1676, %v1663
        %1686 = vst.msk [vmem:[#allocation2 + $0x90] sm:$0xff] %vm1676, %v1665
        %v1687 = vld [vmem:[%s1575] sm:$0xf]
        %v1688 = vld [vmem:[%s1575 + $0x4] sm:$0xf]
        %v1689 = vld [vmem:[%s1575 + $0x8] sm:$0x1]
        %v1690 = vld [vmem:[%s1575 + $0xc] sm:$0xf]
        %v1691 = vld [vmem:[%s1575 + $0x10] sm:$0xf]
        %v1692 = vld [vmem:[%s1575 + $0x14] sm:$0x1]
        %v1693 = vld [vmem:[%s1575 + $0x18] sm:$0xf]
        %v1694 = vld [vmem:[%s1575 + $0x1c] sm:$0xf]
        %v1695 = vld [vmem:[%s1575 + $0x20] sm:$0x1]
        %v1696 = vld [vmem:[%s1575 + $0x24] sm:$0xf]
        %v1697 = vld [vmem:[%s1575 + $0x28] sm:$0xf]
        %v1698 = vld [vmem:[%s1575 + $0x2c] sm:$0x1]
        %v1699 = vld [vmem:[%s1575 + $0x30] sm:$0xf]
        %v1700 = vld [vmem:[%s1575 + $0x34] sm:$0xf]
        %v1701 = vld [vmem:[%s1575 + $0x38] sm:$0x1]
        %v1702 = vld [vmem:[%s1575 + $0x3c] sm:$0xf]
        %v1703 = vld [vmem:[%s1575 + $0x40] sm:$0xf]
        %v1704 = vld [vmem:[%s1575 + $0x44] sm:$0x1]
        %v1705 = vld [vmem:[%s1575 + $0x48] sm:$0xf]
        %v1706 = vld [vmem:[%s1575 + $0x4c] sm:$0xf]
        %v1707 = vld [vmem:[%s1575 + $0x50] sm:$0x1]
        %v1708 = vld [vmem:[%s1575 + $0x54] sm:$0xf]
        %v1709 = vld [vmem:[%s1575 + $0x58] sm:$0xf]
        %v1710 = vld [vmem:[%s1575 + $0x5c] sm:$0x1]
        %v1711 = vld [vmem:[%s1575 + $0x60] sm:$0xf]
        %v1712 = vld [vmem:[%s1575 + $0x64] sm:$0xf]
        %v1713 = vld [vmem:[%s1575 + $0x68] sm:$0x1]
        %v1714 = vld [vmem:[%s1575 + $0x6c] sm:$0xf]
        %v1715 = vld [vmem:[%s1575 + $0x70] sm:$0xf]
        %v1716 = vld [vmem:[%s1575 + $0x74] sm:$0x1]
        %v1747 = vunpack.c.l.b16 %v1687
        %v1748 = vunpack.c.l.b16 %v1688
        %v1749 = vunpack.c.l.b16 %v1689
        %v1750 = vunpack.c.l.b16 %v1690
        %v1751 = vunpack.c.l.b16 %v1691
        %v1752 = vunpack.c.l.b16 %v1692
        %v1753 = vunpack.c.l.b16 %v1693
        %v1754 = vunpack.c.l.b16 %v1694
        %v1755 = vunpack.c.l.b16 %v1695
        %v1756 = vunpack.c.l.b16 %v1696
        %v1757 = vunpack.c.l.b16 %v1697
        %v1758 = vunpack.c.l.b16 %v1698
        %v1759 = vunpack.c.l.b16 %v1699
        %v1760 = vunpack.c.l.b16 %v1700
        %v1761 = vunpack.c.l.b16 %v1701
        %v1762 = vunpack.c.l.b16 %v1702
        %v1763 = vunpack.c.l.b16 %v1703
        %v1764 = vunpack.c.l.b16 %v1704
        %v1765 = vunpack.c.l.b16 %v1705
        %v1766 = vunpack.c.l.b16 %v1706
        %v1767 = vunpack.c.l.b16 %v1707
        %v1768 = vunpack.c.l.b16 %v1708
        %v1769 = vunpack.c.l.b16 %v1709
        %v1770 = vunpack.c.l.b16 %v1710
        %v1771 = vunpack.c.l.b16 %v1711
        %v1772 = vunpack.c.l.b16 %v1712
        %v1773 = vunpack.c.l.b16 %v1713
        %v1774 = vunpack.c.l.b16 %v1714
        %v1775 = vunpack.c.l.b16 %v1715
        %v1776 = vunpack.c.l.b16 %v1716
        %v1777 = vpack.c.b16 %v1748, %v1747
        %v1778 = vpack.c.b16 %v1749, %v1749
        %v1779 = vpack.c.b16 %v1751, %v1750
        %v1780 = vpack.c.b16 %v1752, %v1752
        %v1781 = vpack.c.b16 %v1754, %v1753
        %v1782 = vpack.c.b16 %v1755, %v1755
        %v1783 = vpack.c.b16 %v1757, %v1756
        %v1784 = vpack.c.b16 %v1758, %v1758
        %v1785 = vpack.c.b16 %v1760, %v1759
        %v1786 = vpack.c.b16 %v1761, %v1761
        %v1787 = vpack.c.b16 %v1763, %v1762
        %v1788 = vpack.c.b16 %v1764, %v1764
        %v1789 = vpack.c.b16 %v1766, %v1765
        %v1790 = vpack.c.b16 %v1767, %v1767
        %v1791 = vpack.c.b16 %v1769, %v1768
        %v1792 = vpack.c.b16 %v1770, %v1770
        %v1793 = vpack.c.b16 %v1772, %v1771
        %v1794 = vpack.c.b16 %v1773, %v1773
        %v1795 = vpack.c.b16 %v1775, %v1774
        %v1796 = vpack.c.b16 %v1776, %v1776
        %v1798 = vshrl.u32 %v1777, 16
        %v1800 = vshll.u32 %v1777, 16
        %v1802 = vrot.slane %v1800, 1
        %v1803 = vor.u32 %v1798, %v1802
        %v1805 = vshll.u32 %v1778, 16
        %v1807 = vrot.slane %v1805, 1
        %v1808 = vsel %vm667, %v1803, %v1807
        %v1810 = vshrl.u32 %v1779, 16
        %v1812 = vshll.u32 %v1779, 16
        %v1814 = vrot.slane %v1812, 1
        %v1815 = vor.u32 %v1810, %v1814
        %v1817 = vshll.u32 %v1780, 16
        %v1819 = vrot.slane %v1817, 1
        %v1820 = vsel %vm667, %v1815, %v1819
        %v1822 = vshrl.u32 %v1781, 16
        %v1824 = vshll.u32 %v1781, 16
        %v1826 = vrot.slane %v1824, 1
        %v1827 = vor.u32 %v1822, %v1826
        %v1829 = vshll.u32 %v1782, 16
        %v1831 = vrot.slane %v1829, 1
        %v1832 = vsel %vm667, %v1827, %v1831
        %v1834 = vshrl.u32 %v1783, 16
        %v1836 = vshll.u32 %v1783, 16
        %v1838 = vrot.slane %v1836, 1
        %v1839 = vor.u32 %v1834, %v1838
        %v1841 = vshll.u32 %v1784, 16
        %v1843 = vrot.slane %v1841, 1
        %v1844 = vsel %vm667, %v1839, %v1843
        %v1846 = vshrl.u32 %v1785, 16
        %v1848 = vshll.u32 %v1785, 16
        %v1850 = vrot.slane %v1848, 1
        %v1851 = vor.u32 %v1846, %v1850
        %v1853 = vshll.u32 %v1786, 16
        %v1855 = vrot.slane %v1853, 1
        %v1856 = vsel %vm667, %v1851, %v1855
        %v1858 = vshrl.u32 %v1787, 16
        %v1860 = vshll.u32 %v1787, 16
        %v1862 = vrot.slane %v1860, 1
        %v1863 = vor.u32 %v1858, %v1862
        %v1865 = vshll.u32 %v1788, 16
        %v1867 = vrot.slane %v1865, 1
        %v1868 = vsel %vm667, %v1863, %v1867
        %v1870 = vshrl.u32 %v1789, 16
        %v1872 = vshll.u32 %v1789, 16
        %v1874 = vrot.slane %v1872, 1
        %v1875 = vor.u32 %v1870, %v1874
        %v1877 = vshll.u32 %v1790, 16
        %v1879 = vrot.slane %v1877, 1
        %v1880 = vsel %vm667, %v1875, %v1879
        %v1882 = vshrl.u32 %v1791, 16
        %v1884 = vshll.u32 %v1791, 16
        %v1886 = vrot.slane %v1884, 1
        %v1887 = vor.u32 %v1882, %v1886
        %v1889 = vshll.u32 %v1792, 16
        %v1891 = vrot.slane %v1889, 1
        %v1892 = vsel %vm667, %v1887, %v1891
        %v1894 = vshrl.u32 %v1793, 16
        %v1896 = vshll.u32 %v1793, 16
        %v1898 = vrot.slane %v1896, 1
        %v1899 = vor.u32 %v1894, %v1898
        %v1901 = vshll.u32 %v1794, 16
        %v1903 = vrot.slane %v1901, 1
        %v1904 = vsel %vm667, %v1899, %v1903
        %v1906 = vshrl.u32 %v1795, 16
        %v1908 = vshll.u32 %v1795, 16
        %v1910 = vrot.slane %v1908, 1
        %v1911 = vor.u32 %v1906, %v1910
        %v1913 = vshll.u32 %v1796, 16
        %v1915 = vrot.slane %v1913, 1
        %v1916 = vsel %vm667, %v1911, %v1915
        %1917 = vrot.lane.b32.xlu0 %v1808, 112
        %v1918 = vpop.permute.xlu0 %1917
        %1919 = vrot.lane.b32.xlu0 %v1820, 112
        %v1920 = vpop.permute.xlu0 %1919
        %1921 = vrot.lane.b32.xlu0 %v1832, 112
        %v1922 = vpop.permute.xlu0 %1921
        %1923 = vrot.lane.b32.xlu0 %v1844, 112
        %v1924 = vpop.permute.xlu0 %1923
        %1925 = vrot.lane.b32.xlu0 %v1856, 112
        %v1926 = vpop.permute.xlu0 %1925
        %1927 = vrot.lane.b32.xlu0 %v1868, 112
        %v1928 = vpop.permute.xlu0 %1927
        %1929 = vrot.lane.b32.xlu0 %v1880, 112
        %v1930 = vpop.permute.xlu0 %1929
        %1931 = vrot.lane.b32.xlu0 %v1892, 112
        %v1932 = vpop.permute.xlu0 %1931
        %1933 = vrot.lane.b32.xlu0 %v1904, 112
        %v1934 = vpop.permute.xlu0 %1933
        %1935 = vrot.lane.b32.xlu0 %v1916, 112
        %v1936 = vpop.permute.xlu0 %1935
        %vm1947 = vcmask 1048448
        %1948 = vst.msk [vmem:[#allocation2] sm:$0xff] %vm1947, %v1918
        %1949 = vst.msk [vmem:[#allocation2 + $0x10] sm:$0xff] %vm1947, %v1920
        %1950 = vst.msk [vmem:[#allocation2 + $0x20] sm:$0xff] %vm1947, %v1922
        %1951 = vst.msk [vmem:[#allocation2 + $0x30] sm:$0xff] %vm1947, %v1924
        %1952 = vst.msk [vmem:[#allocation2 + $0x40] sm:$0xff] %vm1947, %v1926
        %1953 = vst.msk [vmem:[#allocation2 + $0x50] sm:$0xff] %vm1947, %v1928
        %1954 = vst.msk [vmem:[#allocation2 + $0x60] sm:$0xff] %vm1947, %v1930
        %1955 = vst.msk [vmem:[#allocation2 + $0x70] sm:$0xff] %vm1947, %v1932
        %1956 = vst.msk [vmem:[#allocation2 + $0x80] sm:$0xff] %vm1947, %v1934
        %1957 = vst.msk [vmem:[#allocation2 + $0x90] sm:$0xff] %vm1947, %v1936
        %v1958 = vld [vmem:[%s1575] sm:$0xe]
        %v1959 = vld [vmem:[%s1575 + $0x4] sm:$0xf]
        %v1960 = vld [vmem:[%s1575 + $0x8] sm:$0x1]
        %v1961 = vld [vmem:[%s1575 + $0xc] sm:$0xe]
        %v1962 = vld [vmem:[%s1575 + $0x10] sm:$0xf]
        %v1963 = vld [vmem:[%s1575 + $0x14] sm:$0x1]
        %v1964 = vld [vmem:[%s1575 + $0x18] sm:$0xe]
        %v1965 = vld [vmem:[%s1575 + $0x1c] sm:$0xf]
        %v1966 = vld [vmem:[%s1575 + $0x20] sm:$0x1]
        %v1967 = vld [vmem:[%s1575 + $0x24] sm:$0xe]
        %v1968 = vld [vmem:[%s1575 + $0x28] sm:$0xf]
        %v1969 = vld [vmem:[%s1575 + $0x2c] sm:$0x1]
        %v1970 = vld [vmem:[%s1575 + $0x30] sm:$0xe]
        %v1971 = vld [vmem:[%s1575 + $0x34] sm:$0xf]
        %v1972 = vld [vmem:[%s1575 + $0x38] sm:$0x1]
        %v1973 = vld [vmem:[%s1575 + $0x3c] sm:$0xe]
        %v1974 = vld [vmem:[%s1575 + $0x40] sm:$0xf]
        %v1975 = vld [vmem:[%s1575 + $0x44] sm:$0x1]
        %v1976 = vld [vmem:[%s1575 + $0x48] sm:$0xe]
        %v1977 = vld [vmem:[%s1575 + $0x4c] sm:$0xf]
        %v1978 = vld [vmem:[%s1575 + $0x50] sm:$0x1]
        %v1979 = vld [vmem:[%s1575 + $0x54] sm:$0xe]
        %v1980 = vld [vmem:[%s1575 + $0x58] sm:$0xf]
        %v1981 = vld [vmem:[%s1575 + $0x5c] sm:$0x1]
        %v1982 = vld [vmem:[%s1575 + $0x60] sm:$0xe]
        %v1983 = vld [vmem:[%s1575 + $0x64] sm:$0xf]
        %v1984 = vld [vmem:[%s1575 + $0x68] sm:$0x1]
        %v1985 = vld [vmem:[%s1575 + $0x6c] sm:$0xe]
        %v1986 = vld [vmem:[%s1575 + $0x70] sm:$0xf]
        %v1987 = vld [vmem:[%s1575 + $0x74] sm:$0x1]
        %v2018 = vunpack.c.l.b16 %v1958
        %v2019 = vunpack.c.l.b16 %v1959
        %v2020 = vunpack.c.l.b16 %v1960
        %v2021 = vunpack.c.l.b16 %v1961
        %v2022 = vunpack.c.l.b16 %v1962
        %v2023 = vunpack.c.l.b16 %v1963
        %v2024 = vunpack.c.l.b16 %v1964
        %v2025 = vunpack.c.l.b16 %v1965
        %v2026 = vunpack.c.l.b16 %v1966
        %v2027 = vunpack.c.l.b16 %v1967
        %v2028 = vunpack.c.l.b16 %v1968
        %v2029 = vunpack.c.l.b16 %v1969
        %v2030 = vunpack.c.l.b16 %v1970
        %v2031 = vunpack.c.l.b16 %v1971
        %v2032 = vunpack.c.l.b16 %v1972
        %v2033 = vunpack.c.l.b16 %v1973
        %v2034 = vunpack.c.l.b16 %v1974
        %v2035 = vunpack.c.l.b16 %v1975
        %v2036 = vunpack.c.l.b16 %v1976
        %v2037 = vunpack.c.l.b16 %v1977
        %v2038 = vunpack.c.l.b16 %v1978
        %v2039 = vunpack.c.l.b16 %v1979
        %v2040 = vunpack.c.l.b16 %v1980
        %v2041 = vunpack.c.l.b16 %v1981
        %v2042 = vunpack.c.l.b16 %v1982
        %v2043 = vunpack.c.l.b16 %v1983
        %v2044 = vunpack.c.l.b16 %v1984
        %v2045 = vunpack.c.l.b16 %v1985
        %v2046 = vunpack.c.l.b16 %v1986
        %v2047 = vunpack.c.l.b16 %v1987
        %v2048 = vpack.c.b16 %v2019, %v2018
        %v2049 = vpack.c.b16 %v2020, %v2020
        %v2050 = vpack.c.b16 %v2022, %v2021
        %v2051 = vpack.c.b16 %v2023, %v2023
        %v2052 = vpack.c.b16 %v2025, %v2024
        %v2053 = vpack.c.b16 %v2026, %v2026
        %v2054 = vpack.c.b16 %v2028, %v2027
        %v2055 = vpack.c.b16 %v2029, %v2029
        %v2056 = vpack.c.b16 %v2031, %v2030
        %v2057 = vpack.c.b16 %v2032, %v2032
        %v2058 = vpack.c.b16 %v2034, %v2033
        %v2059 = vpack.c.b16 %v2035, %v2035
        %v2060 = vpack.c.b16 %v2037, %v2036
        %v2061 = vpack.c.b16 %v2038, %v2038
        %v2062 = vpack.c.b16 %v2040, %v2039
        %v2063 = vpack.c.b16 %v2041, %v2041
        %v2064 = vpack.c.b16 %v2043, %v2042
        %v2065 = vpack.c.b16 %v2044, %v2044
        %v2066 = vpack.c.b16 %v2046, %v2045
        %v2067 = vpack.c.b16 %v2047, %v2047
        %v2068 = vrot.slane %v2048, 1
        %v2069 = vrot.slane %v2049, 1
        %v2070 = vsel %vm939, %v2068, %v2069
        %v2071 = vrot.slane %v2050, 1
        %v2072 = vrot.slane %v2051, 1
        %v2073 = vsel %vm939, %v2071, %v2072
        %v2074 = vrot.slane %v2052, 1
        %v2075 = vrot.slane %v2053, 1
        %v2076 = vsel %vm939, %v2074, %v2075
        %v2077 = vrot.slane %v2054, 1
        %v2078 = vrot.slane %v2055, 1
        %v2079 = vsel %vm939, %v2077, %v2078
        %v2080 = vrot.slane %v2056, 1
        %v2081 = vrot.slane %v2057, 1
        %v2082 = vsel %vm939, %v2080, %v2081
        %v2083 = vrot.slane %v2058, 1
        %v2084 = vrot.slane %v2059, 1
        %v2085 = vsel %vm939, %v2083, %v2084
        %v2086 = vrot.slane %v2060, 1
        %v2087 = vrot.slane %v2061, 1
        %v2088 = vsel %vm939, %v2086, %v2087
        %v2089 = vrot.slane %v2062, 1
        %v2090 = vrot.slane %v2063, 1
        %v2091 = vsel %vm939, %v2089, %v2090
        %v2092 = vrot.slane %v2064, 1
        %v2093 = vrot.slane %v2065, 1
        %v2094 = vsel %vm939, %v2092, %v2093
        %v2095 = vrot.slane %v2066, 1
        %v2096 = vrot.slane %v2067, 1
        %v2097 = vsel %vm939, %v2095, %v2096
        %2108 = vst.msk [vmem:[#allocation2 + $0x8] sm:$0xff] %vm546, %v2070
        %2109 = vst.msk [vmem:[#allocation2 + $0x18] sm:$0xff] %vm546, %v2073
        %2110 = vst.msk [vmem:[#allocation2 + $0x28] sm:$0xff] %vm546, %v2076
        %2111 = vst.msk [vmem:[#allocation2 + $0x38] sm:$0xff] %vm546, %v2079
        %2112 = vst.msk [vmem:[#allocation2 + $0x48] sm:$0xff] %vm546, %v2082
        %2113 = vst.msk [vmem:[#allocation2 + $0x58] sm:$0xff] %vm546, %v2085
        %2114 = vst.msk [vmem:[#allocation2 + $0x68] sm:$0xff] %vm546, %v2088
        %2115 = vst.msk [vmem:[#allocation2 + $0x78] sm:$0xff] %vm546, %v2091
        %2116 = vst.msk [vmem:[#allocation2 + $0x88] sm:$0xff] %vm546, %v2094
        %2117 = vst.msk [vmem:[#allocation2 + $0x98] sm:$0xff] %vm546, %v2097
        %vm2118 = vcmask 1047680
        %2119 = vst.msk [vmem:[#allocation2 + $0x8] sm:$0xff] %vm2118, 0
        %2120 = vst.msk [vmem:[#allocation2 + $0x18] sm:$0xff] %vm2118, 0
        %2121 = vst.msk [vmem:[#allocation2 + $0x28] sm:$0xff] %vm2118, 0
        %2122 = vst.msk [vmem:[#allocation2 + $0x38] sm:$0xff] %vm2118, 0
        %2123 = vst.msk [vmem:[#allocation2 + $0x48] sm:$0xff] %vm2118, 0
        %2124 = vst.msk [vmem:[#allocation2 + $0x58] sm:$0xff] %vm2118, 0
        %2125 = vst.msk [vmem:[#allocation2 + $0x68] sm:$0xff] %vm2118, 0
        %2126 = vst.msk [vmem:[#allocation2 + $0x78] sm:$0xff] %vm2118, 0
        %2127 = vst.msk [vmem:[#allocation2 + $0x88] sm:$0xff] %vm2118, 0
        %2128 = vst.msk [vmem:[#allocation2 + $0x98] sm:$0xff] %vm2118, 0
        %v2129 = vld [vmem:[#allocation2] sm:$0xff]
        %v2130 = vld [vmem:[#allocation2 + $0x8] sm:$0xff]
        %v2131 = vld [vmem:[#allocation2 + $0x10] sm:$0xff]
        %v2132 = vld [vmem:[#allocation2 + $0x18] sm:$0xff]
        %v2133 = vld [vmem:[#allocation2 + $0x20] sm:$0xff]
        %v2134 = vld [vmem:[#allocation2 + $0x28] sm:$0xff]
        %v2135 = vld [vmem:[#allocation2 + $0x30] sm:$0xff]
        %v2136 = vld [vmem:[#allocation2 + $0x38] sm:$0xff]
        %v2137 = vld [vmem:[#allocation2 + $0x40] sm:$0xff]
        %v2138 = vld [vmem:[#allocation2 + $0x48] sm:$0xff]
        %v2139 = vld [vmem:[#allocation2 + $0x50] sm:$0xff]
        %v2140 = vld [vmem:[#allocation2 + $0x58] sm:$0xff]
        %v2141 = vld [vmem:[#allocation2 + $0x60] sm:$0xff]
        %v2142 = vld [vmem:[#allocation2 + $0x68] sm:$0xff]
        %v2143 = vld [vmem:[#allocation2 + $0x70] sm:$0xff]
        %v2144 = vld [vmem:[#allocation2 + $0x78] sm:$0xff]
        %v2145 = vld [vmem:[#allocation2 + $0x80] sm:$0xff]
        %v2146 = vld [vmem:[#allocation2 + $0x88] sm:$0xff]
        %v2147 = vld [vmem:[#allocation2 + $0x90] sm:$0xff]
        %v2148 = vld [vmem:[#allocation2 + $0x98] sm:$0xff]
        %v2149 = vld [vmem:[%s1] sm:$0xf]
        %v2150 = vld [vmem:[%s1 + $0x4] sm:$0xf]
        %v2151 = vld [vmem:[%s1 + $0x8] sm:$0xf]
        %v2152 = vld [vmem:[%s1 + $0xc] sm:$0xf]
        %v2153 = vld [vmem:[%s1 + $0x10] sm:$0xf]
        %v2154 = vld [vmem:[%s1 + $0x14] sm:$0xf]
        %v2155 = vld [vmem:[%s1 + $0x18] sm:$0xf]
        %v2156 = vld [vmem:[%s1 + $0x1c] sm:$0xf]
        %v2157 = vld [vmem:[%s1 + $0x20] sm:$0xf]
        %v2158 = vld [vmem:[%s1 + $0x24] sm:$0xf]
        %v2159 = vld [vmem:[%s1 + $0x28] sm:$0xf]
        %v2160 = vld [vmem:[%s1 + $0x2c] sm:$0xf]
        %v2161 = vld [vmem:[%s1 + $0x30] sm:$0xf]
        %v2162 = vld [vmem:[%s1 + $0x34] sm:$0xf]
        %v2163 = vld [vmem:[%s1 + $0x38] sm:$0xf]
        %v2164 = vld [vmem:[%s1 + $0x3c] sm:$0xf]
        %v2165 = vld [vmem:[%s1 + $0x40] sm:$0xf]
        %v2166 = vld [vmem:[%s1 + $0x44] sm:$0xf]
        %v2167 = vld [vmem:[%s1 + $0x48] sm:$0xf]
        %v2168 = vld [vmem:[%s1 + $0x4c] sm:$0xf]
        %v2169 = vld [vmem:[%s1 + $0x50] sm:$0xf]
        %v2170 = vld [vmem:[%s1 + $0x54] sm:$0xf]
        %v2171 = vld [vmem:[%s1 + $0x58] sm:$0xf]
        %v2172 = vld [vmem:[%s1 + $0x5c] sm:$0xf]
        %v2173 = vld [vmem:[%s1 + $0x60] sm:$0xf]
        %v2174 = vld [vmem:[%s1 + $0x64] sm:$0xf]
        %v2175 = vld [vmem:[%s1 + $0x68] sm:$0xf]
        %v2176 = vld [vmem:[%s1 + $0x6c] sm:$0xf]
        %v2177 = vld [vmem:[%s1 + $0x70] sm:$0xf]
        %v2178 = vld [vmem:[%s1 + $0x74] sm:$0xf]
        %v2179 = vld [vmem:[%s1 + $0x78] sm:$0xf]
        %v2180 = vld [vmem:[%s1 + $0x7c] sm:$0xf]
        %v2181 = vld [vmem:[%s2] sm:$0x1]
        %v2183 = vlaneseq
        %v2184 = vshrl.u32 %v2183, 7
        %v2185 = vsub.s32 0, %v2184
        %v2186 = vrot.slane %v2181, %v2185
        %v2220 = vunpack.c.l.b16 %v2149
        %v2221 = vunpack.c.l.b16 %v2150
        %v2222 = vunpack.c.l.b16 %v2151
        %v2223 = vunpack.c.l.b16 %v2152
        %v2224 = vunpack.c.l.b16 %v2153
        %v2225 = vunpack.c.l.b16 %v2154
        %v2226 = vunpack.c.l.b16 %v2155
        %v2227 = vunpack.c.l.b16 %v2156
        %v2228 = vunpack.c.l.b16 %v2157
        %v2229 = vunpack.c.l.b16 %v2158
        %v2230 = vunpack.c.l.b16 %v2159
        %v2231 = vunpack.c.l.b16 %v2160
        %v2232 = vunpack.c.l.b16 %v2161
        %v2233 = vunpack.c.l.b16 %v2162
        %v2234 = vunpack.c.l.b16 %v2163
        %v2235 = vunpack.c.l.b16 %v2164
        %v2236 = vunpack.c.l.b16 %v2165
        %v2237 = vunpack.c.l.b16 %v2166
        %v2238 = vunpack.c.l.b16 %v2167
        %v2239 = vunpack.c.l.b16 %v2168
        %v2240 = vunpack.c.l.b16 %v2169
        %v2241 = vunpack.c.l.b16 %v2170
        %v2242 = vunpack.c.l.b16 %v2171
        %v2243 = vunpack.c.l.b16 %v2172
        %v2244 = vunpack.c.l.b16 %v2173
        %v2245 = vunpack.c.l.b16 %v2174
        %v2246 = vunpack.c.l.b16 %v2175
        %v2247 = vunpack.c.l.b16 %v2176
        %v2248 = vunpack.c.l.b16 %v2177
        %v2249 = vunpack.c.l.b16 %v2178
        %v2250 = vunpack.c.l.b16 %v2179
        %v2251 = vunpack.c.l.b16 %v2180
        %v2252 = vpack.c.b16 %v2221, %v2220
        %v2253 = vpack.c.b16 %v2223, %v2222
        %v2254 = vpack.c.b16 %v2225, %v2224
        %v2255 = vpack.c.b16 %v2227, %v2226
        %v2256 = vpack.c.b16 %v2229, %v2228
        %v2257 = vpack.c.b16 %v2231, %v2230
        %v2258 = vpack.c.b16 %v2233, %v2232
        %v2259 = vpack.c.b16 %v2235, %v2234
        %v2260 = vpack.c.b16 %v2237, %v2236
        %v2261 = vpack.c.b16 %v2239, %v2238
        %v2262 = vpack.c.b16 %v2241, %v2240
        %v2263 = vpack.c.b16 %v2243, %v2242
        %v2264 = vpack.c.b16 %v2245, %v2244
        %v2265 = vpack.c.b16 %v2247, %v2246
        %v2266 = vpack.c.b16 %v2249, %v2248
        %v2267 = vpack.c.b16 %v2251, %v2250
        %2284 = vmatprep.subr.bf16.mxu0 0
        %2285 = vmatpush1.bf16.msra.mxu0 %v2252
        %2286 = vmatprep.subr.bf16.mxu0 0
        %2287 = vmatpush1.bf16.msra.mxu0 %v2253
        %2288 = vmatprep.subr.bf16.mxu0 0
        %2289 = vmatpush1.bf16.msra.mxu0 %v2254
        %2290 = vmatprep.subr.bf16.mxu0 0
        %2291 = vmatpush1.bf16.msra.mxu0 %v2255
        %2292 = vmatprep.subr.bf16.mxu0 0
        %2293 = vmatpush1.bf16.msra.mxu0 %v2256
        %2294 = vmatprep.subr.bf16.mxu0 0
        %2295 = vmatpush1.bf16.msra.mxu0 %v2257
        %2296 = vmatprep.subr.bf16.mxu0 0
        %2297 = vmatpush1.bf16.msra.mxu0 %v2258
        %2298 = vmatprep.subr.bf16.mxu0 0
        %2299 = vmatpush1.bf16.msra.mxu0 %v2259
        %2300 = vmatprep.subr.bf16.mxu0 0
        %2301 = vmatpush1.bf16.msra.mxu0 %v2260
        %2302 = vmatprep.subr.bf16.mxu0 0
        %2303 = vmatpush1.bf16.msra.mxu0 %v2261
        %2304 = vmatprep.subr.bf16.mxu0 0
        %2305 = vmatpush1.bf16.msra.mxu0 %v2262
        %2306 = vmatprep.subr.bf16.mxu0 0
        %2307 = vmatpush1.bf16.msra.mxu0 %v2263
        %2308 = vmatprep.subr.bf16.mxu0 0
        %2309 = vmatpush1.bf16.msra.mxu0 %v2264
        %2310 = vmatprep.subr.bf16.mxu0 0
        %2311 = vmatpush1.bf16.msra.mxu0 %v2265
        %2312 = vmatprep.subr.bf16.mxu0 0
        %2313 = vmatpush1.bf16.msra.mxu0 %v2266
        %2314 = vmatprep.subr.bf16.mxu0 0
        %2315 = vmatpush1.bf16.msra.mxu0 %v2267
        %2316 = vmatprep.mubr.bf16.mxu0 %v2130
        %2317 = vmatmul.mubr.bf16.gmra.mrb[0].mxu0 %v2129
        %v2318 = vpop.f32.mrb[0].mxu0
        %v2319 = vadd.f32 %v2186, %v2318
        %v2320 = vpop.f32.mrb[0].mxu0
        %v2321 = vpop.f32.mrb[0].mxu0
        %v2322 = vadd.f32 %v2186, %v2321
        %v2323 = vpop.f32.mrb[0].mxu0
        %2324 = vmatprep.mubr.bf16.mxu0 %v2132
        %2325 = vmatmul.mubr.bf16.gmra.mrb[0].mxu0 %v2131
        %v2326 = vpop.f32.mrb[0].mxu0
        %v2327 = vadd.f32 %v2186, %v2326
        %v2328 = vpop.f32.mrb[0].mxu0
        %v2329 = vpop.f32.mrb[0].mxu0
        %v2330 = vadd.f32 %v2186, %v2329
        %v2331 = vpop.f32.mrb[0].mxu0
        %2332 = vmatprep.mubr.bf16.mxu0 %v2134
        %2333 = vmatmul.mubr.bf16.gmra.mrb[0].mxu0 %v2133
        %v2334 = vpop.f32.mrb[0].mxu0
        %v2335 = vadd.f32 %v2186, %v2334
        %v2336 = vpop.f32.mrb[0].mxu0
        %v2337 = vpop.f32.mrb[0].mxu0
        %v2338 = vadd.f32 %v2186, %v2337
        %v2339 = vpop.f32.mrb[0].mxu0
        %2340 = vmatprep.mubr.bf16.mxu0 %v2136
        %2341 = vmatmul.mubr.bf16.gmra.mrb[0].mxu0 %v2135
        %v2342 = vpop.f32.mrb[0].mxu0
        %v2343 = vadd.f32 %v2186, %v2342
        %v2344 = vpop.f32.mrb[0].mxu0
        %v2345 = vpop.f32.mrb[0].mxu0
        %v2346 = vadd.f32 %v2186, %v2345
        %v2347 = vpop.f32.mrb[0].mxu0
        %2348 = vmatprep.mubr.bf16.mxu0 %v2138
        %2349 = vmatmul.mubr.bf16.gmra.mrb[0].mxu0 %v2137
        %v2350 = vpop.f32.mrb[0].mxu0
        %v2351 = vadd.f32 %v2186, %v2350
        %v2352 = vpop.f32.mrb[0].mxu0
        %v2353 = vpop.f32.mrb[0].mxu0
        %v2354 = vadd.f32 %v2186, %v2353
        %v2355 = vpop.f32.mrb[0].mxu0
        %2356 = vmatprep.mubr.bf16.mxu0 %v2140
        %2357 = vmatmul.mubr.bf16.gmra.mrb[0].mxu0 %v2139
        %v2358 = vpop.f32.mrb[0].mxu0
        %v2359 = vadd.f32 %v2186, %v2358
        %v2360 = vpop.f32.mrb[0].mxu0
        %v2361 = vpop.f32.mrb[0].mxu0
        %v2362 = vadd.f32 %v2186, %v2361
        %v2363 = vpop.f32.mrb[0].mxu0
        %2364 = vmatprep.mubr.bf16.mxu0 %v2142
        %2365 = vmatmul.mubr.bf16.gmra.mrb[0].mxu0 %v2141
        %v2366 = vpop.f32.mrb[0].mxu0
        %v2367 = vadd.f32 %v2186, %v2366
        %v2368 = vpop.f32.mrb[0].mxu0
        %v2369 = vpop.f32.mrb[0].mxu0
        %v2370 = vadd.f32 %v2186, %v2369
        %v2371 = vpop.f32.mrb[0].mxu0
        %2372 = vmatprep.mubr.bf16.mxu0 %v2144
        %2373 = vmatmul.mubr.bf16.gmra.mrb[0].mxu0 %v2143
        %v2374 = vpop.f32.mrb[0].mxu0
        %v2375 = vadd.f32 %v2186, %v2374
        %v2376 = vpop.f32.mrb[0].mxu0
        %v2377 = vpop.f32.mrb[0].mxu0
        %v2378 = vadd.f32 %v2186, %v2377
        %v2379 = vpop.f32.mrb[0].mxu0
        %2380 = vmatprep.mubr.bf16.mxu0 %v2146
        %2381 = vmatmul.mubr.bf16.gmra.mrb[0].mxu0 %v2145
        %v2382 = vpop.f32.mrb[0].mxu0
        %v2383 = vadd.f32 %v2186, %v2382
        %v2384 = vpop.f32.mrb[0].mxu0
        %v2385 = vpop.f32.mrb[0].mxu0
        %v2386 = vadd.f32 %v2186, %v2385
        %v2387 = vpop.f32.mrb[0].mxu0
        %2388 = vmatprep.mubr.bf16.mxu0 %v2148
        %2389 = vmatmul.mubr.bf16.gmra.mrb[0].mxu0 %v2147
        %v2390 = vpop.f32.mrb[0].mxu0
        %v2391 = vadd.f32 %v2186, %v2390
        %v2392 = vpop.f32.mrb[0].mxu0
        %v2393 = vpop.f32.mrb[0].mxu0
        %v2394 = vadd.f32 %v2186, %v2393
        %v2395 = vpop.f32.mrb[0].mxu0
        %2396 = vdwg.mxu0
        %v2397 = vmax.f32 %v2319, 0.0
        %v2398 = vmax.f32 %v2322, 0.0
        %v2399 = vmax.f32 %v2327, 0.0
        %v2400 = vmax.f32 %v2330, 0.0
        %v2401 = vmax.f32 %v2335, 0.0
        %v2402 = vmax.f32 %v2338, 0.0
        %v2403 = vmax.f32 %v2343, 0.0
        %v2404 = vmax.f32 %v2346, 0.0
        %v2405 = vmax.f32 %v2351, 0.0
        %v2406 = vmax.f32 %v2354, 0.0
        %v2407 = vmax.f32 %v2359, 0.0
        %v2408 = vmax.f32 %v2362, 0.0
        %v2409 = vmax.f32 %v2367, 0.0
        %v2410 = vmax.f32 %v2370, 0.0
        %v2411 = vmax.f32 %v2375, 0.0
        %v2412 = vmax.f32 %v2378, 0.0
        %v2413 = vmax.f32 %v2383, 0.0
        %v2414 = vmax.f32 %v2386, 0.0
        %v2415 = vmax.f32 %v2391, 0.0
        %v2416 = vmax.f32 %v2394, 0.0
        %v2417 = vld [vmem:[%s3] sm:$0x1]
        %v2419 = vlaneseq
        %v2420 = vshrl.u32 %v2419, 7
        %v2421 = vsub.s32 0, %v2420
        %v2422 = vrot.slane %v2417, %v2421
        %v2424 = vmul.f32 %v2399, %v2422
        %v2425 = vmul.f32 %v2400, %v2422
        %v2426 = vmul.f32 %v2401, %v2422
        %v2427 = vmul.f32 %v2402, %v2422
        %v2428 = vmul.f32 %v2403, %v2422
        %v2429 = vmul.f32 %v2404, %v2422
        %v2430 = vmul.f32 %v2405, %v2422
        %v2431 = vmul.f32 %v2406, %v2422
        %v2432 = vmul.f32 %v2407, %v2422
        %v2433 = vmul.f32 %v2408, %v2422
        %v2434 = vmul.f32 %v2409, %v2422
        %v2435 = vmul.f32 %v2410, %v2422
        %v2436 = vmul.f32 %v2411, %v2422
        %v2437 = vmul.f32 %v2412, %v2422
        %v2438 = vmul.f32 %v2413, %v2422
        %v2439 = vmul.f32 %v2414, %v2422
        %v2440 = vld [vmem:[%s4] sm:$0x1]
        %v2442 = vlaneseq
        %v2443 = vshrl.u32 %v2442, 7
        %v2444 = vsub.s32 0, %v2443
        %v2445 = vrot.slane %v2440, %v2444
        %v2447 = vadd.f32 %v2424, %v2445
        %v2448 = vadd.f32 %v2425, %v2445
        %v2449 = vadd.f32 %v2426, %v2445
        %v2450 = vadd.f32 %v2427, %v2445
        %v2451 = vadd.f32 %v2428, %v2445
        %v2452 = vadd.f32 %v2429, %v2445
        %v2453 = vadd.f32 %v2430, %v2445
        %v2454 = vadd.f32 %v2431, %v2445
        %v2455 = vadd.f32 %v2432, %v2445
        %v2456 = vadd.f32 %v2433, %v2445
        %v2457 = vadd.f32 %v2434, %v2445
        %v2458 = vadd.f32 %v2435, %v2445
        %v2459 = vadd.f32 %v2436, %v2445
        %v2460 = vadd.f32 %v2437, %v2445
        %v2461 = vadd.f32 %v2438, %v2445
        %v2462 = vadd.f32 %v2439, %v2445
        %v2463 = vmax.f32 %v2447, 0.0
        %v2464 = vmax.f32 %v2448, 0.0
        %v2465 = vmax.f32 %v2449, 0.0
        %v2466 = vmax.f32 %v2450, 0.0
        %v2467 = vmax.f32 %v2451, 0.0
        %v2468 = vmax.f32 %v2452, 0.0
        %v2469 = vmax.f32 %v2453, 0.0
        %v2470 = vmax.f32 %v2454, 0.0
        %v2471 = vmax.f32 %v2455, 0.0
        %v2472 = vmax.f32 %v2456, 0.0
        %v2473 = vmax.f32 %v2457, 0.0
        %v2474 = vmax.f32 %v2458, 0.0
        %v2475 = vmax.f32 %v2459, 0.0
        %v2476 = vmax.f32 %v2460, 0.0
        %v2477 = vmax.f32 %v2461, 0.0
        %v2478 = vmax.f32 %v2462, 0.0
        %v2479 = vpack.c.bf16 %v2464, %v2463
        %v2480 = vpack.c.bf16 %v2466, %v2465
        %v2481 = vpack.c.bf16 %v2468, %v2467
        %v2482 = vpack.c.bf16 %v2470, %v2469
        %v2483 = vpack.c.bf16 %v2472, %v2471
        %v2484 = vpack.c.bf16 %v2474, %v2473
        %v2485 = vpack.c.bf16 %v2476, %v2475
        %v2486 = vpack.c.bf16 %v2478, %v2477
        %v2487 = vld [vmem:[%s5] sm:$0xf]
        %v2488 = vld [vmem:[%s5 + $0x4] sm:$0xf]
        %v2489 = vld [vmem:[%s5 + $0x8] sm:$0xf]
        %v2490 = vld [vmem:[%s5 + $0xc] sm:$0xf]
        %v2491 = vld [vmem:[%s5 + $0x10] sm:$0xf]
        %v2492 = vld [vmem:[%s5 + $0x14] sm:$0xf]
        %v2493 = vld [vmem:[%s5 + $0x18] sm:$0xf]
        %v2494 = vld [vmem:[%s5 + $0x1c] sm:$0xf]
        %v2495 = vld [vmem:[%s5 + $0x20] sm:$0xf]
        %v2496 = vld [vmem:[%s5 + $0x24] sm:$0xf]
        %v2497 = vld [vmem:[%s5 + $0x28] sm:$0xf]
        %v2498 = vld [vmem:[%s5 + $0x2c] sm:$0xf]
        %v2499 = vld [vmem:[%s5 + $0x30] sm:$0xf]
        %v2500 = vld [vmem:[%s5 + $0x34] sm:$0xf]
        %v2501 = vld [vmem:[%s5 + $0x38] sm:$0xf]
        %v2502 = vld [vmem:[%s5 + $0x3c] sm:$0xf]
        %v2503 = vld [vmem:[%s6] sm:$0x1]
        %v2505 = vlaneseq
        %v2506 = vshrl.u32 %v2505, 7
        %v2507 = vsub.s32 0, %v2506
        %v2508 = vrot.slane %v2503, %v2507
        %v2526 = vunpack.c.l.b16 %v2487
        %v2527 = vunpack.c.l.b16 %v2488
        %v2528 = vunpack.c.l.b16 %v2489
        %v2529 = vunpack.c.l.b16 %v2490
        %v2530 = vunpack.c.l.b16 %v2491
        %v2531 = vunpack.c.l.b16 %v2492
        %v2532 = vunpack.c.l.b16 %v2493
        %v2533 = vunpack.c.l.b16 %v2494
        %v2534 = vunpack.c.l.b16 %v2495
        %v2535 = vunpack.c.l.b16 %v2496
        %v2536 = vunpack.c.l.b16 %v2497
        %v2537 = vunpack.c.l.b16 %v2498
        %v2538 = vunpack.c.l.b16 %v2499
        %v2539 = vunpack.c.l.b16 %v2500
        %v2540 = vunpack.c.l.b16 %v2501
        %v2541 = vunpack.c.l.b16 %v2502
        %v2542 = vpack.c.b16 %v2527, %v2526
        %v2543 = vpack.c.b16 %v2529, %v2528
        %v2544 = vpack.c.b16 %v2531, %v2530
        %v2545 = vpack.c.b16 %v2533, %v2532
        %v2546 = vpack.c.b16 %v2535, %v2534
        %v2547 = vpack.c.b16 %v2537, %v2536
        %v2548 = vpack.c.b16 %v2539, %v2538
        %v2549 = vpack.c.b16 %v2541, %v2540
        %2558 = vmatprep.subr.bf16.mxu0 0
        %2559 = vmatpush1.bf16.msra.mxu0 %v2542
        %2560 = vmatprep.subr.bf16.mxu0 0
        %2561 = vmatpush1.bf16.msra.mxu0 %v2543
        %2562 = vmatprep.subr.bf16.mxu0 0
        %2563 = vmatpush1.bf16.msra.mxu0 %v2544
        %2564 = vmatprep.subr.bf16.mxu0 0
        %2565 = vmatpush1.bf16.msra.mxu0 %v2545
        %2566 = vmatprep.subr.bf16.mxu0 0
        %2567 = vmatpush1.bf16.msra.mxu0 %v2546
        %2568 = vmatprep.subr.bf16.mxu0 0
        %2569 = vmatpush1.bf16.msra.mxu0 %v2547
        %2570 = vmatprep.subr.bf16.mxu0 0
        %2571 = vmatpush1.bf16.msra.mxu0 %v2548
        %2572 = vmatprep.subr.bf16.mxu0 0
        %2573 = vmatpush1.bf16.msra.mxu0 %v2549
        %2574 = vmatprep.subr.bf16.mxu0 0
        %2575 = vmatpush1.bf16.msra.mxu0 0
        %2576 = vmatprep.subr.bf16.mxu0 0
        %2577 = vmatpush1.bf16.msra.mxu0 0
        %2578 = vmatprep.subr.bf16.mxu0 0
        %2579 = vmatpush1.bf16.msra.mxu0 0
        %2580 = vmatprep.subr.bf16.mxu0 0
        %2581 = vmatpush1.bf16.msra.mxu0 0
        %2582 = vmatprep.subr.bf16.mxu0 0
        %2583 = vmatpush1.bf16.msra.mxu0 0
        %2584 = vmatprep.subr.bf16.mxu0 0
        %2585 = vmatpush1.bf16.msra.mxu0 0
        %2586 = vmatprep.subr.bf16.mxu0 0
        %2587 = vmatpush1.bf16.msra.mxu0 0
        %2588 = vmatprep.subr.bf16.mxu0 0
        %2589 = vmatpush1.bf16.msra.mxu0 0
        %2590 = vmatprep.mubr.bf16.mxu0 0
        %2591 = vmatmul.mubr.bf16.gmra.mrb[0].mxu0 %v2479
        %v2592 = vpop.f32.mrb[0].mxu0
        %v2593 = vadd.f32 %v2508, %v2592
        %v2594 = vpop.f32.mrb[0].mxu0
        %v2595 = vpop.f32.mrb[0].mxu0
        %v2596 = vadd.f32 %v2508, %v2595
        %v2597 = vpop.f32.mrb[0].mxu0
        %2598 = vmatprep.mubr.bf16.mxu0 0
        %2599 = vmatmul.mubr.bf16.gmra.mrb[0].mxu0 %v2480
        %v2600 = vpop.f32.mrb[0].mxu0
        %v2601 = vadd.f32 %v2508, %v2600
        %v2602 = vpop.f32.mrb[0].mxu0
        %v2603 = vpop.f32.mrb[0].mxu0
        %v2604 = vadd.f32 %v2508, %v2603
        %v2605 = vpop.f32.mrb[0].mxu0
        %2606 = vmatprep.mubr.bf16.mxu0 0
        %2607 = vmatmul.mubr.bf16.gmra.mrb[0].mxu0 %v2481
        %v2608 = vpop.f32.mrb[0].mxu0
        %v2609 = vadd.f32 %v2508, %v2608
        %v2610 = vpop.f32.mrb[0].mxu0
        %v2611 = vpop.f32.mrb[0].mxu0
        %v2612 = vadd.f32 %v2508, %v2611
        %v2613 = vpop.f32.mrb[0].mxu0
        %2614 = vmatprep.mubr.bf16.mxu0 0
        %2615 = vmatmul.mubr.bf16.gmra.mrb[0].mxu0 %v2482
        %v2616 = vpop.f32.mrb[0].mxu0
        %v2617 = vadd.f32 %v2508, %v2616
        %v2618 = vpop.f32.mrb[0].mxu0
        %v2619 = vpop.f32.mrb[0].mxu0
        %v2620 = vadd.f32 %v2508, %v2619
        %v2621 = vpop.f32.mrb[0].mxu0
        %2622 = vmatprep.mubr.bf16.mxu0 0
        %2623 = vmatmul.mubr.bf16.gmra.mrb[0].mxu0 %v2483
        %v2624 = vpop.f32.mrb[0].mxu0
        %v2625 = vadd.f32 %v2508, %v2624
        %v2626 = vpop.f32.mrb[0].mxu0
        %v2627 = vpop.f32.mrb[0].mxu0
        %v2628 = vadd.f32 %v2508, %v2627
        %v2629 = vpop.f32.mrb[0].mxu0
        %2630 = vmatprep.mubr.bf16.mxu0 0
        %2631 = vmatmul.mubr.bf16.gmra.mrb[0].mxu0 %v2484
        %v2632 = vpop.f32.mrb[0].mxu0
        %v2633 = vadd.f32 %v2508, %v2632
        %v2634 = vpop.f32.mrb[0].mxu0
        %v2635 = vpop.f32.mrb[0].mxu0
        %v2636 = vadd.f32 %v2508, %v2635
        %v2637 = vpop.f32.mrb[0].mxu0
        %2638 = vmatprep.mubr.bf16.mxu0 0
        %2639 = vmatmul.mubr.bf16.gmra.mrb[0].mxu0 %v2485
        %v2640 = vpop.f32.mrb[0].mxu0
        %v2641 = vadd.f32 %v2508, %v2640
        %v2642 = vpop.f32.mrb[0].mxu0
        %v2643 = vpop.f32.mrb[0].mxu0
        %v2644 = vadd.f32 %v2508, %v2643
        %v2645 = vpop.f32.mrb[0].mxu0
        %2646 = vmatprep.mubr.bf16.mxu0 0
        %2647 = vmatmul.mubr.bf16.gmra.mrb[0].mxu0 %v2486
        %v2648 = vpop.f32.mrb[0].mxu0
        %v2649 = vadd.f32 %v2508, %v2648
        %v2650 = vpop.f32.mrb[0].mxu0
        %v2651 = vpop.f32.mrb[0].mxu0
        %v2652 = vadd.f32 %v2508, %v2651
        %v2653 = vpop.f32.mrb[0].mxu0
        %2654 = vdwg.mxu0
        %vm2655 = vcmask 64512
        %2656 = vst.msk [vmem:[%s462] sm:$0xff] %vm2655, %v2593
        %2657 = vst.msk [vmem:[%s462 + $0x8] sm:$0xff] %vm2655, %v2596
        %2658 = vst.msk [vmem:[%s462 + $0x10] sm:$0xff] %vm2655, %v2601
        %2659 = vst.msk [vmem:[%s462 + $0x18] sm:$0xff] %vm2655, %v2604
        %2660 = vst.msk [vmem:[%s462 + $0x20] sm:$0xff] %vm2655, %v2609
        %2661 = vst.msk [vmem:[%s462 + $0x28] sm:$0xff] %vm2655, %v2612
        %2662 = vst.msk [vmem:[%s462 + $0x30] sm:$0xff] %vm2655, %v2617
        %2663 = vst.msk [vmem:[%s462 + $0x38] sm:$0xff] %vm2655, %v2620
        %2664 = vst.msk [vmem:[%s462 + $0x40] sm:$0xff] %vm2655, %v2625
        %2665 = vst.msk [vmem:[%s462 + $0x48] sm:$0xff] %vm2655, %v2628
        %2666 = vst.msk [vmem:[%s462 + $0x50] sm:$0xff] %vm2655, %v2633
        %2667 = vst.msk [vmem:[%s462 + $0x58] sm:$0xff] %vm2655, %v2636
        %2668 = vst.msk [vmem:[%s462 + $0x60] sm:$0xff] %vm2655, %v2641
        %2669 = vst.msk [vmem:[%s462 + $0x68] sm:$0xff] %vm2655, %v2644
        %2670 = vst.msk [vmem:[%s462 + $0x70] sm:$0xff] %vm2655, %v2649
        %2671 = vst.msk [vmem:[%s462 + $0x78] sm:$0xff] %vm2655, %v2652
        %v2672 = vld [vmem:[%s7] sm:$0x1]
        %v2674 = vlaneseq
        %v2675 = vshrl.u32 %v2674, 7
        %v2676 = vsub.s32 0, %v2675
        %v2677 = vrot.slane %v2672, %v2676
        %v2679 = vmul.f32 %v2397, %v2677
        %v2680 = vmul.f32 %v2398, %v2677
        %v2681 = vmul.f32 %v2399, %v2677
        %v2682 = vmul.f32 %v2400, %v2677
        %v2683 = vmul.f32 %v2401, %v2677
        %v2684 = vmul.f32 %v2402, %v2677
        %v2685 = vmul.f32 %v2403, %v2677
        %v2686 = vmul.f32 %v2404, %v2677
        %v2687 = vmul.f32 %v2405, %v2677
        %v2688 = vmul.f32 %v2406, %v2677
        %v2689 = vmul.f32 %v2407, %v2677
        %v2690 = vmul.f32 %v2408, %v2677
        %v2691 = vmul.f32 %v2409, %v2677
        %v2692 = vmul.f32 %v2410, %v2677
        %v2693 = vmul.f32 %v2411, %v2677
        %v2694 = vmul.f32 %v2412, %v2677
        %v2695 = vmul.f32 %v2413, %v2677
        %v2696 = vmul.f32 %v2414, %v2677
        %v2697 = vmul.f32 %v2415, %v2677
        %v2698 = vmul.f32 %v2416, %v2677
        %v2699 = vld [vmem:[%s8] sm:$0x1]
        %v2701 = vlaneseq
        %v2702 = vshrl.u32 %v2701, 7
        %v2703 = vsub.s32 0, %v2702
        %v2704 = vrot.slane %v2699, %v2703
        %v2706 = vadd.f32 %v2679, %v2704
        %v2707 = vadd.f32 %v2680, %v2704
        %v2708 = vadd.f32 %v2681, %v2704
        %v2709 = vadd.f32 %v2682, %v2704
        %v2710 = vadd.f32 %v2683, %v2704
        %v2711 = vadd.f32 %v2684, %v2704
        %v2712 = vadd.f32 %v2685, %v2704
        %v2713 = vadd.f32 %v2686, %v2704
        %v2714 = vadd.f32 %v2687, %v2704
        %v2715 = vadd.f32 %v2688, %v2704
        %v2716 = vadd.f32 %v2689, %v2704
        %v2717 = vadd.f32 %v2690, %v2704
        %v2718 = vadd.f32 %v2691, %v2704
        %v2719 = vadd.f32 %v2692, %v2704
        %v2720 = vadd.f32 %v2693, %v2704
        %v2721 = vadd.f32 %v2694, %v2704
        %v2722 = vadd.f32 %v2695, %v2704
        %v2723 = vadd.f32 %v2696, %v2704
        %v2724 = vadd.f32 %v2697, %v2704
        %v2725 = vadd.f32 %v2698, %v2704
        %v2726 = vmax.f32 %v2706, 0.0
        %v2727 = vmax.f32 %v2707, 0.0
        %v2728 = vmax.f32 %v2708, 0.0
        %v2729 = vmax.f32 %v2709, 0.0
        %v2730 = vmax.f32 %v2710, 0.0
        %v2731 = vmax.f32 %v2711, 0.0
        %v2732 = vmax.f32 %v2712, 0.0
        %v2733 = vmax.f32 %v2713, 0.0
        %v2734 = vmax.f32 %v2714, 0.0
        %v2735 = vmax.f32 %v2715, 0.0
        %v2736 = vmax.f32 %v2716, 0.0
        %v2737 = vmax.f32 %v2717, 0.0
        %v2738 = vmax.f32 %v2718, 0.0
        %v2739 = vmax.f32 %v2719, 0.0
        %v2740 = vmax.f32 %v2720, 0.0
        %v2741 = vmax.f32 %v2721, 0.0
        %v2742 = vmax.f32 %v2722, 0.0
        %v2743 = vmax.f32 %v2723, 0.0
        %v2744 = vmax.f32 %v2724, 0.0
        %v2745 = vmax.f32 %v2725, 0.0
        %v2746 = vpack.c.bf16 %v2727, %v2726
        %v2747 = vpack.c.bf16 %v2729, %v2728
        %v2748 = vpack.c.bf16 %v2731, %v2730
        %v2749 = vpack.c.bf16 %v2733, %v2732
        %v2750 = vpack.c.bf16 %v2735, %v2734
        %v2751 = vpack.c.bf16 %v2737, %v2736
        %v2752 = vpack.c.bf16 %v2739, %v2738
        %v2753 = vpack.c.bf16 %v2741, %v2740
        %v2754 = vpack.c.bf16 %v2743, %v2742
        %v2755 = vpack.c.bf16 %v2745, %v2744
        %v2756 = vld [vmem:[%s9] sm:$0xf]
        %v2757 = vld [vmem:[%s9 + $0x4] sm:$0xf]
        %v2758 = vld [vmem:[%s9 + $0x8] sm:$0xf]
        %v2759 = vld [vmem:[%s9 + $0xc] sm:$0xf]
        %v2760 = vld [vmem:[%s9 + $0x10] sm:$0xf]
        %v2761 = vld [vmem:[%s9 + $0x14] sm:$0xf]
        %v2762 = vld [vmem:[%s9 + $0x18] sm:$0xf]
        %v2763 = vld [vmem:[%s9 + $0x1c] sm:$0xf]
        %v2764 = vld [vmem:[%s9 + $0x20] sm:$0xf]
        %v2765 = vld [vmem:[%s9 + $0x24] sm:$0xf]
        %v2766 = vld [vmem:[%s9 + $0x28] sm:$0xf]
        %v2767 = vld [vmem:[%s9 + $0x2c] sm:$0xf]
        %v2768 = vld [vmem:[%s9 + $0x30] sm:$0xf]
        %v2769 = vld [vmem:[%s9 + $0x34] sm:$0xf]
        %v2770 = vld [vmem:[%s9 + $0x38] sm:$0xf]
        %v2771 = vld [vmem:[%s9 + $0x3c] sm:$0xf]
        %v2788 = vunpack.c.l.b16 %v2756
        %v2789 = vunpack.c.l.b16 %v2757
        %v2790 = vunpack.c.l.b16 %v2758
        %v2791 = vunpack.c.l.b16 %v2759
        %v2792 = vunpack.c.l.b16 %v2760
        %v2793 = vunpack.c.l.b16 %v2761
        %v2794 = vunpack.c.l.b16 %v2762
        %v2795 = vunpack.c.l.b16 %v2763
        %v2796 = vunpack.c.l.b16 %v2764
        %v2797 = vunpack.c.l.b16 %v2765
        %v2798 = vunpack.c.l.b16 %v2766
        %v2799 = vunpack.c.l.b16 %v2767
        %v2800 = vunpack.c.l.b16 %v2768
        %v2801 = vunpack.c.l.b16 %v2769
        %v2802 = vunpack.c.l.b16 %v2770
        %v2803 = vunpack.c.l.b16 %v2771
        %v2804 = vpack.c.b16 %v2789, %v2788
        %v2805 = vpack.c.b16 %v2791, %v2790
        %v2806 = vpack.c.b16 %v2793, %v2792
        %v2807 = vpack.c.b16 %v2795, %v2794
        %v2808 = vpack.c.b16 %v2797, %v2796
        %v2809 = vpack.c.b16 %v2799, %v2798
        %v2810 = vpack.c.b16 %v2801, %v2800
        %v2811 = vpack.c.b16 %v2803, %v2802
        %2820 = vmatprep.subr.bf16.mxu0 0
        %2821 = vmatpush1.bf16.msra.mxu0 %v2804
        %2822 = vmatprep.subr.bf16.mxu0 0
        %2823 = vmatpush1.bf16.msra.mxu0 %v2805
        %2824 = vmatprep.subr.bf16.mxu0 0
        %2825 = vmatpush1.bf16.msra.mxu0 %v2806
        %2826 = vmatprep.subr.bf16.mxu0 0
        %2827 = vmatpush1.bf16.msra.mxu0 %v2807
        %2828 = vmatprep.subr.bf16.mxu0 0
        %2829 = vmatpush1.bf16.msra.mxu0 %v2808
        %2830 = vmatprep.subr.bf16.mxu0 0
        %2831 = vmatpush1.bf16.msra.mxu0 %v2809
        %2832 = vmatprep.subr.bf16.mxu0 0
        %2833 = vmatpush1.bf16.msra.mxu0 %v2810
        %2834 = vmatprep.subr.bf16.mxu0 0
        %2835 = vmatpush1.bf16.msra.mxu0 %v2811
        %2836 = vmatprep.subr.bf16.mxu0 0
        %2837 = vmatpush1.bf16.msra.mxu0 0
        %2838 = vmatprep.subr.bf16.mxu0 0
        %2839 = vmatpush1.bf16.msra.mxu0 0
        %2840 = vmatprep.subr.bf16.mxu0 0
        %2841 = vmatpush1.bf16.msra.mxu0 0
        %2842 = vmatprep.subr.bf16.mxu0 0
        %2843 = vmatpush1.bf16.msra.mxu0 0
        %2844 = vmatprep.subr.bf16.mxu0 0
        %2845 = vmatpush1.bf16.msra.mxu0 0
        %2846 = vmatprep.subr.bf16.mxu0 0
        %2847 = vmatpush1.bf16.msra.mxu0 0
        %2848 = vmatprep.subr.bf16.mxu0 0
        %2849 = vmatpush1.bf16.msra.mxu0 0
        %2850 = vmatprep.subr.bf16.mxu0 0
        %2851 = vmatpush1.bf16.msra.mxu0 0
        %2852 = vmatprep.mubr.bf16.mxu0 0
        %2853 = vmatmul.mubr.bf16.gmra.mrb[0].mxu0 %v2746
        %v2854 = vpop.f32.mrb[0].mxu0
        %v2855 = vadd.f32 0.0, %v2854
        %v2856 = vpop.f32.mrb[0].mxu0
        %v2857 = vpop.f32.mrb[0].mxu0
        %v2858 = vadd.f32 0.0, %v2857
        %v2859 = vpop.f32.mrb[0].mxu0
        %2860 = vmatprep.mubr.bf16.mxu0 0
        %2861 = vmatmul.mubr.bf16.gmra.mrb[0].mxu0 %v2747
        %v2862 = vpop.f32.mrb[0].mxu0
        %v2863 = vadd.f32 0.0, %v2862
        %v2864 = vpop.f32.mrb[0].mxu0
        %v2865 = vpop.f32.mrb[0].mxu0
        %v2866 = vadd.f32 0.0, %v2865
        %v2867 = vpop.f32.mrb[0].mxu0
        %2868 = vmatprep.mubr.bf16.mxu0 0
        %2869 = vmatmul.mubr.bf16.gmra.mrb[0].mxu0 %v2748
        %v2870 = vpop.f32.mrb[0].mxu0
        %v2871 = vadd.f32 0.0, %v2870
        %v2872 = vpop.f32.mrb[0].mxu0
        %v2873 = vpop.f32.mrb[0].mxu0
        %v2874 = vadd.f32 0.0, %v2873
        %v2875 = vpop.f32.mrb[0].mxu0
        %2876 = vmatprep.mubr.bf16.mxu0 0
        %2877 = vmatmul.mubr.bf16.gmra.mrb[0].mxu0 %v2749
        %v2878 = vpop.f32.mrb[0].mxu0
        %v2879 = vadd.f32 0.0, %v2878
        %v2880 = vpop.f32.mrb[0].mxu0
        %v2881 = vpop.f32.mrb[0].mxu0
        %v2882 = vadd.f32 0.0, %v2881
        %v2883 = vpop.f32.mrb[0].mxu0
        %2884 = vmatprep.mubr.bf16.mxu0 0
        %2885 = vmatmul.mubr.bf16.gmra.mrb[0].mxu0 %v2750
        %v2886 = vpop.f32.mrb[0].mxu0
        %v2887 = vadd.f32 0.0, %v2886
        %v2888 = vpop.f32.mrb[0].mxu0
        %v2889 = vpop.f32.mrb[0].mxu0
        %v2890 = vadd.f32 0.0, %v2889
        %v2891 = vpop.f32.mrb[0].mxu0
        %2892 = vmatprep.mubr.bf16.mxu0 0
        %2893 = vmatmul.mubr.bf16.gmra.mrb[0].mxu0 %v2751
        %v2894 = vpop.f32.mrb[0].mxu0
        %v2895 = vadd.f32 0.0, %v2894
        %v2896 = vpop.f32.mrb[0].mxu0
        %v2897 = vpop.f32.mrb[0].mxu0
        %v2898 = vadd.f32 0.0, %v2897
        %v2899 = vpop.f32.mrb[0].mxu0
        %2900 = vmatprep.mubr.bf16.mxu0 0
        %2901 = vmatmul.mubr.bf16.gmra.mrb[0].mxu0 %v2752
        %v2902 = vpop.f32.mrb[0].mxu0
        %v2903 = vadd.f32 0.0, %v2902
        %v2904 = vpop.f32.mrb[0].mxu0
        %v2905 = vpop.f32.mrb[0].mxu0
        %v2906 = vadd.f32 0.0, %v2905
        %v2907 = vpop.f32.mrb[0].mxu0
        %2908 = vmatprep.mubr.bf16.mxu0 0
        %2909 = vmatmul.mubr.bf16.gmra.mrb[0].mxu0 %v2753
        %v2910 = vpop.f32.mrb[0].mxu0
        %v2911 = vadd.f32 0.0, %v2910
        %v2912 = vpop.f32.mrb[0].mxu0
        %v2913 = vpop.f32.mrb[0].mxu0
        %v2914 = vadd.f32 0.0, %v2913
        %v2915 = vpop.f32.mrb[0].mxu0
        %2916 = vmatprep.mubr.bf16.mxu0 0
        %2917 = vmatmul.mubr.bf16.gmra.mrb[0].mxu0 %v2754
        %v2918 = vpop.f32.mrb[0].mxu0
        %v2919 = vadd.f32 0.0, %v2918
        %v2920 = vpop.f32.mrb[0].mxu0
        %v2921 = vpop.f32.mrb[0].mxu0
        %v2922 = vadd.f32 0.0, %v2921
        %v2923 = vpop.f32.mrb[0].mxu0
        %2924 = vmatprep.mubr.bf16.mxu0 0
        %2925 = vmatmul.mubr.bf16.gmra.mrb[0].mxu0 %v2755
        %v2926 = vpop.f32.mrb[0].mxu0
        %v2927 = vadd.f32 0.0, %v2926
        %v2928 = vpop.f32.mrb[0].mxu0
        %v2929 = vpop.f32.mrb[0].mxu0
        %v2930 = vadd.f32 0.0, %v2929
        %v2931 = vpop.f32.mrb[0].mxu0
        %2932 = vdwg.mxu0
        %s2933 = smul.u32 %s32, 8
        %s2934 = ssub.s32 %s2933, 1
        %v2935 = vstv %s2934
        %v2936 = vadd.s32 %v2935, 1
        %v2937 = vadd.s32 %v2935, 2
        %v2938 = vadd.s32 %v2935, 3
        %v2939 = vadd.s32 %v2935, 4
        %v2940 = vadd.s32 %v2935, 5
        %v2941 = vadd.s32 %v2935, 6
        %v2942 = vadd.s32 %v2935, 7
        %v2943 = vadd.s32 %v2935, 8
        %v2944 = vadd.s32 %v2935, 9
        %vm2945 = vcmp.ge.s32.totalorder %v2935, 0
        %vm2946 = vcmp.ge.s32.totalorder %v2936, 0
        %vm2947 = vcmp.ge.s32.totalorder %v2937, 0
        %vm2948 = vcmp.ge.s32.totalorder %v2938, 0
        %vm2949 = vcmp.ge.s32.totalorder %v2939, 0
        %vm2950 = vcmp.ge.s32.totalorder %v2940, 0
        %vm2951 = vcmp.ge.s32.totalorder %v2941, 0
        %vm2952 = vcmp.ge.s32.totalorder %v2942, 0
        %vm2953 = vcmp.ge.s32.totalorder %v2943, 0
        %vm2954 = vcmp.ge.s32.totalorder %v2944, 0
        %vm2955 = vcmp.lt.s32.totalorder %v2935, 16
        %vm2956 = vcmp.lt.s32.totalorder %v2936, 16
        %vm2957 = vcmp.lt.s32.totalorder %v2937, 16
        %vm2958 = vcmp.lt.s32.totalorder %v2938, 16
        %vm2959 = vcmp.lt.s32.totalorder %v2939, 16
        %vm2960 = vcmp.lt.s32.totalorder %v2940, 16
        %vm2961 = vcmp.lt.s32.totalorder %v2941, 16
        %vm2962 = vcmp.lt.s32.totalorder %v2942, 16
        %vm2963 = vcmp.lt.s32.totalorder %v2943, 16
        %vm2964 = vcmp.lt.s32.totalorder %v2944, 16
        %vm2965 = vmand %vm2945, %vm2955
        %vm2966 = vmand %vm2946, %vm2956
        %vm2967 = vmand %vm2947, %vm2957
        %vm2968 = vmand %vm2948, %vm2958
        %vm2969 = vmand %vm2949, %vm2959
        %vm2970 = vmand %vm2950, %vm2960
        %vm2971 = vmand %vm2951, %vm2961
        %vm2972 = vmand %vm2952, %vm2962
        %vm2973 = vmand %vm2953, %vm2963
        %vm2974 = vmand %vm2954, %vm2964
        %v2975 = vsel %vm2965, 1, 0
        %v2976 = vsel %vm2966, 1, 0
        %v2977 = vsel %vm2967, 1, 0
        %v2978 = vsel %vm2968, 1, 0
        %v2979 = vsel %vm2969, 1, 0
        %v2980 = vsel %vm2970, 1, 0
        %v2981 = vsel %vm2971, 1, 0
        %v2982 = vsel %vm2972, 1, 0
        %v2983 = vsel %vm2973, 1, 0
        %v2984 = vsel %vm2974, 1, 0
        %vm2985 = vcmp.eq.s32.totalorder %v2975, 1
        %vm2986 = vcmp.eq.s32.totalorder %v2976, 1
        %vm2987 = vcmp.eq.s32.totalorder %v2977, 1
        %vm2988 = vcmp.eq.s32.totalorder %v2978, 1
        %vm2989 = vcmp.eq.s32.totalorder %v2979, 1
        %vm2990 = vcmp.eq.s32.totalorder %v2980, 1
        %vm2991 = vcmp.eq.s32.totalorder %v2981, 1
        %vm2992 = vcmp.eq.s32.totalorder %v2982, 1
        %vm2993 = vcmp.eq.s32.totalorder %v2983, 1
        %vm2994 = vcmp.eq.s32.totalorder %v2984, 1
        %v2995 = vsel %vm2985, %v2855, 0.0
        %v2996 = vsel %vm2985, %v2858, 0.0
        %v2997 = vsel %vm2986, %v2863, 0.0
        %v2998 = vsel %vm2986, %v2866, 0.0
        %v2999 = vsel %vm2987, %v2871, 0.0
        %v3000 = vsel %vm2987, %v2874, 0.0
        %v3001 = vsel %vm2988, %v2879, 0.0
        %v3002 = vsel %vm2988, %v2882, 0.0
        %v3003 = vsel %vm2989, %v2887, 0.0
        %v3004 = vsel %vm2989, %v2890, 0.0
        %v3005 = vsel %vm2990, %v2895, 0.0
        %v3006 = vsel %vm2990, %v2898, 0.0
        %v3007 = vsel %vm2991, %v2903, 0.0
        %v3008 = vsel %vm2991, %v2906, 0.0
        %v3009 = vsel %vm2992, %v2911, 0.0
        %v3010 = vsel %vm2992, %v2914, 0.0
        %v3011 = vsel %vm2993, %v2919, 0.0
        %v3012 = vsel %vm2993, %v2922, 0.0
        %v3013 = vsel %vm2994, %v2927, 0.0
        %v3014 = vsel %vm2994, %v2930, 0.0
        %3031 = vrot.lane.b32.xlu0 %v2995, 64
        %v3032 = vpop.permute.xlu0 %3031
        %3033 = vrot.lane.b32.xlu0 %v2996, 64
        %v3034 = vpop.permute.xlu0 %3033
        %3035 = vrot.lane.b32.xlu0 %v2997, 64
        %v3036 = vpop.permute.xlu0 %3035
        %3037 = vrot.lane.b32.xlu0 %v2998, 64
        %v3038 = vpop.permute.xlu0 %3037
        %3039 = vrot.lane.b32.xlu0 %v2999, 64
        %v3040 = vpop.permute.xlu0 %3039
        %3041 = vrot.lane.b32.xlu0 %v3000, 64
        %v3042 = vpop.permute.xlu0 %3041
        %3043 = vrot.lane.b32.xlu0 %v3001, 64
        %v3044 = vpop.permute.xlu0 %3043
        %3045 = vrot.lane.b32.xlu0 %v3002, 64
        %v3046 = vpop.permute.xlu0 %3045
        %3047 = vrot.lane.b32.xlu0 %v3003, 64
        %v3048 = vpop.permute.xlu0 %3047
        %3049 = vrot.lane.b32.xlu0 %v3004, 64
        %v3050 = vpop.permute.xlu0 %3049
        %3051 = vrot.lane.b32.xlu0 %v3005, 64
        %v3052 = vpop.permute.xlu0 %3051
        %3053 = vrot.lane.b32.xlu0 %v3006, 64
        %v3054 = vpop.permute.xlu0 %3053
        %3055 = vrot.lane.b32.xlu0 %v3007, 64
        %v3056 = vpop.permute.xlu0 %3055
        %3057 = vrot.lane.b32.xlu0 %v3008, 64
        %v3058 = vpop.permute.xlu0 %3057
        %3059 = vrot.lane.b32.xlu0 %v3009, 64
        %v3060 = vpop.permute.xlu0 %3059
        %3061 = vrot.lane.b32.xlu0 %v3010, 64
        %v3062 = vpop.permute.xlu0 %3061
        %v3079 = vadd.f32 %v2997, %v3032
        %v3080 = vadd.f32 %v2998, %v3034
        %v3081 = vadd.f32 %v2999, %v3036
        %v3082 = vadd.f32 %v3000, %v3038
        %v3083 = vadd.f32 %v3001, %v3040
        %v3084 = vadd.f32 %v3002, %v3042
        %v3085 = vadd.f32 %v3003, %v3044
        %v3086 = vadd.f32 %v3004, %v3046
        %v3087 = vadd.f32 %v3005, %v3048
        %v3088 = vadd.f32 %v3006, %v3050
        %v3089 = vadd.f32 %v3007, %v3052
        %v3090 = vadd.f32 %v3008, %v3054
        %v3091 = vadd.f32 %v3009, %v3056
        %v3092 = vadd.f32 %v3010, %v3058
        %v3093 = vadd.f32 %v3011, %v3060
        %v3094 = vadd.f32 %v3012, %v3062
        %3099 = vrot.lane.b32.xlu0 %v3011, 64
        %v3100 = vpop.permute.xlu0 %3099
        %3101 = vrot.lane.b32.xlu0 %v3012, 64
        %v3102 = vpop.permute.xlu0 %3101
        %3103 = vrot.lane.b32.xlu0 %v3013, 64
        %v3104 = vpop.permute.xlu0 %3103
        %3105 = vrot.lane.b32.xlu0 %v3014, 64
        %v3106 = vpop.permute.xlu0 %3105
        %v3111 = vadd.f32 %v2997, %v3040
        %v3112 = vadd.f32 %v2998, %v3042
        %v3113 = vadd.f32 %v2999, %v3044
        %v3114 = vadd.f32 %v3000, %v3046
        %v3115 = vadd.f32 %v3001, %v3048
        %v3116 = vadd.f32 %v3002, %v3050
        %v3117 = vadd.f32 %v3003, %v3052
        %v3118 = vadd.f32 %v3004, %v3054
        %v3119 = vadd.f32 %v3005, %v3056
        %v3120 = vadd.f32 %v3006, %v3058
        %v3121 = vadd.f32 %v3007, %v3060
        %v3122 = vadd.f32 %v3008, %v3062
        %v3123 = vadd.f32 %v3009, %v3100
        %v3124 = vadd.f32 %v3010, %v3102
        %v3125 = vadd.f32 %v3011, %v3104
        %v3126 = vadd.f32 %v3012, %v3106
        %vm3143 = vcmask 1040384
        %v3144 = vrot.slane %v3079, 7
        %v3145 = vrot.slane %v3080, 7
        %v3146 = vsel %vm3143, %v3144, %v3145
        %v3147 = vrot.slane %v3081, 7
        %v3148 = vrot.slane %v3082, 7
        %v3149 = vsel %vm3143, %v3147, %v3148
        %v3150 = vrot.slane %v3083, 7
        %v3151 = vrot.slane %v3084, 7
        %v3152 = vsel %vm3143, %v3150, %v3151
        %v3153 = vrot.slane %v3085, 7
        %v3154 = vrot.slane %v3086, 7
        %v3155 = vsel %vm3143, %v3153, %v3154
        %v3156 = vrot.slane %v3087, 7
        %v3157 = vrot.slane %v3088, 7
        %v3158 = vsel %vm3143, %v3156, %v3157
        %v3159 = vrot.slane %v3089, 7
        %v3160 = vrot.slane %v3090, 7
        %v3161 = vsel %vm3143, %v3159, %v3160
        %v3162 = vrot.slane %v3091, 7
        %v3163 = vrot.slane %v3092, 7
        %v3164 = vsel %vm3143, %v3162, %v3163
        %v3165 = vrot.slane %v3093, 7
        %v3166 = vrot.slane %v3094, 7
        %v3167 = vsel %vm3143, %v3165, %v3166
        %3168 = vrot.lane.b32.xlu0 %v3144, 72
        %v3169 = vpop.permute.xlu0 %3168
        %3170 = vrot.lane.b32.xlu0 %v3146, 72
        %v3171 = vpop.permute.xlu0 %3170
        %3172 = vrot.lane.b32.xlu0 %v3147, 72
        %v3173 = vpop.permute.xlu0 %3172
        %3174 = vrot.lane.b32.xlu0 %v3149, 72
        %v3175 = vpop.permute.xlu0 %3174
        %3176 = vrot.lane.b32.xlu0 %v3150, 72
        %v3177 = vpop.permute.xlu0 %3176
        %3178 = vrot.lane.b32.xlu0 %v3152, 72
        %v3179 = vpop.permute.xlu0 %3178
        %3180 = vrot.lane.b32.xlu0 %v3153, 72
        %v3181 = vpop.permute.xlu0 %3180
        %3182 = vrot.lane.b32.xlu0 %v3155, 72
        %v3183 = vpop.permute.xlu0 %3182
        %3184 = vrot.lane.b32.xlu0 %v3156, 72
        %v3185 = vpop.permute.xlu0 %3184
        %3186 = vrot.lane.b32.xlu0 %v3158, 72
        %v3187 = vpop.permute.xlu0 %3186
        %3188 = vrot.lane.b32.xlu0 %v3159, 72
        %v3189 = vpop.permute.xlu0 %3188
        %3190 = vrot.lane.b32.xlu0 %v3161, 72
        %v3191 = vpop.permute.xlu0 %3190
        %3192 = vrot.lane.b32.xlu0 %v3162, 72
        %v3193 = vpop.permute.xlu0 %3192
        %3194 = vrot.lane.b32.xlu0 %v3164, 72
        %v3195 = vpop.permute.xlu0 %3194
        %3196 = vrot.lane.b32.xlu0 %v3165, 72
        %v3197 = vpop.permute.xlu0 %3196
        %3198 = vrot.lane.b32.xlu0 %v3167, 72
        %v3199 = vpop.permute.xlu0 %3198
        %v3208 = vsel %vm3143, 0.0, %v3169
        %v3209 = vsel %vm3143, 0.0, %v3173
        %v3210 = vsel %vm3143, 0.0, %v3177
        %v3211 = vsel %vm3143, 0.0, %v3181
        %v3212 = vsel %vm3143, 0.0, %v3185
        %v3213 = vsel %vm3143, 0.0, %v3189
        %v3214 = vsel %vm3143, 0.0, %v3193
        %v3215 = vsel %vm3143, 0.0, %v3197
        %3224 = vrot.lane.b32.xlu0 %v3208, 40
        %v3225 = vpop.permute.xlu0 %3224
        %3226 = vrot.lane.b32.xlu0 %v3171, 40
        %v3227 = vpop.permute.xlu0 %3226
        %3228 = vrot.lane.b32.xlu0 %v3209, 40
        %v3229 = vpop.permute.xlu0 %3228
        %3230 = vrot.lane.b32.xlu0 %v3175, 40
        %v3231 = vpop.permute.xlu0 %3230
        %3232 = vrot.lane.b32.xlu0 %v3210, 40
        %v3233 = vpop.permute.xlu0 %3232
        %3234 = vrot.lane.b32.xlu0 %v3179, 40
        %v3235 = vpop.permute.xlu0 %3234
        %3236 = vrot.lane.b32.xlu0 %v3211, 40
        %v3237 = vpop.permute.xlu0 %3236
        %3238 = vrot.lane.b32.xlu0 %v3183, 40
        %v3239 = vpop.permute.xlu0 %3238
        %3240 = vrot.lane.b32.xlu0 %v3212, 40
        %v3241 = vpop.permute.xlu0 %3240
        %3242 = vrot.lane.b32.xlu0 %v3187, 40
        %v3243 = vpop.permute.xlu0 %3242
        %3244 = vrot.lane.b32.xlu0 %v3213, 40
        %v3245 = vpop.permute.xlu0 %3244
        %3246 = vrot.lane.b32.xlu0 %v3191, 40
        %v3247 = vpop.permute.xlu0 %3246
        %3248 = vrot.lane.b32.xlu0 %v3214, 40
        %v3249 = vpop.permute.xlu0 %3248
        %3250 = vrot.lane.b32.xlu0 %v3195, 40
        %v3251 = vpop.permute.xlu0 %3250
        %3252 = vrot.lane.b32.xlu0 %v3215, 40
        %v3253 = vpop.permute.xlu0 %3252
        %3254 = vrot.lane.b32.xlu0 %v3199, 40
        %v3255 = vpop.permute.xlu0 %3254
        %v3272 = vadd.f32 %v3079, %v3225
        %v3273 = vadd.f32 %v3080, %v3227
        %v3274 = vadd.f32 %v3081, %v3229
        %v3275 = vadd.f32 %v3082, %v3231
        %v3276 = vadd.f32 %v3083, %v3233
        %v3277 = vadd.f32 %v3084, %v3235
        %v3278 = vadd.f32 %v3085, %v3237
        %v3279 = vadd.f32 %v3086, %v3239
        %v3280 = vadd.f32 %v3087, %v3241
        %v3281 = vadd.f32 %v3088, %v3243
        %v3282 = vadd.f32 %v3089, %v3245
        %v3283 = vadd.f32 %v3090, %v3247
        %v3284 = vadd.f32 %v3091, %v3249
        %v3285 = vadd.f32 %v3092, %v3251
        %v3286 = vadd.f32 %v3093, %v3253
        %v3287 = vadd.f32 %v3094, %v3255
        %vm3288 = vcmask 1046528
        %v3289 = vrot.slane %v3079, 1
        %v3290 = vrot.slane %v3080, 1
        %v3291 = vsel %vm3288, %v3289, %v3290
        %v3292 = vrot.slane %v3081, 1
        %v3293 = vrot.slane %v3082, 1
        %v3294 = vsel %vm3288, %v3292, %v3293
        %v3295 = vrot.slane %v3083, 1
        %v3296 = vrot.slane %v3084, 1
        %v3297 = vsel %vm3288, %v3295, %v3296
        %v3298 = vrot.slane %v3085, 1
        %v3299 = vrot.slane %v3086, 1
        %v3300 = vsel %vm3288, %v3298, %v3299
        %v3301 = vrot.slane %v3087, 1
        %v3302 = vrot.slane %v3088, 1
        %v3303 = vsel %vm3288, %v3301, %v3302
        %v3304 = vrot.slane %v3089, 1
        %v3305 = vrot.slane %v3090, 1
        %v3306 = vsel %vm3288, %v3304, %v3305
        %v3307 = vrot.slane %v3091, 1
        %v3308 = vrot.slane %v3092, 1
        %v3309 = vsel %vm3288, %v3307, %v3308
        %v3310 = vrot.slane %v3093, 1
        %v3311 = vrot.slane %v3094, 1
        %v3312 = vsel %vm3288, %v3310, %v3311
        %v3321 = vsel %vm3288, %v3290, 0.0
        %v3322 = vsel %vm3288, %v3293, 0.0
        %v3323 = vsel %vm3288, %v3296, 0.0
        %v3324 = vsel %vm3288, %v3299, 0.0
        %v3325 = vsel %vm3288, %v3302, 0.0
        %v3326 = vsel %vm3288, %v3305, 0.0
        %v3327 = vsel %vm3288, %v3308, 0.0
        %v3328 = vsel %vm3288, %v3311, 0.0
        %3337 = vrot.lane.b32.xlu0 %v3291, 16
        %v3338 = vpop.permute.xlu0 %3337
        %3339 = vrot.lane.b32.xlu0 %v3321, 16
        %v3340 = vpop.permute.xlu0 %3339
        %3341 = vrot.lane.b32.xlu0 %v3294, 16
        %v3342 = vpop.permute.xlu0 %3341
        %3343 = vrot.lane.b32.xlu0 %v3322, 16
        %v3344 = vpop.permute.xlu0 %3343
        %3345 = vrot.lane.b32.xlu0 %v3297, 16
        %v3346 = vpop.permute.xlu0 %3345
        %3347 = vrot.lane.b32.xlu0 %v3323, 16
        %v3348 = vpop.permute.xlu0 %3347
        %3349 = vrot.lane.b32.xlu0 %v3300, 16
        %v3350 = vpop.permute.xlu0 %3349
        %3351 = vrot.lane.b32.xlu0 %v3324, 16
        %v3352 = vpop.permute.xlu0 %3351
        %3353 = vrot.lane.b32.xlu0 %v3303, 16
        %v3354 = vpop.permute.xlu0 %3353
        %3355 = vrot.lane.b32.xlu0 %v3325, 16
        %v3356 = vpop.permute.xlu0 %3355
        %3357 = vrot.lane.b32.xlu0 %v3306, 16
        %v3358 = vpop.permute.xlu0 %3357
        %3359 = vrot.lane.b32.xlu0 %v3326, 16
        %v3360 = vpop.permute.xlu0 %3359
        %3361 = vrot.lane.b32.xlu0 %v3309, 16
        %v3362 = vpop.permute.xlu0 %3361
        %3363 = vrot.lane.b32.xlu0 %v3327, 16
        %v3364 = vpop.permute.xlu0 %3363
        %3365 = vrot.lane.b32.xlu0 %v3312, 16
        %v3366 = vpop.permute.xlu0 %3365
        %3367 = vrot.lane.b32.xlu0 %v3328, 16
        %v3368 = vpop.permute.xlu0 %3367
        %v3385 = vadd.f32 %v3079, %v3338
        %v3386 = vadd.f32 %v3080, %v3340
        %v3387 = vadd.f32 %v3081, %v3342
        %v3388 = vadd.f32 %v3082, %v3344
        %v3389 = vadd.f32 %v3083, %v3346
        %v3390 = vadd.f32 %v3084, %v3348
        %v3391 = vadd.f32 %v3085, %v3350
        %v3392 = vadd.f32 %v3086, %v3352
        %v3393 = vadd.f32 %v3087, %v3354
        %v3394 = vadd.f32 %v3088, %v3356
        %v3395 = vadd.f32 %v3089, %v3358
        %v3396 = vadd.f32 %v3090, %v3360
        %v3397 = vadd.f32 %v3091, %v3362
        %v3398 = vadd.f32 %v3092, %v3364
        %v3399 = vadd.f32 %v3093, %v3366
        %v3400 = vadd.f32 %v3094, %v3368
        %v3417 = vrot.slane %v3111, 7
        %v3418 = vrot.slane %v3112, 7
        %v3419 = vsel %vm3143, %v3417, %v3418
        %v3420 = vrot.slane %v3113, 7
        %v3421 = vrot.slane %v3114, 7
        %v3422 = vsel %vm3143, %v3420, %v3421
        %v3423 = vrot.slane %v3115, 7
        %v3424 = vrot.slane %v3116, 7
        %v3425 = vsel %vm3143, %v3423, %v3424
        %v3426 = vrot.slane %v3117, 7
        %v3427 = vrot.slane %v3118, 7
        %v3428 = vsel %vm3143, %v3426, %v3427
        %v3429 = vrot.slane %v3119, 7
        %v3430 = vrot.slane %v3120, 7
        %v3431 = vsel %vm3143, %v3429, %v3430
        %v3432 = vrot.slane %v3121, 7
        %v3433 = vrot.slane %v3122, 7
        %v3434 = vsel %vm3143, %v3432, %v3433
        %v3435 = vrot.slane %v3123, 7
        %v3436 = vrot.slane %v3124, 7
        %v3437 = vsel %vm3143, %v3435, %v3436
        %v3438 = vrot.slane %v3125, 7
        %v3439 = vrot.slane %v3126, 7
        %v3440 = vsel %vm3143, %v3438, %v3439
        %3441 = vrot.lane.b32.xlu0 %v3417, 40
        %v3442 = vpop.permute.xlu0 %3441
        %3443 = vrot.lane.b32.xlu0 %v3419, 40
        %v3444 = vpop.permute.xlu0 %3443
        %3445 = vrot.lane.b32.xlu0 %v3420, 40
        %v3446 = vpop.permute.xlu0 %3445
        %3447 = vrot.lane.b32.xlu0 %v3422, 40
        %v3448 = vpop.permute.xlu0 %3447
        %3449 = vrot.lane.b32.xlu0 %v3423, 40
        %v3450 = vpop.permute.xlu0 %3449
        %3451 = vrot.lane.b32.xlu0 %v3425, 40
        %v3452 = vpop.permute.xlu0 %3451
        %3453 = vrot.lane.b32.xlu0 %v3426, 40
        %v3454 = vpop.permute.xlu0 %3453
        %3455 = vrot.lane.b32.xlu0 %v3428, 40
        %v3456 = vpop.permute.xlu0 %3455
        %3457 = vrot.lane.b32.xlu0 %v3429, 40
        %v3458 = vpop.permute.xlu0 %3457
        %3459 = vrot.lane.b32.xlu0 %v3431, 40
        %v3460 = vpop.permute.xlu0 %3459
        %3461 = vrot.lane.b32.xlu0 %v3432, 40
        %v3462 = vpop.permute.xlu0 %3461
        %3463 = vrot.lane.b32.xlu0 %v3434, 40
        %v3464 = vpop.permute.xlu0 %3463
        %3465 = vrot.lane.b32.xlu0 %v3435, 40
        %v3466 = vpop.permute.xlu0 %3465
        %3467 = vrot.lane.b32.xlu0 %v3437, 40
        %v3468 = vpop.permute.xlu0 %3467
        %3469 = vrot.lane.b32.xlu0 %v3438, 40
        %v3470 = vpop.permute.xlu0 %3469
        %3471 = vrot.lane.b32.xlu0 %v3440, 40
        %v3472 = vpop.permute.xlu0 %3471
        %v3481 = vsel %vm3143, 0.0, %v3442
        %v3482 = vsel %vm3143, 0.0, %v3446
        %v3483 = vsel %vm3143, 0.0, %v3450
        %v3484 = vsel %vm3143, 0.0, %v3454
        %v3485 = vsel %vm3143, 0.0, %v3458
        %v3486 = vsel %vm3143, 0.0, %v3462
        %v3487 = vsel %vm3143, 0.0, %v3466
        %v3488 = vsel %vm3143, 0.0, %v3470
        %3497 = vrot.lane.b32.xlu0 %v3481, 72
        %v3498 = vpop.permute.xlu0 %3497
        %3499 = vrot.lane.b32.xlu0 %v3444, 72
        %v3500 = vpop.permute.xlu0 %3499
        %3501 = vrot.lane.b32.xlu0 %v3482, 72
        %v3502 = vpop.permute.xlu0 %3501
        %3503 = vrot.lane.b32.xlu0 %v3448, 72
        %v3504 = vpop.permute.xlu0 %3503
        %3505 = vrot.lane.b32.xlu0 %v3483, 72
        %v3506 = vpop.permute.xlu0 %3505
        %3507 = vrot.lane.b32.xlu0 %v3452, 72
        %v3508 = vpop.permute.xlu0 %3507
        %3509 = vrot.lane.b32.xlu0 %v3484, 72
        %v3510 = vpop.permute.xlu0 %3509
        %3511 = vrot.lane.b32.xlu0 %v3456, 72
        %v3512 = vpop.permute.xlu0 %3511
        %3513 = vrot.lane.b32.xlu0 %v3485, 72
        %v3514 = vpop.permute.xlu0 %3513
        %3515 = vrot.lane.b32.xlu0 %v3460, 72
        %v3516 = vpop.permute.xlu0 %3515
        %3517 = vrot.lane.b32.xlu0 %v3486, 72
        %v3518 = vpop.permute.xlu0 %3517
        %3519 = vrot.lane.b32.xlu0 %v3464, 72
        %v3520 = vpop.permute.xlu0 %3519
        %3521 = vrot.lane.b32.xlu0 %v3487, 72
        %v3522 = vpop.permute.xlu0 %3521
        %3523 = vrot.lane.b32.xlu0 %v3468, 72
        %v3524 = vpop.permute.xlu0 %3523
        %3525 = vrot.lane.b32.xlu0 %v3488, 72
        %v3526 = vpop.permute.xlu0 %3525
        %3527 = vrot.lane.b32.xlu0 %v3472, 72
        %v3528 = vpop.permute.xlu0 %3527
        %v3545 = vadd.f32 %v3111, %v3498
        %v3546 = vadd.f32 %v3112, %v3500
        %v3547 = vadd.f32 %v3113, %v3502
        %v3548 = vadd.f32 %v3114, %v3504
        %v3549 = vadd.f32 %v3115, %v3506
        %v3550 = vadd.f32 %v3116, %v3508
        %v3551 = vadd.f32 %v3117, %v3510
        %v3552 = vadd.f32 %v3118, %v3512
        %v3553 = vadd.f32 %v3119, %v3514
        %v3554 = vadd.f32 %v3120, %v3516
        %v3555 = vadd.f32 %v3121, %v3518
        %v3556 = vadd.f32 %v3122, %v3520
        %v3557 = vadd.f32 %v3123, %v3522
        %v3558 = vadd.f32 %v3124, %v3524
        %v3559 = vadd.f32 %v3125, %v3526
        %v3560 = vadd.f32 %v3126, %v3528
        %v3561 = vrot.slane %v3111, 1
        %v3562 = vrot.slane %v3112, 1
        %v3563 = vsel %vm3288, %v3561, %v3562
        %v3564 = vrot.slane %v3113, 1
        %v3565 = vrot.slane %v3114, 1
        %v3566 = vsel %vm3288, %v3564, %v3565
        %v3567 = vrot.slane %v3115, 1
        %v3568 = vrot.slane %v3116, 1
        %v3569 = vsel %vm3288, %v3567, %v3568
        %v3570 = vrot.slane %v3117, 1
        %v3571 = vrot.slane %v3118, 1
        %v3572 = vsel %vm3288, %v3570, %v3571
        %v3573 = vrot.slane %v3119, 1
        %v3574 = vrot.slane %v3120, 1
        %v3575 = vsel %vm3288, %v3573, %v3574
        %v3576 = vrot.slane %v3121, 1
        %v3577 = vrot.slane %v3122, 1
        %v3578 = vsel %vm3288, %v3576, %v3577
        %v3579 = vrot.slane %v3123, 1
        %v3580 = vrot.slane %v3124, 1
        %v3581 = vsel %vm3288, %v3579, %v3580
        %v3582 = vrot.slane %v3125, 1
        %v3583 = vrot.slane %v3126, 1
        %v3584 = vsel %vm3288, %v3582, %v3583
        %v3593 = vsel %vm3288, %v3562, 0.0
        %v3594 = vsel %vm3288, %v3565, 0.0
        %v3595 = vsel %vm3288, %v3568, 0.0
        %v3596 = vsel %vm3288, %v3571, 0.0
        %v3597 = vsel %vm3288, %v3574, 0.0
        %v3598 = vsel %vm3288, %v3577, 0.0
        %v3599 = vsel %vm3288, %v3580, 0.0
        %v3600 = vsel %vm3288, %v3583, 0.0
        %3609 = vrot.lane.b32.xlu0 %v3563, 16
        %v3610 = vpop.permute.xlu0 %3609
        %3611 = vrot.lane.b32.xlu0 %v3593, 16
        %v3612 = vpop.permute.xlu0 %3611
        %3613 = vrot.lane.b32.xlu0 %v3566, 16
        %v3614 = vpop.permute.xlu0 %3613
        %3615 = vrot.lane.b32.xlu0 %v3594, 16
        %v3616 = vpop.permute.xlu0 %3615
        %3617 = vrot.lane.b32.xlu0 %v3569, 16
        %v3618 = vpop.permute.xlu0 %3617
        %3619 = vrot.lane.b32.xlu0 %v3595, 16
        %v3620 = vpop.permute.xlu0 %3619
        %3621 = vrot.lane.b32.xlu0 %v3572, 16
        %v3622 = vpop.permute.xlu0 %3621
        %3623 = vrot.lane.b32.xlu0 %v3596, 16
        %v3624 = vpop.permute.xlu0 %3623
        %3625 = vrot.lane.b32.xlu0 %v3575, 16
        %v3626 = vpop.permute.xlu0 %3625
        %3627 = vrot.lane.b32.xlu0 %v3597, 16
        %v3628 = vpop.permute.xlu0 %3627
        %3629 = vrot.lane.b32.xlu0 %v3578, 16
        %v3630 = vpop.permute.xlu0 %3629
        %3631 = vrot.lane.b32.xlu0 %v3598, 16
        %v3632 = vpop.permute.xlu0 %3631
        %3633 = vrot.lane.b32.xlu0 %v3581, 16
        %v3634 = vpop.permute.xlu0 %3633
        %3635 = vrot.lane.b32.xlu0 %v3599, 16
        %v3636 = vpop.permute.xlu0 %3635
        %3637 = vrot.lane.b32.xlu0 %v3584, 16
        %v3638 = vpop.permute.xlu0 %3637
        %3639 = vrot.lane.b32.xlu0 %v3600, 16
        %v3640 = vpop.permute.xlu0 %3639
        %v3657 = vadd.f32 %v3111, %v3610
        %v3658 = vadd.f32 %v3112, %v3612
        %v3659 = vadd.f32 %v3113, %v3614
        %v3660 = vadd.f32 %v3114, %v3616
        %v3661 = vadd.f32 %v3115, %v3618
        %v3662 = vadd.f32 %v3116, %v3620
        %v3663 = vadd.f32 %v3117, %v3622
        %v3664 = vadd.f32 %v3118, %v3624
        %v3665 = vadd.f32 %v3119, %v3626
        %v3666 = vadd.f32 %v3120, %v3628
        %v3667 = vadd.f32 %v3121, %v3630
        %v3668 = vadd.f32 %v3122, %v3632
        %v3669 = vadd.f32 %v3123, %v3634
        %v3670 = vadd.f32 %v3124, %v3636
        %v3671 = vadd.f32 %v3125, %v3638
        %v3672 = vadd.f32 %v3126, %v3640
        %3689 = vrot.lane.b32.xlu0 %v3272, 88
        %v3690 = vpop.permute.xlu0 %3689
        %3691 = vrot.lane.b32.xlu0 %v3273, 88
        %v3692 = vpop.permute.xlu0 %3691
        %3693 = vrot.lane.b32.xlu0 %v3274, 88
        %v3694 = vpop.permute.xlu0 %3693
        %3695 = vrot.lane.b32.xlu0 %v3275, 88
        %v3696 = vpop.permute.xlu0 %3695
        %3697 = vrot.lane.b32.xlu0 %v3276, 88
        %v3698 = vpop.permute.xlu0 %3697
        %3699 = vrot.lane.b32.xlu0 %v3277, 88
        %v3700 = vpop.permute.xlu0 %3699
        %3701 = vrot.lane.b32.xlu0 %v3278, 88
        %v3702 = vpop.permute.xlu0 %3701
        %3703 = vrot.lane.b32.xlu0 %v3279, 88
        %v3704 = vpop.permute.xlu0 %3703
        %3705 = vrot.lane.b32.xlu0 %v3280, 88
        %v3706 = vpop.permute.xlu0 %3705
        %3707 = vrot.lane.b32.xlu0 %v3281, 88
        %v3708 = vpop.permute.xlu0 %3707
        %3709 = vrot.lane.b32.xlu0 %v3282, 88
        %v3710 = vpop.permute.xlu0 %3709
        %3711 = vrot.lane.b32.xlu0 %v3283, 88
        %v3712 = vpop.permute.xlu0 %3711
        %3713 = vrot.lane.b32.xlu0 %v3284, 88
        %v3714 = vpop.permute.xlu0 %3713
        %3715 = vrot.lane.b32.xlu0 %v3285, 88
        %v3716 = vpop.permute.xlu0 %3715
        %3717 = vrot.lane.b32.xlu0 %v3286, 88
        %v3718 = vpop.permute.xlu0 %3717
        %3719 = vrot.lane.b32.xlu0 %v3287, 88
        %v3720 = vpop.permute.xlu0 %3719
        %3753 = vrot.lane.b32.xlu0 %v3385, 88
        %v3754 = vpop.permute.xlu0 %3753
        %3755 = vrot.lane.b32.xlu0 %v3386, 88
        %v3756 = vpop.permute.xlu0 %3755
        %3757 = vrot.lane.b32.xlu0 %v3387, 88
        %v3758 = vpop.permute.xlu0 %3757
        %3759 = vrot.lane.b32.xlu0 %v3388, 88
        %v3760 = vpop.permute.xlu0 %3759
        %3761 = vrot.lane.b32.xlu0 %v3389, 88
        %v3762 = vpop.permute.xlu0 %3761
        %3763 = vrot.lane.b32.xlu0 %v3390, 88
        %v3764 = vpop.permute.xlu0 %3763
        %3765 = vrot.lane.b32.xlu0 %v3391, 88
        %v3766 = vpop.permute.xlu0 %3765
        %3767 = vrot.lane.b32.xlu0 %v3392, 88
        %v3768 = vpop.permute.xlu0 %3767
        %3769 = vrot.lane.b32.xlu0 %v3393, 88
        %v3770 = vpop.permute.xlu0 %3769
        %3771 = vrot.lane.b32.xlu0 %v3394, 88
        %v3772 = vpop.permute.xlu0 %3771
        %3773 = vrot.lane.b32.xlu0 %v3395, 88
        %v3774 = vpop.permute.xlu0 %3773
        %3775 = vrot.lane.b32.xlu0 %v3396, 88
        %v3776 = vpop.permute.xlu0 %3775
        %3777 = vrot.lane.b32.xlu0 %v3397, 88
        %v3778 = vpop.permute.xlu0 %3777
        %3779 = vrot.lane.b32.xlu0 %v3398, 88
        %v3780 = vpop.permute.xlu0 %3779
        %3781 = vrot.lane.b32.xlu0 %v3399, 88
        %v3782 = vpop.permute.xlu0 %3781
        %3783 = vrot.lane.b32.xlu0 %v3400, 88
        %v3784 = vpop.permute.xlu0 %3783
        %3817 = vrot.lane.b32.xlu0 %v3545, 72
        %v3818 = vpop.permute.xlu0 %3817
        %3819 = vrot.lane.b32.xlu0 %v3546, 72
        %v3820 = vpop.permute.xlu0 %3819
        %3821 = vrot.lane.b32.xlu0 %v3547, 72
        %v3822 = vpop.permute.xlu0 %3821
        %3823 = vrot.lane.b32.xlu0 %v3548, 72
        %v3824 = vpop.permute.xlu0 %3823
        %3825 = vrot.lane.b32.xlu0 %v3549, 72
        %v3826 = vpop.permute.xlu0 %3825
        %3827 = vrot.lane.b32.xlu0 %v3550, 72
        %v3828 = vpop.permute.xlu0 %3827
        %3829 = vrot.lane.b32.xlu0 %v3551, 72
        %v3830 = vpop.permute.xlu0 %3829
        %3831 = vrot.lane.b32.xlu0 %v3552, 72
        %v3832 = vpop.permute.xlu0 %3831
        %3833 = vrot.lane.b32.xlu0 %v3553, 72
        %v3834 = vpop.permute.xlu0 %3833
        %3835 = vrot.lane.b32.xlu0 %v3554, 72
        %v3836 = vpop.permute.xlu0 %3835
        %3837 = vrot.lane.b32.xlu0 %v3555, 72
        %v3838 = vpop.permute.xlu0 %3837
        %3839 = vrot.lane.b32.xlu0 %v3556, 72
        %v3840 = vpop.permute.xlu0 %3839
        %3841 = vrot.lane.b32.xlu0 %v3557, 72
        %v3842 = vpop.permute.xlu0 %3841
        %3843 = vrot.lane.b32.xlu0 %v3558, 72
        %v3844 = vpop.permute.xlu0 %3843
        %3845 = vrot.lane.b32.xlu0 %v3559, 72
        %v3846 = vpop.permute.xlu0 %3845
        %3847 = vrot.lane.b32.xlu0 %v3560, 72
        %v3848 = vpop.permute.xlu0 %3847
        %3881 = vrot.lane.b32.xlu0 %v3657, 72
        %v3882 = vpop.permute.xlu0 %3881
        %3883 = vrot.lane.b32.xlu0 %v3658, 72
        %v3884 = vpop.permute.xlu0 %3883
        %3885 = vrot.lane.b32.xlu0 %v3659, 72
        %v3886 = vpop.permute.xlu0 %3885
        %3887 = vrot.lane.b32.xlu0 %v3660, 72
        %v3888 = vpop.permute.xlu0 %3887
        %3889 = vrot.lane.b32.xlu0 %v3661, 72
        %v3890 = vpop.permute.xlu0 %3889
        %3891 = vrot.lane.b32.xlu0 %v3662, 72
        %v3892 = vpop.permute.xlu0 %3891
        %3893 = vrot.lane.b32.xlu0 %v3663, 72
        %v3894 = vpop.permute.xlu0 %3893
        %3895 = vrot.lane.b32.xlu0 %v3664, 72
        %v3896 = vpop.permute.xlu0 %3895
        %3897 = vrot.lane.b32.xlu0 %v3665, 72
        %v3898 = vpop.permute.xlu0 %3897
        %3899 = vrot.lane.b32.xlu0 %v3666, 72
        %v3900 = vpop.permute.xlu0 %3899
        %3901 = vrot.lane.b32.xlu0 %v3667, 72
        %v3902 = vpop.permute.xlu0 %3901
        %3903 = vrot.lane.b32.xlu0 %v3668, 72
        %v3904 = vpop.permute.xlu0 %3903
        %3905 = vrot.lane.b32.xlu0 %v3669, 72
        %v3906 = vpop.permute.xlu0 %3905
        %3907 = vrot.lane.b32.xlu0 %v3670, 72
        %v3908 = vpop.permute.xlu0 %3907
        %3909 = vrot.lane.b32.xlu0 %v3671, 72
        %v3910 = vpop.permute.xlu0 %3909
        %3911 = vrot.lane.b32.xlu0 %v3672, 72
        %v3912 = vpop.permute.xlu0 %3911
        %v3929 = vsel %vm2655, %v3690, %v3754
        %v3930 = vsel %vm2655, %v3692, %v3756
        %v3931 = vsel %vm2655, %v3694, %v3758
        %v3932 = vsel %vm2655, %v3696, %v3760
        %v3933 = vsel %vm2655, %v3698, %v3762
        %v3934 = vsel %vm2655, %v3700, %v3764
        %v3935 = vsel %vm2655, %v3702, %v3766
        %v3936 = vsel %vm2655, %v3704, %v3768
        %v3937 = vsel %vm2655, %v3706, %v3770
        %v3938 = vsel %vm2655, %v3708, %v3772
        %v3939 = vsel %vm2655, %v3710, %v3774
        %v3940 = vsel %vm2655, %v3712, %v3776
        %v3941 = vsel %vm2655, %v3714, %v3778
        %v3942 = vsel %vm2655, %v3716, %v3780
        %v3943 = vsel %vm2655, %v3718, %v3782
        %v3944 = vsel %vm2655, %v3720, %v3784
        %v3945 = vsel %vm546, %v3929, %v3818
        %v3946 = vsel %vm546, %v3930, %v3820
        %v3947 = vsel %vm546, %v3931, %v3822
        %v3948 = vsel %vm546, %v3932, %v3824
        %v3949 = vsel %vm546, %v3933, %v3826
        %v3950 = vsel %vm546, %v3934, %v3828
        %v3951 = vsel %vm546, %v3935, %v3830
        %v3952 = vsel %vm546, %v3936, %v3832
        %v3953 = vsel %vm546, %v3937, %v3834
        %v3954 = vsel %vm546, %v3938, %v3836
        %v3955 = vsel %vm546, %v3939, %v3838
        %v3956 = vsel %vm546, %v3940, %v3840
        %v3957 = vsel %vm546, %v3941, %v3842
        %v3958 = vsel %vm546, %v3942, %v3844
        %v3959 = vsel %vm546, %v3943, %v3846
        %v3960 = vsel %vm546, %v3944, %v3848
        %vm3961 = vcmask 195584
        %v3962 = vsel %vm3961, %v3945, %v3882
        %v3963 = vsel %vm3961, %v3946, %v3884
        %v3964 = vsel %vm3961, %v3947, %v3886
        %v3965 = vsel %vm3961, %v3948, %v3888
        %v3966 = vsel %vm3961, %v3949, %v3890
        %v3967 = vsel %vm3961, %v3950, %v3892
        %v3968 = vsel %vm3961, %v3951, %v3894
        %v3969 = vsel %vm3961, %v3952, %v3896
        %v3970 = vsel %vm3961, %v3953, %v3898
        %v3971 = vsel %vm3961, %v3954, %v3900
        %v3972 = vsel %vm3961, %v3955, %v3902
        %v3973 = vsel %vm3961, %v3956, %v3904
        %v3974 = vsel %vm3961, %v3957, %v3906
        %v3975 = vsel %vm3961, %v3958, %v3908
        %v3976 = vsel %vm3961, %v3959, %v3910
        %v3977 = vsel %vm3961, %v3960, %v3912
        %v3978 = vld [vmem:[%s10] sm:$0x1]
        %v3980 = vlaneseq
        %v3981 = vshrl.u32 %v3980, 7
        %v3982 = vsub.s32 0, %v3981
        %v3983 = vrot.slane %v3978, %v3982
        %v3985 = vadd.f32 %v3962, %v3983
        %v3986 = vadd.f32 %v3963, %v3983
        %v3987 = vadd.f32 %v3964, %v3983
        %v3988 = vadd.f32 %v3965, %v3983
        %v3989 = vadd.f32 %v3966, %v3983
        %v3990 = vadd.f32 %v3967, %v3983
        %v3991 = vadd.f32 %v3968, %v3983
        %v3992 = vadd.f32 %v3969, %v3983
        %v3993 = vadd.f32 %v3970, %v3983
        %v3994 = vadd.f32 %v3971, %v3983
        %v3995 = vadd.f32 %v3972, %v3983
        %v3996 = vadd.f32 %v3973, %v3983
        %v3997 = vadd.f32 %v3974, %v3983
        %v3998 = vadd.f32 %v3975, %v3983
        %v3999 = vadd.f32 %v3976, %v3983
        %v4000 = vadd.f32 %v3977, %v3983
        %v4001 = vmax.f32 %v3985, 0.0
        %v4002 = vmax.f32 %v3986, 0.0
        %v4003 = vmax.f32 %v3987, 0.0
        %v4004 = vmax.f32 %v3988, 0.0
        %v4005 = vmax.f32 %v3989, 0.0
        %v4006 = vmax.f32 %v3990, 0.0
        %v4007 = vmax.f32 %v3991, 0.0
        %v4008 = vmax.f32 %v3992, 0.0
        %v4009 = vmax.f32 %v3993, 0.0
        %v4010 = vmax.f32 %v3994, 0.0
        %v4011 = vmax.f32 %v3995, 0.0
        %v4012 = vmax.f32 %v3996, 0.0
        %v4013 = vmax.f32 %v3997, 0.0
        %v4014 = vmax.f32 %v3998, 0.0
        %v4015 = vmax.f32 %v3999, 0.0
        %v4016 = vmax.f32 %v4000, 0.0
        %v4017 = vpack.c.bf16 %v4002, %v4001
        %v4018 = vpack.c.bf16 %v4004, %v4003
        %v4019 = vpack.c.bf16 %v4006, %v4005
        %v4020 = vpack.c.bf16 %v4008, %v4007
        %v4021 = vpack.c.bf16 %v4010, %v4009
        %v4022 = vpack.c.bf16 %v4012, %v4011
        %v4023 = vpack.c.bf16 %v4014, %v4013
        %v4024 = vpack.c.bf16 %v4016, %v4015
        %v4033 = vunpack.c.l.b16 %v4017
        %v4034 = vunpack.c.h.b16 %v4017
        %v4035 = vunpack.c.l.b16 %v4018
        %v4036 = vunpack.c.h.b16 %v4018
        %v4037 = vunpack.c.l.b16 %v4019
        %v4038 = vunpack.c.h.b16 %v4019
        %v4039 = vunpack.c.l.b16 %v4020
        %v4040 = vunpack.c.h.b16 %v4020
        %v4041 = vunpack.c.l.b16 %v4021
        %v4042 = vunpack.c.h.b16 %v4021
        %v4043 = vunpack.c.l.b16 %v4022
        %v4044 = vunpack.c.h.b16 %v4022
        %v4045 = vunpack.c.l.b16 %v4023
        %v4046 = vunpack.c.h.b16 %v4023
        %v4047 = vunpack.c.l.b16 %v4024
        %v4048 = vunpack.c.h.b16 %v4024
        %v4049 = vpack.c.b16 %v4033, %v4033
        %v4050 = vpack.c.b16 %v4034, %v4034
        %v4051 = vpack.c.b16 %v4035, %v4035
        %v4052 = vpack.c.b16 %v4036, %v4036
        %v4053 = vpack.c.b16 %v4037, %v4037
        %v4054 = vpack.c.b16 %v4038, %v4038
        %v4055 = vpack.c.b16 %v4039, %v4039
        %v4056 = vpack.c.b16 %v4040, %v4040
        %v4057 = vpack.c.b16 %v4041, %v4041
        %v4058 = vpack.c.b16 %v4042, %v4042
        %v4059 = vpack.c.b16 %v4043, %v4043
        %v4060 = vpack.c.b16 %v4044, %v4044
        %v4061 = vpack.c.b16 %v4045, %v4045
        %v4062 = vpack.c.b16 %v4046, %v4046
        %v4063 = vpack.c.b16 %v4047, %v4047
        %v4064 = vpack.c.b16 %v4048, %v4048
        %vm4081 = vcmask 257024
        %4082 = vst.msk [vmem:[%s444] sm:$0xf] %vm4081, %v4049
        %4083 = vst.msk [vmem:[%s444 + $0x4] sm:$0xf] %vm4081, %v4050
        %4084 = vst.msk [vmem:[%s444 + $0x8] sm:$0xf] %vm4081, %v4051
        %4085 = vst.msk [vmem:[%s444 + $0xc] sm:$0xf] %vm4081, %v4052
        %4086 = vst.msk [vmem:[%s444 + $0x10] sm:$0xf] %vm4081, %v4053
        %4087 = vst.msk [vmem:[%s444 + $0x14] sm:$0xf] %vm4081, %v4054
        %4088 = vst.msk [vmem:[%s444 + $0x18] sm:$0xf] %vm4081, %v4055
        %4089 = vst.msk [vmem:[%s444 + $0x1c] sm:$0xf] %vm4081, %v4056
        %4090 = vst.msk [vmem:[%s444 + $0x20] sm:$0xf] %vm4081, %v4057
        %4091 = vst.msk [vmem:[%s444 + $0x24] sm:$0xf] %vm4081, %v4058
        %4092 = vst.msk [vmem:[%s444 + $0x28] sm:$0xf] %vm4081, %v4059
        %4093 = vst.msk [vmem:[%s444 + $0x2c] sm:$0xf] %vm4081, %v4060
        %4094 = vst.msk [vmem:[%s444 + $0x30] sm:$0xf] %vm4081, %v4061
        %4095 = vst.msk [vmem:[%s444 + $0x34] sm:$0xf] %vm4081, %v4062
        %4096 = vst.msk [vmem:[%s444 + $0x38] sm:$0xf] %vm4081, %v4063
        %4097 = vst.msk [vmem:[%s444 + $0x3c] sm:$0xf] %vm4081, %v4064
        %s4098 = smul.u32 16, %s32
        %p4099 = scmp.lt.s32.totalorder %s31, 1
        %s4100 = scalar_select %p4099, %s31, 1
        %p4101 = scmp.lt.s32.totalorder %s4098, 31
        %s4102 = scalar_select %p4101, %s4098, 31
        %s4103 = smul.addr %s4100, 32
        %s4104 = sadd.s32 %s4102, %s4103
        %s4105 = smul.addr %s4104, 8
        %s4106 = scalar_lea.vmem %s11, %s4105
        %s4107 = sand.u32 %s315, 1
        %s4108 = scalar_lea.sflag [#allocation4], %s4107
        %s4109 = sand.u32 %s315, 1
        %s4110 = smul.addr %s4109, 64
        %s4111 = scalar_lea.vmem [#allocation3], %s4110
        // Predicated region
        $region65: #{tpu_custom_call.1} parent=63 // pred_check
          %p4112 = pneg %p297
        $region66: #{tpu_custom_call.1} parent=63 // pred_check_branch
          %4114 = sbr.rel (%p4112) target = $region68
        $region67: #{tpu_custom_call.1} parent=63 // pred_region
          %s4115 = smul.u32 16, %s32
        $region68: #{tpu_custom_call.1} parent=63 // pred_fallthru
          _
        // Predicated region
        $region69: #{tpu_custom_call.1} parent=63 // pred_check
          %p4116 = pneg %p325
        $region70: #{tpu_custom_call.1} parent=63 // pred_check_branch
          %4118 = sbr.rel (%p4116) target = $region72
        $region71: #{tpu_custom_call.1} parent=63 // pred_region
          %s4119 = smul.u32 8, %s32
          %s4121 = ssub.s32 1024, 1024
          %4122 = vsyncadd %s4108, %s4121
          %s4123 = smul.addr %s4119, 2
          %s4124 = smul.addr %s31, 32
          %s4125 = sadd.s32 %s4123, %s4124
          %s4126 = smul.addr %s4125, 64
          %s4127 = scalar_lea.hbm %s12, %s4126
          %s4128 = sshll.u32 %s4111, 4
          %s4129 = int_to_ptr.vmem [resolvable:$true] %s4128
          %4134 = dma.vmem_to_hbm [thread:$0]  %s4129, 1024, %s4127, %s4108, 64, 64, 4
        $region72: #{tpu_custom_call.1} parent=63 // pred_fallthru
          _
      $region64: #{tpu_custom_call.1} parent=5 // pred_fallthru
        _
      %p4135 = scmp.le.s32.totalorder 2, %s22
      // Predicated region
      $region73: #{tpu_custom_call.1} parent=5 // pred_check
        %p4136 = pneg %p4135
      $region74: #{tpu_custom_call.1} parent=5 // pred_check_branch
        %4138 = sbr.rel (%p4136) target = $region76
      $region75: #{tpu_custom_call.1} parent=5 // pred_region
        %s4139 = ssub.s32 %s22, 2
        // Predicated region
        $region77: #{tpu_custom_call.1} parent=75 // pred_check
          %p4140 = pneg %p303
        $region78: #{tpu_custom_call.1} parent=75 // pred_check_branch
          %4142 = sbr.rel (%p4140) target = $region80
        $region79: #{tpu_custom_call.1} parent=75 // pred_region
          %s4143 = smul.u32 16, %s34
          %p4144 = scmp.lt.s32.totalorder %s33, 1
          %s4145 = scalar_select %p4144, %s33, 1
          %p4146 = scmp.lt.s32.totalorder %s4143, 31
          %s4147 = scalar_select %p4146, %s4143, 31
          %s4148 = smul.addr %s4145, 32
          %s4149 = sadd.s32 %s4147, %s4148
          %s4150 = smul.addr %s4149, 8
          %s4151 = scalar_lea.vmem %s11, %s4150
        $region80: #{tpu_custom_call.1} parent=75 // pred_fallthru
          _
        // Predicated region
        $region81: #{tpu_custom_call.1} parent=75 // pred_check
          %p4152 = pneg %p331
        $region82: #{tpu_custom_call.1} parent=75 // pred_check_branch
          %4154 = sbr.rel (%p4152) target = $region84
        $region83: #{tpu_custom_call.1} parent=75 // pred_region
          %s4155 = sand.u32 %s316, 1
          %s4156 = scalar_lea.sflag [#allocation4], %s4155
          %s4157 = sand.u32 %s316, 1
          %s4158 = smul.addr %s4157, 64
          %s4159 = scalar_lea.vmem [#allocation3], %s4158
          %4160 = dma.done %s4156, 1024
        $region84: #{tpu_custom_call.1} parent=75 // pred_fallthru
          _
      $region76: #{tpu_custom_call.1} parent=5 // pred_fallthru
        _
    $region6: #{tpu_custom_call.1} parent=1 // loop_footer
      %s26 = sadd.s32 1, %s22
    $region7: #{tpu_custom_call.1} parent=1 // loop_footer_branch
      %21 = sbr.rel target = $region3
    $region8: #{tpu_custom_call.1} parent=1 // loop_exit
      _
    %4161 = vsyncpa [#allocation4], 1
    %s4162 = scalar_lea.sflag [#allocation4], 1
    %4163 = vsyncpa %s4162, 1

</llo_original>
